<compile_context>
chip_gen: v5e
topology: v5e:2x2
jax: 0.10.0
libtpu: 0.0.40
codegen_flags: <defaults>
</compile_context>

<pallas_src>
import functools
import math

import jax
import jax.numpy as jnp
from jax import lax
from jax.experimental import pallas as pl
from jax.experimental.pallas import tpu as pltpu


def split_layer(total_channels, num_groups):
    split = [int(math.ceil(total_channels / num_groups)) for _ in range(num_groups)]
    split[num_groups - 1] += total_channels - sum(split)
    return split


def _default_mdconv_dtype():
    # bf16 elementwise is fast on v6e/v7x; v5e/v5p/v4 have no bf16 VPU -> keep f32.
    try:
        kind = jax.devices()[0].device_kind.lower()
    except Exception:
        return jnp.float32
    if ("v6" in kind) or ("v7" in kind) or ("7x" in kind):
        return jnp.bfloat16
    return jnp.float32


# ---------------------------------------------------------------------------
# Fused MixBlock kernel.  One grid step == one batch image.
# All activations live in the row-flattened (rows, W*C) lane-dense layout.
# ---------------------------------------------------------------------------
def _mixblock_fused_kernel(x_ref, we_ref, ebn_ref, wt_ref, dbn_ref, se_ref,
                           wp_ref, pbn_ref, o_ref, *,
                           H, W, Cmid, Cr, Kmax, act, use_residual, md_dtype):
    Pmax = (Kmax - 1) // 2
    Lm = W * Cmid

    def activate(v):
        if act == "swish":
            return v * jax.nn.sigmoid(v)
        return jnp.maximum(v, 0.0)

    x = x_ref[0]                                                   # (Hp, W*Cin) f32

    # -- Stage 1: expand 1x1 group conv as a block-diagonal MXU matmul (the
    #    weight scatters its output into the W-halo-padded columns; scale/bias
    #    are zero there so act(0) == 0), + folded BN + activation.  The H-halo
    #    rows are zeroed with a row mask.
    ye = jnp.dot(x.astype(jnp.bfloat16), we_ref[...],
                 preferred_element_type=jnp.float32)               # (Hp, Lp)
    ye = activate(ye * ebn_ref[0:1, :] + ebn_ref[1:2, :])
    row = lax.broadcasted_iota(jnp.int32, (ye.shape[0], 1), 0)
    ypad = jnp.where(jnp.logical_and(row >= Pmax, row < Pmax + H), ye, 0.0)

    # -- Stage 2: MDConv (mixed depthwise conv) + folded BN + activation.
    #    kh-outer / kw-inner: only ONE row-shifted window is live at a time
    #    (no vreg spills); the per-kw lane-shifted views are transient.
    #    Tap math runs in md_dtype (bf16 on v6e/v7x, f32 on v5e); the cross-kh
    #    accumulation and BN/act stay f32.  acc is seeded by the first tap.
    acc = None
    for kh in range(Kmax):
        win = ypad[kh:kh + H, :].astype(md_dtype)                  # (H, Lp)
        part = None
        for kw in range(Kmax):
            t = win[:, kw * Cmid: kw * Cmid + Lm] * wt_ref[kh * Kmax + kw]
            part = t if part is None else part + t
        part = part.astype(jnp.float32)
        acc = part if acc is None else acc + part
    ymd = activate(acc * dbn_ref[0:1, :] + dbn_ref[1:2, :])        # (H, Lm)

    # -- Stage 3: Squeeze-Excitation on the VPU/XLU (Cr is tiny; an M=1 MXU
    #    matmul would idle on the serial pool->gate->project path).  The global
    #    average pool is folded into the reduce weights, b1 into a per-lane
    #    addend, and the W-tiling of the gate into the expand weights/bias.
    pooled = jnp.sum(ymd, axis=0, keepdims=True)                   # (1, Lm)
    w1t, b1n = se_ref[0:Cr, :], se_ref[Cr:2 * Cr, :]
    w2f, b2r = se_ref[2 * Cr:3 * Cr, :], se_ref[3 * Cr:3 * Cr + 1, :]
    r1 = activate(jnp.sum(w1t * pooled + b1n, axis=-1, keepdims=True))      # (Cr, 1)
    gate = jax.nn.sigmoid(jnp.sum(r1 * w2f, axis=0, keepdims=True) + b2r)   # (1, Lm)
    gated = ymd * gate

    # -- Stage 4: project 1x1 group conv (block-diag MXU matmul) + folded BN
    #    (+ residual, reusing the f32 input block already resident in VMEM).
    out = jnp.dot(gated.astype(jnp.bfloat16), wp_ref[...],
                  preferred_element_type=jnp.float32)              # (H, W*Cout)
    out = out * pbn_ref[0:1, :] + pbn_ref[1:2, :]
    if use_residual:
        out = out + x[Pmax:Pmax + H, :]
    o_ref[0] = out                                                 # lane-dense store


def make_mixblock_forward(p, H, W, *, stride=1, act="swish", md_dtype=None):
    """One-time weight prep (hoisted out of the hot path); returns a jitted forward."""
    # TODO(synk): stride > 1 not implemented (residual config requires stride=1).
    assert stride == 1
    Cin, Cmid = p["We"].shape
    Cout = p["Wp"].shape[1]
    Cr = p["w1"].shape[1]
    Kmax = p["Wd"].shape[0]
    Pmax = (Kmax - 1) // 2
    Hp = H + 2 * Pmax
    Lin, Lm, Lout = W * Cin, W * Cmid, W * Cout
    Lp = (W + 2 * Pmax) * Cmid
    use_residual = (stride == 1 and Cin == Cout)
    if md_dtype is None:
        md_dtype = _default_mdconv_dtype()

    # 1x1 group convs as block-diagonal matmuls over the flattened lane dim.
    eye = jnp.eye(W, dtype=jnp.float32)
    we_big = jnp.pad(jnp.kron(eye, p["We"].astype(jnp.float32)),
                     ((0, 0), (Pmax * Cmid, Pmax * Cmid))).astype(jnp.bfloat16)
    wp_big = jnp.kron(eye, p["Wp"].astype(jnp.float32)).astype(jnp.bfloat16)

    def lane_tile(v, c, halo=0):
        t = jnp.tile(jnp.asarray(v, jnp.float32).reshape(1, c), (W, 1))
        if halo:
            t = jnp.pad(t, ((halo, halo), (0, 0)))    # zeros in W-halo -> act(0)==0
        return t.reshape(1, -1)

    ebn = jnp.concatenate([lane_tile(p["e_scale"], Cmid, halo=Pmax),
                           lane_tile(p["e_bias"], Cmid, halo=Pmax)], axis=0)
    dbn = jnp.concatenate([lane_tile(p["d_scale"], Cmid),
                           lane_tile(p["d_bias"], Cmid)], axis=0)
    pbn = jnp.concatenate([lane_tile(p["p_scale"], Cout),
                           lane_tile(p["p_bias"], Cout)], axis=0)

    # Merged MDConv taps, tiled along W so each tap is one lane-dense weight row.
    wt = jnp.tile(p["Wd"][:, :, None, :], (1, 1, W, 1)).reshape(Kmax * Kmax, 1, Lm)
    wt = wt.astype(md_dtype)

    # SE packed tensor: [w1t (pool folded); b1/Lm per lane; w2 tiled; b2 tiled].
    w1t = jnp.tile(p["w1"][None, :, :], (W, 1, 1)).reshape(Lm, Cr).T / float(H * W)
    b1n = jnp.tile(p["b1"].reshape(Cr, 1), (1, Lm)) / float(Lm)
    w2f = jnp.tile(p["w2"][:, None, :], (1, W, 1)).reshape(Cr, Lm)
    b2r = lane_tile(p["b2"].reshape(-1), Cmid)
    se = jnp.concatenate([w1t, b1n, w2f, b2r], axis=0).astype(jnp.float32)

    kernel = functools.partial(
        _mixblock_fused_kernel, H=H, W=W, Cmid=Cmid, Cr=Cr, Kmax=Kmax,
        act=act, use_residual=use_residual, md_dtype=md_dtype)

    def forward(x_nchw):
        N = x_nchw.shape[0]
        # NCHW -> NHWC -> row-flattened (N, Hp, W*Cin) with zero H-halo rows.
        x_flat = jnp.transpose(x_nchw, (0, 2, 3, 1)).reshape(N, H, Lin)
        x_flat = jnp.pad(x_flat.astype(jnp.float32), ((0, 0), (Pmax, Pmax), (0, 0)))
        out_flat = pl.pallas_call(
            kernel,
            out_shape=jax.ShapeDtypeStruct((N, H, Lout), jnp.float32),
            grid=(N,),
            in_specs=[
                pl.BlockSpec((1, Hp, Lin), lambda n: (n, 0, 0)),            # x (padded rows)
                pl.BlockSpec((Lin, Lp), lambda n: (0, 0)),                  # expand weight
                pl.BlockSpec((2, Lp), lambda n: (0, 0)),                    # expand BN [scale; bias]
                pl.BlockSpec((Kmax * Kmax, 1, Lm), lambda n: (0, 0, 0)),    # mdconv taps
                pl.BlockSpec((2, Lm), lambda n: (0, 0)),                    # mdconv BN [scale; bias]
                pl.BlockSpec((3 * Cr + 1, Lm), lambda n: (0, 0)),           # SE packed
                pl.BlockSpec((Lm, Lout), lambda n: (0, 0)),                 # project weight
                pl.BlockSpec((2, Lout), lambda n: (0, 0)),                  # project BN [scale; bias]
            ],
            out_specs=pl.BlockSpec((1, H, Lout), lambda n: (n, 0, 0)),
            compiler_params=pltpu.CompilerParams(dimension_semantics=("parallel",)),
        )(x_flat, we_big, ebn, wt, dbn, se, wp_big, pbn)
        return jnp.transpose(out_flat.reshape(N, H, W, Cout), (0, 3, 1, 2))

    return jax.jit(forward)


# ---------------------------------------------------------------------------
# Deterministic parameter construction (matches module __init__ shapes).
# ---------------------------------------------------------------------------
def make_block_diag_1x1(key, in_splits, out_splits, std=0.2):
    Cin, Cout = sum(in_splits), sum(out_splits)
    Wm = jnp.zeros((Cin, Cout), jnp.float32)
    ks = jax.random.split(key, len(in_splits))
    i0 = o0 = 0
    for k, ci, co in zip(ks, in_splits, out_splits):
        Wm = Wm.at[i0:i0 + ci, o0:o0 + co].set(std * jax.random.normal(k, (ci, co)))
        i0 += ci
        o0 += co
    return Wm


def make_mdconv_weights(key, splits):
    n = len(splits)
    kmax = 2 * (n - 1) + 3
    C = sum(splits)
    Wm = jnp.zeros((kmax, kmax, C), jnp.float32)
    chunks = []
    ks = jax.random.split(key, n)
    c0 = 0
    for idx, (k, cg) in enumerate(zip(ks, splits)):
        ksz = 2 * idx + 3
        off = (kmax - ksz) // 2
        wk = 0.2 * jax.random.normal(k, (ksz, ksz, cg))
        Wm = Wm.at[off:off + ksz, off:off + ksz, c0:c0 + cg].set(wk)
        chunks.append((ksz, wk))
        c0 += cg
    return Wm, chunks


def make_bn(key, C, eps=1e-5):
    k1, k2, k3, k4 = jax.random.split(key, 4)
    gamma = 1.0 + 0.1 * jax.random.normal(k1, (C,))
    beta = 0.1 * jax.random.normal(k2, (C,))
    mean = 0.1 * jax.random.normal(k3, (C,))
    var = jax.random.uniform(k4, (C,), minval=0.5, maxval=1.5)
    scale = gamma / jnp.sqrt(var + eps)
    bias = beta - mean * scale
    return scale.astype(jnp.float32), bias.astype(jnp.float32)


def build_mixblock_params(key, in_channels, out_channels, n_chunks, expand_ratio,
                          se_ratio, expand_ksize, project_ksize):
    mid = in_channels * expand_ratio
    cr = max(1, int(in_channels * se_ratio))
    ks = jax.random.split(key, 8)
    p = {}
    p["We"] = make_block_diag_1x1(ks[0], split_layer(in_channels, expand_ksize),
                                  split_layer(mid, expand_ksize))
    p["e_scale"], p["e_bias"] = make_bn(ks[1], mid)
    p["Wd"], p["Wd_chunks"] = make_mdconv_weights(ks[2], split_layer(mid, n_chunks))
    p["d_scale"], p["d_bias"] = make_bn(ks[3], mid)
    p["w1"] = 0.2 * jax.random.normal(ks[4], (mid, cr))
    p["b1"] = 0.1 * jax.random.normal(ks[5], (1, cr))
    p["w2"] = 0.2 * jax.random.normal(ks[6], (cr, mid))
    p["b2"] = 0.1 * jax.random.normal(ks[7], (1, mid))
    p["Wp"] = make_block_diag_1x1(jax.random.fold_in(key, 123),
                                  split_layer(mid, project_ksize),
                                  split_layer(out_channels, project_ksize))
    p["p_scale"], p["p_bias"] = make_bn(jax.random.fold_in(key, 456), out_channels)
    return p


# ---------------------------------------------------------------------------
# Pure-JAX reference for validation (mirrors the PyTorch module, eval mode).
# ---------------------------------------------------------------------------
def ref_forward(x_nchw, p, *, stride=1, act="swish"):
    def a(v):
        return v * jax.nn.sigmoid(v) if act == "swish" else jnp.maximum(v, 0.0)

    x = jnp.transpose(x_nchw, (0, 2, 3, 1)).astype(jnp.float32)
    y = a(jnp.einsum("nhwc,cd->nhwd", x, p["We"]) * p["e_scale"] + p["e_bias"])
    outs, c0 = [], 0
    for ksz, wk in p["Wd_chunks"]:
        cg = wk.shape[-1]
        pd = (ksz - 1) // 2
        o = lax.conv_general_dilated(
            y[..., c0:c0 + cg], wk[:, :, None, :], (stride, stride),
            [(pd, pd), (pd, pd)],
            dimension_numbers=("NHWC", "HWIO", "NHWC"), feature_group_count=cg)
        outs.append(o)
        c0 += cg
    y = a(jnp.concatenate(outs, axis=-1) * p["d_scale"] + p["d_bias"])
    m = jnp.mean(y, axis=(1, 2))
    r = a(m @ p["w1"] + p["b1"])
    g = jax.nn.sigmoid(r @ p["w2"] + p["b2"])
    y = y * g[:, None, None, :]
    z = jnp.einsum("nhwc,cd->nhwd", y, p["Wp"]) * p["p_scale"] + p["p_bias"]
    if stride == 1 and x.shape[-1] == z.shape[-1]:
        z = z + x
    return jnp.transpose(z, (0, 3, 1, 2))


if __name__ == "__main__":
    # MixBlock(in=8, out=8, n_chunks=2, stride=1, expand_ratio=3, se_ratio=0.5,
    #          swish=True, expand_ksize=2, project_ksize=2, drop_connect_rate=0.0)
    N, Cin, H, W = 2, 8, 16, 16
    Cout = 8
    n_chunks = 2
    stride = 1
    expand_ratio = 3
    se_ratio = 0.5
    swish = True
    expand_ksize = 2
    project_ksize = 2

    key = jax.random.PRNGKey(0)
    kx, kp = jax.random.split(key)
    x = jax.random.normal(kx, (N, Cin, H, W), dtype=jnp.float32)   # NCHW like PyTorch
    params = build_mixblock_params(kp, Cin, Cout, n_chunks, expand_ratio,
                                   se_ratio, expand_ksize, project_ksize)

    act = "swish" if swish else "relu"
    fwd = make_mixblock_forward(params, H, W, stride=stride, act=act)
    out = jax.block_until_ready(fwd(x))
    ref = jax.block_until_ready(ref_forward(x, params, stride=stride, act=act))
    err = float(jnp.max(jnp.abs(out - ref)))
    if out.shape != (N, Cout, H, W) or not math.isfinite(err) or err > 5e-2:
        raise AssertionError(f"mismatch: shape={out.shape} max_err={err}")
    print("KERNEL_OK")
</pallas_src>

<mosaic_0001>
module attributes {stable_mosaic.version = 11 : i64} {
  func.func @_mixblock_fused_kernel(%arg0: i32, %arg1: memref<1x20x128xf32, #tpu.memory_space<vmem>>, %arg2: memref<128x480xbf16, #tpu.memory_space<vmem>>, %arg3: memref<2x480xf32, #tpu.memory_space<vmem>>, %arg4: memref<25x1x384xf32, #tpu.memory_space<vmem>>, %arg5: memref<2x384xf32, #tpu.memory_space<vmem>>, %arg6: memref<13x384xf32, #tpu.memory_space<vmem>>, %arg7: memref<384x128xbf16, #tpu.memory_space<vmem>>, %arg8: memref<2x128xf32, #tpu.memory_space<vmem>>, %arg9: memref<1x16x128xf32, #tpu.memory_space<vmem>>) attributes {dimension_semantics = [#tpu.dimension_semantics<parallel>], iteration_bounds = array<i64: 2>, scalar_prefetch = 0 : i64, scratch_operands = 0 : i64, tpu.core_type = #tpu.core_type<tc>, window_params = [{transform_indices = @transform_0, window_bounds = array<i64: 1, 20, 128>}, {pipeline_mode = #tpu.pipeline_mode<synchronous>, transform_indices = @transform_1, window_bounds = array<i64: 128, 480>}, {pipeline_mode = #tpu.pipeline_mode<synchronous>, transform_indices = @transform_2, window_bounds = array<i64: 2, 480>}, {pipeline_mode = #tpu.pipeline_mode<synchronous>, transform_indices = @transform_3, window_bounds = array<i64: 25, 1, 384>}, {pipeline_mode = #tpu.pipeline_mode<synchronous>, transform_indices = @transform_4, window_bounds = array<i64: 2, 384>}, {pipeline_mode = #tpu.pipeline_mode<synchronous>, transform_indices = @transform_5, window_bounds = array<i64: 13, 384>}, {pipeline_mode = #tpu.pipeline_mode<synchronous>, transform_indices = @transform_6, window_bounds = array<i64: 384, 128>}, {pipeline_mode = #tpu.pipeline_mode<synchronous>, transform_indices = @transform_7, window_bounds = array<i64: 2, 128>}, {transform_indices = @transform_8, window_bounds = array<i64: 1, 16, 128>}]} {
    %c0 = arith.constant 0 : index
    %c0_0 = arith.constant 0 : index
    %c0_1 = arith.constant 0 : index
    %0 = vector.load %arg1[%c0, %c0_0, %c0_1] : memref<1x20x128xf32, #tpu.memory_space<vmem>>, vector<1x20x128xf32>
    %1 = vector.shape_cast %0 : vector<1x20x128xf32> to vector<20x128xf32>
    %2 = arith.truncf %1 : vector<20x128xf32> to vector<20x128xbf16>
    %c0_2 = arith.constant 0 : index
    %c0_3 = arith.constant 0 : index
    %3 = vector.load %arg2[%c0_2, %c0_3] : memref<128x480xbf16, #tpu.memory_space<vmem>>, vector<128x480xbf16>
    %cst = arith.constant dense<0.000000e+00> : vector<20x480xf32>
    %4 = tpu.matmul %2, %3, %cst {dimension_numbers = #tpu.dot_dimension_numbers<[1], [0], [0], [1], [0, 0, 1, 1], [], []>} : vector<20x128xbf16>, vector<128x480xbf16>, vector<20x480xf32> -> vector<20x480xf32>
    %c0_4 = arith.constant 0 : index
    %c0_5 = arith.constant 0 : index
    %5 = vector.load %arg3[%c0_4, %c0_5] : memref<2x480xf32, #tpu.memory_space<vmem>>, vector<1x480xf32>
    %6 = vector.broadcast %5 : vector<1x480xf32> to vector<20x480xf32>
    %7 = arith.mulf %4, %6 : vector<20x480xf32>
    %c1 = arith.constant 1 : index
    %c0_6 = arith.constant 0 : index
    %8 = vector.load %arg3[%c1, %c0_6] : memref<2x480xf32, #tpu.memory_space<vmem>>, vector<1x480xf32>
    %9 = vector.broadcast %8 : vector<1x480xf32> to vector<20x480xf32>
    %10 = arith.addf %7, %9 : vector<20x480xf32>
    %11 = arith.negf %10 : vector<20x480xf32>
    %12 = math.exp %11 : vector<20x480xf32>
    %cst_7 = arith.constant 1.000000e+00 : f32
    %13 = vector.broadcast %cst_7 : f32 to vector<20x480xf32>
    %14 = arith.addf %13, %12 : vector<20x480xf32>
    %15 = arith.divf %13, %14 : vector<20x480xf32>
    %16 = arith.mulf %10, %15 : vector<20x480xf32>
    %17 = tpu.iota {dimensions = array<i32: 0>} : vector<20x1xi32>
    %c2_i32 = arith.constant 2 : i32
    %18 = vector.broadcast %c2_i32 : i32 to vector<20x1xi32>
    %19 = arith.cmpi sge, %17, %18 : vector<20x1xi32>
    %c18_i32 = arith.constant 18 : i32
    %20 = vector.broadcast %c18_i32 : i32 to vector<20x1xi32>
    %21 = arith.cmpi slt, %17, %20 : vector<20x1xi32>
    %22 = arith.andi %19, %21 : vector<20x1xi1>
    %cst_8 = arith.constant 0.000000e+00 : f32
    %23 = vector.shape_cast %22 : vector<20x1xi1> to vector<20x1xi1>
    %24 = vector.broadcast %23 : vector<20x1xi1> to vector<20x480xi1>
    %25 = vector.broadcast %cst_8 : f32 to vector<20x480xf32>
    %26 = arith.select %24, %16, %25 : vector<20x480xi1>, vector<20x480xf32>
    %27 = vector.extract_strided_slice %26 {offsets = [0, 0], sizes = [16, 480], strides = [1, 1]} : vector<20x480xf32> to vector<16x480xf32>
    %28 = vector.extract_strided_slice %27 {offsets = [0, 0], sizes = [16, 384], strides = [1, 1]} : vector<16x480xf32> to vector<16x384xf32>
    %c0_9 = arith.constant 0 : index
    %c0_10 = arith.constant 0 : index
    %c0_11 = arith.constant 0 : index
    %29 = vector.load %arg4[%c0_9, %c0_10, %c0_11] : memref<25x1x384xf32, #tpu.memory_space<vmem>>, vector<1x1x384xf32>
    %30 = vector.shape_cast %29 : vector<1x1x384xf32> to vector<1x384xf32>
    %31 = vector.broadcast %30 : vector<1x384xf32> to vector<16x384xf32>
    %32 = arith.mulf %28, %31 : vector<16x384xf32>
    %33 = vector.extract_strided_slice %27 {offsets = [0, 24], sizes = [16, 384], strides = [1, 1]} : vector<16x480xf32> to vector<16x384xf32>
    %c1_12 = arith.constant 1 : index
    %c0_13 = arith.constant 0 : index
    %c0_14 = arith.constant 0 : index
    %34 = vector.load %arg4[%c1_12, %c0_13, %c0_14] : memref<25x1x384xf32, #tpu.memory_space<vmem>>, vector<1x1x384xf32>
    %35 = vector.shape_cast %34 : vector<1x1x384xf32> to vector<1x384xf32>
    %36 = vector.broadcast %35 : vector<1x384xf32> to vector<16x384xf32>
    %37 = arith.mulf %33, %36 : vector<16x384xf32>
    %38 = arith.addf %32, %37 : vector<16x384xf32>
    %39 = vector.extract_strided_slice %27 {offsets = [0, 48], sizes = [16, 384], strides = [1, 1]} : vector<16x480xf32> to vector<16x384xf32>
    %c2 = arith.constant 2 : index
    %c0_15 = arith.constant 0 : index
    %c0_16 = arith.constant 0 : index
    %40 = vector.load %arg4[%c2, %c0_15, %c0_16] : memref<25x1x384xf32, #tpu.memory_space<vmem>>, vector<1x1x384xf32>
    %41 = vector.shape_cast %40 : vector<1x1x384xf32> to vector<1x384xf32>
    %42 = vector.broadcast %41 : vector<1x384xf32> to vector<16x384xf32>
    %43 = arith.mulf %39, %42 : vector<16x384xf32>
    %44 = arith.addf %38, %43 : vector<16x384xf32>
    %45 = vector.extract_strided_slice %27 {offsets = [0, 72], sizes = [16, 384], strides = [1, 1]} : vector<16x480xf32> to vector<16x384xf32>
    %c3 = arith.constant 3 : index
    %c0_17 = arith.constant 0 : index
    %c0_18 = arith.constant 0 : index
    %46 = vector.load %arg4[%c3, %c0_17, %c0_18] : memref<25x1x384xf32, #tpu.memory_space<vmem>>, vector<1x1x384xf32>
    %47 = vector.shape_cast %46 : vector<1x1x384xf32> to vector<1x384xf32>
    %48 = vector.broadcast %47 : vector<1x384xf32> to vector<16x384xf32>
    %49 = arith.mulf %45, %48 : vector<16x384xf32>
    %50 = arith.addf %44, %49 : vector<16x384xf32>
    %51 = vector.extract_strided_slice %27 {offsets = [0, 96], sizes = [16, 384], strides = [1, 1]} : vector<16x480xf32> to vector<16x384xf32>
    %c4 = arith.constant 4 : index
    %c0_19 = arith.constant 0 : index
    %c0_20 = arith.constant 0 : index
    %52 = vector.load %arg4[%c4, %c0_19, %c0_20] : memref<25x1x384xf32, #tpu.memory_space<vmem>>, vector<1x1x384xf32>
    %53 = vector.shape_cast %52 : vector<1x1x384xf32> to vector<1x384xf32>
    %54 = vector.broadcast %53 : vector<1x384xf32> to vector<16x384xf32>
    %55 = arith.mulf %51, %54 : vector<16x384xf32>
    %56 = arith.addf %50, %55 : vector<16x384xf32>
    %57 = vector.extract_strided_slice %26 {offsets = [1, 0], sizes = [16, 480], strides = [1, 1]} : vector<20x480xf32> to vector<16x480xf32>
    %58 = vector.extract_strided_slice %57 {offsets = [0, 0], sizes = [16, 384], strides = [1, 1]} : vector<16x480xf32> to vector<16x384xf32>
    %c5 = arith.constant 5 : index
    %c0_21 = arith.constant 0 : index
    %c0_22 = arith.constant 0 : index
    %59 = vector.load %arg4[%c5, %c0_21, %c0_22] : memref<25x1x384xf32, #tpu.memory_space<vmem>>, vector<1x1x384xf32>
    %60 = vector.shape_cast %59 : vector<1x1x384xf32> to vector<1x384xf32>
    %61 = vector.broadcast %60 : vector<1x384xf32> to vector<16x384xf32>
    %62 = arith.mulf %58, %61 : vector<16x384xf32>
    %63 = vector.extract_strided_slice %57 {offsets = [0, 24], sizes = [16, 384], strides = [1, 1]} : vector<16x480xf32> to vector<16x384xf32>
    %c6 = arith.constant 6 : index
    %c0_23 = arith.constant 0 : index
    %c0_24 = arith.constant 0 : index
    %64 = vector.load %arg4[%c6, %c0_23, %c0_24] : memref<25x1x384xf32, #tpu.memory_space<vmem>>, vector<1x1x384xf32>
    %65 = vector.shape_cast %64 : vector<1x1x384xf32> to vector<1x384xf32>
    %66 = vector.broadcast %65 : vector<1x384xf32> to vector<16x384xf32>
    %67 = arith.mulf %63, %66 : vector<16x384xf32>
    %68 = arith.addf %62, %67 : vector<16x384xf32>
    %69 = vector.extract_strided_slice %57 {offsets = [0, 48], sizes = [16, 384], strides = [1, 1]} : vector<16x480xf32> to vector<16x384xf32>
    %c7 = arith.constant 7 : index
    %c0_25 = arith.constant 0 : index
    %c0_26 = arith.constant 0 : index
    %70 = vector.load %arg4[%c7, %c0_25, %c0_26] : memref<25x1x384xf32, #tpu.memory_space<vmem>>, vector<1x1x384xf32>
    %71 = vector.shape_cast %70 : vector<1x1x384xf32> to vector<1x384xf32>
    %72 = vector.broadcast %71 : vector<1x384xf32> to vector<16x384xf32>
    %73 = arith.mulf %69, %72 : vector<16x384xf32>
    %74 = arith.addf %68, %73 : vector<16x384xf32>
    %75 = vector.extract_strided_slice %57 {offsets = [0, 72], sizes = [16, 384], strides = [1, 1]} : vector<16x480xf32> to vector<16x384xf32>
    %c8 = arith.constant 8 : index
    %c0_27 = arith.constant 0 : index
    %c0_28 = arith.constant 0 : index
    %76 = vector.load %arg4[%c8, %c0_27, %c0_28] : memref<25x1x384xf32, #tpu.memory_space<vmem>>, vector<1x1x384xf32>
    %77 = vector.shape_cast %76 : vector<1x1x384xf32> to vector<1x384xf32>
    %78 = vector.broadcast %77 : vector<1x384xf32> to vector<16x384xf32>
    %79 = arith.mulf %75, %78 : vector<16x384xf32>
    %80 = arith.addf %74, %79 : vector<16x384xf32>
    %81 = vector.extract_strided_slice %57 {offsets = [0, 96], sizes = [16, 384], strides = [1, 1]} : vector<16x480xf32> to vector<16x384xf32>
    %c9 = arith.constant 9 : index
    %c0_29 = arith.constant 0 : index
    %c0_30 = arith.constant 0 : index
    %82 = vector.load %arg4[%c9, %c0_29, %c0_30] : memref<25x1x384xf32, #tpu.memory_space<vmem>>, vector<1x1x384xf32>
    %83 = vector.shape_cast %82 : vector<1x1x384xf32> to vector<1x384xf32>
    %84 = vector.broadcast %83 : vector<1x384xf32> to vector<16x384xf32>
    %85 = arith.mulf %81, %84 : vector<16x384xf32>
    %86 = arith.addf %80, %85 : vector<16x384xf32>
    %87 = arith.addf %56, %86 : vector<16x384xf32>
    %88 = vector.extract_strided_slice %26 {offsets = [2, 0], sizes = [16, 480], strides = [1, 1]} : vector<20x480xf32> to vector<16x480xf32>
    %89 = vector.extract_strided_slice %88 {offsets = [0, 0], sizes = [16, 384], strides = [1, 1]} : vector<16x480xf32> to vector<16x384xf32>
    %c10 = arith.constant 10 : index
    %c0_31 = arith.constant 0 : index
    %c0_32 = arith.constant 0 : index
    %90 = vector.load %arg4[%c10, %c0_31, %c0_32] : memref<25x1x384xf32, #tpu.memory_space<vmem>>, vector<1x1x384xf32>
    %91 = vector.shape_cast %90 : vector<1x1x384xf32> to vector<1x384xf32>
    %92 = vector.broadcast %91 : vector<1x384xf32> to vector<16x384xf32>
    %93 = arith.mulf %89, %92 : vector<16x384xf32>
    %94 = vector.extract_strided_slice %88 {offsets = [0, 24], sizes = [16, 384], strides = [1, 1]} : vector<16x480xf32> to vector<16x384xf32>
    %c11 = arith.constant 11 : index
    %c0_33 = arith.constant 0 : index
    %c0_34 = arith.constant 0 : index
    %95 = vector.load %arg4[%c11, %c0_33, %c0_34] : memref<25x1x384xf32, #tpu.memory_space<vmem>>, vector<1x1x384xf32>
    %96 = vector.shape_cast %95 : vector<1x1x384xf32> to vector<1x384xf32>
    %97 = vector.broadcast %96 : vector<1x384xf32> to vector<16x384xf32>
    %98 = arith.mulf %94, %97 : vector<16x384xf32>
    %99 = arith.addf %93, %98 : vector<16x384xf32>
    %100 = vector.extract_strided_slice %88 {offsets = [0, 48], sizes = [16, 384], strides = [1, 1]} : vector<16x480xf32> to vector<16x384xf32>
    %c12 = arith.constant 12 : index
    %c0_35 = arith.constant 0 : index
    %c0_36 = arith.constant 0 : index
    %101 = vector.load %arg4[%c12, %c0_35, %c0_36] : memref<25x1x384xf32, #tpu.memory_space<vmem>>, vector<1x1x384xf32>
    %102 = vector.shape_cast %101 : vector<1x1x384xf32> to vector<1x384xf32>
    %103 = vector.broadcast %102 : vector<1x384xf32> to vector<16x384xf32>
    %104 = arith.mulf %100, %103 : vector<16x384xf32>
    %105 = arith.addf %99, %104 : vector<16x384xf32>
    %106 = vector.extract_strided_slice %88 {offsets = [0, 72], sizes = [16, 384], strides = [1, 1]} : vector<16x480xf32> to vector<16x384xf32>
    %c13 = arith.constant 13 : index
    %c0_37 = arith.constant 0 : index
    %c0_38 = arith.constant 0 : index
    %107 = vector.load %arg4[%c13, %c0_37, %c0_38] : memref<25x1x384xf32, #tpu.memory_space<vmem>>, vector<1x1x384xf32>
    %108 = vector.shape_cast %107 : vector<1x1x384xf32> to vector<1x384xf32>
    %109 = vector.broadcast %108 : vector<1x384xf32> to vector<16x384xf32>
    %110 = arith.mulf %106, %109 : vector<16x384xf32>
    %111 = arith.addf %105, %110 : vector<16x384xf32>
    %112 = vector.extract_strided_slice %88 {offsets = [0, 96], sizes = [16, 384], strides = [1, 1]} : vector<16x480xf32> to vector<16x384xf32>
    %c14 = arith.constant 14 : index
    %c0_39 = arith.constant 0 : index
    %c0_40 = arith.constant 0 : index
    %113 = vector.load %arg4[%c14, %c0_39, %c0_40] : memref<25x1x384xf32, #tpu.memory_space<vmem>>, vector<1x1x384xf32>
    %114 = vector.shape_cast %113 : vector<1x1x384xf32> to vector<1x384xf32>
    %115 = vector.broadcast %114 : vector<1x384xf32> to vector<16x384xf32>
    %116 = arith.mulf %112, %115 : vector<16x384xf32>
    %117 = arith.addf %111, %116 : vector<16x384xf32>
    %118 = arith.addf %87, %117 : vector<16x384xf32>
    %119 = vector.extract_strided_slice %26 {offsets = [3, 0], sizes = [16, 480], strides = [1, 1]} : vector<20x480xf32> to vector<16x480xf32>
    %120 = vector.extract_strided_slice %119 {offsets = [0, 0], sizes = [16, 384], strides = [1, 1]} : vector<16x480xf32> to vector<16x384xf32>
    %c15 = arith.constant 15 : index
    %c0_41 = arith.constant 0 : index
    %c0_42 = arith.constant 0 : index
    %121 = vector.load %arg4[%c15, %c0_41, %c0_42] : memref<25x1x384xf32, #tpu.memory_space<vmem>>, vector<1x1x384xf32>
    %122 = vector.shape_cast %121 : vector<1x1x384xf32> to vector<1x384xf32>
    %123 = vector.broadcast %122 : vector<1x384xf32> to vector<16x384xf32>
    %124 = arith.mulf %120, %123 : vector<16x384xf32>
    %125 = vector.extract_strided_slice %119 {offsets = [0, 24], sizes = [16, 384], strides = [1, 1]} : vector<16x480xf32> to vector<16x384xf32>
    %c16 = arith.constant 16 : index
    %c0_43 = arith.constant 0 : index
    %c0_44 = arith.constant 0 : index
    %126 = vector.load %arg4[%c16, %c0_43, %c0_44] : memref<25x1x384xf32, #tpu.memory_space<vmem>>, vector<1x1x384xf32>
    %127 = vector.shape_cast %126 : vector<1x1x384xf32> to vector<1x384xf32>
    %128 = vector.broadcast %127 : vector<1x384xf32> to vector<16x384xf32>
    %129 = arith.mulf %125, %128 : vector<16x384xf32>
    %130 = arith.addf %124, %129 : vector<16x384xf32>
    %131 = vector.extract_strided_slice %119 {offsets = [0, 48], sizes = [16, 384], strides = [1, 1]} : vector<16x480xf32> to vector<16x384xf32>
    %c17 = arith.constant 17 : index
    %c0_45 = arith.constant 0 : index
    %c0_46 = arith.constant 0 : index
    %132 = vector.load %arg4[%c17, %c0_45, %c0_46] : memref<25x1x384xf32, #tpu.memory_space<vmem>>, vector<1x1x384xf32>
    %133 = vector.shape_cast %132 : vector<1x1x384xf32> to vector<1x384xf32>
    %134 = vector.broadcast %133 : vector<1x384xf32> to vector<16x384xf32>
    %135 = arith.mulf %131, %134 : vector<16x384xf32>
    %136 = arith.addf %130, %135 : vector<16x384xf32>
    %137 = vector.extract_strided_slice %119 {offsets = [0, 72], sizes = [16, 384], strides = [1, 1]} : vector<16x480xf32> to vector<16x384xf32>
    %c18 = arith.constant 18 : index
    %c0_47 = arith.constant 0 : index
    %c0_48 = arith.constant 0 : index
    %138 = vector.load %arg4[%c18, %c0_47, %c0_48] : memref<25x1x384xf32, #tpu.memory_space<vmem>>, vector<1x1x384xf32>
    %139 = vector.shape_cast %138 : vector<1x1x384xf32> to vector<1x384xf32>
    %140 = vector.broadcast %139 : vector<1x384xf32> to vector<16x384xf32>
    %141 = arith.mulf %137, %140 : vector<16x384xf32>
    %142 = arith.addf %136, %141 : vector<16x384xf32>
    %143 = vector.extract_strided_slice %119 {offsets = [0, 96], sizes = [16, 384], strides = [1, 1]} : vector<16x480xf32> to vector<16x384xf32>
    %c19 = arith.constant 19 : index
    %c0_49 = arith.constant 0 : index
    %c0_50 = arith.constant 0 : index
    %144 = vector.load %arg4[%c19, %c0_49, %c0_50] : memref<25x1x384xf32, #tpu.memory_space<vmem>>, vector<1x1x384xf32>
    %145 = vector.shape_cast %144 : vector<1x1x384xf32> to vector<1x384xf32>
    %146 = vector.broadcast %145 : vector<1x384xf32> to vector<16x384xf32>
    %147 = arith.mulf %143, %146 : vector<16x384xf32>
    %148 = arith.addf %142, %147 : vector<16x384xf32>
    %149 = arith.addf %118, %148 : vector<16x384xf32>
    %150 = vector.extract_strided_slice %26 {offsets = [4, 0], sizes = [16, 480], strides = [1, 1]} : vector<20x480xf32> to vector<16x480xf32>
    %151 = vector.extract_strided_slice %150 {offsets = [0, 0], sizes = [16, 384], strides = [1, 1]} : vector<16x480xf32> to vector<16x384xf32>
    %c20 = arith.constant 20 : index
    %c0_51 = arith.constant 0 : index
    %c0_52 = arith.constant 0 : index
    %152 = vector.load %arg4[%c20, %c0_51, %c0_52] : memref<25x1x384xf32, #tpu.memory_space<vmem>>, vector<1x1x384xf32>
    %153 = vector.shape_cast %152 : vector<1x1x384xf32> to vector<1x384xf32>
    %154 = vector.broadcast %153 : vector<1x384xf32> to vector<16x384xf32>
    %155 = arith.mulf %151, %154 : vector<16x384xf32>
    %156 = vector.extract_strided_slice %150 {offsets = [0, 24], sizes = [16, 384], strides = [1, 1]} : vector<16x480xf32> to vector<16x384xf32>
    %c21 = arith.constant 21 : index
    %c0_53 = arith.constant 0 : index
    %c0_54 = arith.constant 0 : index
    %157 = vector.load %arg4[%c21, %c0_53, %c0_54] : memref<25x1x384xf32, #tpu.memory_space<vmem>>, vector<1x1x384xf32>
    %158 = vector.shape_cast %157 : vector<1x1x384xf32> to vector<1x384xf32>
    %159 = vector.broadcast %158 : vector<1x384xf32> to vector<16x384xf32>
    %160 = arith.mulf %156, %159 : vector<16x384xf32>
    %161 = arith.addf %155, %160 : vector<16x384xf32>
    %162 = vector.extract_strided_slice %150 {offsets = [0, 48], sizes = [16, 384], strides = [1, 1]} : vector<16x480xf32> to vector<16x384xf32>
    %c22 = arith.constant 22 : index
    %c0_55 = arith.constant 0 : index
    %c0_56 = arith.constant 0 : index
    %163 = vector.load %arg4[%c22, %c0_55, %c0_56] : memref<25x1x384xf32, #tpu.memory_space<vmem>>, vector<1x1x384xf32>
    %164 = vector.shape_cast %163 : vector<1x1x384xf32> to vector<1x384xf32>
    %165 = vector.broadcast %164 : vector<1x384xf32> to vector<16x384xf32>
    %166 = arith.mulf %162, %165 : vector<16x384xf32>
    %167 = arith.addf %161, %166 : vector<16x384xf32>
    %168 = vector.extract_strided_slice %150 {offsets = [0, 72], sizes = [16, 384], strides = [1, 1]} : vector<16x480xf32> to vector<16x384xf32>
    %c23 = arith.constant 23 : index
    %c0_57 = arith.constant 0 : index
    %c0_58 = arith.constant 0 : index
    %169 = vector.load %arg4[%c23, %c0_57, %c0_58] : memref<25x1x384xf32, #tpu.memory_space<vmem>>, vector<1x1x384xf32>
    %170 = vector.shape_cast %169 : vector<1x1x384xf32> to vector<1x384xf32>
    %171 = vector.broadcast %170 : vector<1x384xf32> to vector<16x384xf32>
    %172 = arith.mulf %168, %171 : vector<16x384xf32>
    %173 = arith.addf %167, %172 : vector<16x384xf32>
    %174 = vector.extract_strided_slice %150 {offsets = [0, 96], sizes = [16, 384], strides = [1, 1]} : vector<16x480xf32> to vector<16x384xf32>
    %c24 = arith.constant 24 : index
    %c0_59 = arith.constant 0 : index
    %c0_60 = arith.constant 0 : index
    %175 = vector.load %arg4[%c24, %c0_59, %c0_60] : memref<25x1x384xf32, #tpu.memory_space<vmem>>, vector<1x1x384xf32>
    %176 = vector.shape_cast %175 : vector<1x1x384xf32> to vector<1x384xf32>
    %177 = vector.broadcast %176 : vector<1x384xf32> to vector<16x384xf32>
    %178 = arith.mulf %174, %177 : vector<16x384xf32>
    %179 = arith.addf %173, %178 : vector<16x384xf32>
    %180 = arith.addf %149, %179 : vector<16x384xf32>
    %c0_61 = arith.constant 0 : index
    %c0_62 = arith.constant 0 : index
    %181 = vector.load %arg5[%c0_61, %c0_62] : memref<2x384xf32, #tpu.memory_space<vmem>>, vector<1x384xf32>
    %182 = vector.broadcast %181 : vector<1x384xf32> to vector<16x384xf32>
    %183 = arith.mulf %180, %182 : vector<16x384xf32>
    %c1_63 = arith.constant 1 : index
    %c0_64 = arith.constant 0 : index
    %184 = vector.load %arg5[%c1_63, %c0_64] : memref<2x384xf32, #tpu.memory_space<vmem>>, vector<1x384xf32>
    %185 = vector.broadcast %184 : vector<1x384xf32> to vector<16x384xf32>
    %186 = arith.addf %183, %185 : vector<16x384xf32>
    %187 = arith.negf %186 : vector<16x384xf32>
    %188 = math.exp %187 : vector<16x384xf32>
    %cst_65 = arith.constant 1.000000e+00 : f32
    %189 = vector.broadcast %cst_65 : f32 to vector<16x384xf32>
    %190 = arith.addf %189, %188 : vector<16x384xf32>
    %191 = arith.divf %189, %190 : vector<16x384xf32>
    %192 = arith.mulf %186, %191 : vector<16x384xf32>
    %cst_66 = arith.constant dense<0.000000e+00> : vector<384xf32>
    %193 = vector.multi_reduction <add>, %192, %cst_66 [0] : vector<16x384xf32> to vector<384xf32>
    %194 = vector.shape_cast %193 : vector<384xf32> to vector<1x384xf32>
    %c0_67 = arith.constant 0 : index
    %c0_68 = arith.constant 0 : index
    %195 = vector.load %arg6[%c0_67, %c0_68] : memref<13x384xf32, #tpu.memory_space<vmem>>, vector<4x384xf32>
    %c4_69 = arith.constant 4 : index
    %c0_70 = arith.constant 0 : index
    %196 = vector.load %arg6[%c4_69, %c0_70] : memref<13x384xf32, #tpu.memory_space<vmem>>, vector<4x384xf32>
    %c8_71 = arith.constant 8 : index
    %c0_72 = arith.constant 0 : index
    %197 = vector.load %arg6[%c8_71, %c0_72] : memref<13x384xf32, #tpu.memory_space<vmem>>, vector<4x384xf32>
    %c12_73 = arith.constant 12 : index
    %c0_74 = arith.constant 0 : index
    %198 = vector.load %arg6[%c12_73, %c0_74] : memref<13x384xf32, #tpu.memory_space<vmem>>, vector<1x384xf32>
    %199 = vector.broadcast %194 : vector<1x384xf32> to vector<4x384xf32>
    %200 = arith.mulf %195, %199 : vector<4x384xf32>
    %201 = arith.addf %200, %196 : vector<4x384xf32>
    %cst_75 = arith.constant dense<0.000000e+00> : vector<4xf32>
    %202 = vector.multi_reduction <add>, %201, %cst_75 [1] : vector<4x384xf32> to vector<4xf32>
    %203 = vector.shape_cast %202 : vector<4xf32> to vector<4x1xf32>
    %204 = arith.negf %203 : vector<4x1xf32>
    %205 = math.exp %204 : vector<4x1xf32>
    %cst_76 = arith.constant 1.000000e+00 : f32
    %206 = vector.broadcast %cst_76 : f32 to vector<4x1xf32>
    %207 = arith.addf %206, %205 : vector<4x1xf32>
    %208 = arith.divf %206, %207 : vector<4x1xf32>
    %209 = arith.mulf %203, %208 : vector<4x1xf32>
    %210 = vector.broadcast %209 : vector<4x1xf32> to vector<4x384xf32>
    %211 = arith.mulf %210, %197 : vector<4x384xf32>
    %cst_77 = arith.constant dense<0.000000e+00> : vector<384xf32>
    %212 = vector.multi_reduction <add>, %211, %cst_77 [0] : vector<4x384xf32> to vector<384xf32>
    %213 = vector.shape_cast %212 : vector<384xf32> to vector<1x384xf32>
    %214 = arith.addf %213, %198 : vector<1x384xf32>
    %215 = arith.negf %214 : vector<1x384xf32>
    %216 = math.exp %215 : vector<1x384xf32>
    %cst_78 = arith.constant 1.000000e+00 : f32
    %217 = vector.broadcast %cst_78 : f32 to vector<1x384xf32>
    %218 = arith.addf %217, %216 : vector<1x384xf32>
    %219 = arith.divf %217, %218 : vector<1x384xf32>
    %220 = vector.broadcast %219 : vector<1x384xf32> to vector<16x384xf32>
    %221 = arith.mulf %192, %220 : vector<16x384xf32>
    %222 = arith.truncf %221 : vector<16x384xf32> to vector<16x384xbf16>
    %c0_79 = arith.constant 0 : index
    %c0_80 = arith.constant 0 : index
    %223 = vector.load %arg7[%c0_79, %c0_80] : memref<384x128xbf16, #tpu.memory_space<vmem>>, vector<384x128xbf16>
    %cst_81 = arith.constant dense<0.000000e+00> : vector<16x128xf32>
    %224 = tpu.matmul %222, %223, %cst_81 {dimension_numbers = #tpu.dot_dimension_numbers<[1], [0], [0], [1], [0, 0, 1, 1], [], []>} : vector<16x384xbf16>, vector<384x128xbf16>, vector<16x128xf32> -> vector<16x128xf32>
    %c0_82 = arith.constant 0 : index
    %c0_83 = arith.constant 0 : index
    %225 = vector.load %arg8[%c0_82, %c0_83] : memref<2x128xf32, #tpu.memory_space<vmem>>, vector<1x128xf32>
    %226 = vector.broadcast %225 : vector<1x128xf32> to vector<16x128xf32>
    %227 = arith.mulf %224, %226 : vector<16x128xf32>
    %c1_84 = arith.constant 1 : index
    %c0_85 = arith.constant 0 : index
    %228 = vector.load %arg8[%c1_84, %c0_85] : memref<2x128xf32, #tpu.memory_space<vmem>>, vector<1x128xf32>
    %229 = vector.broadcast %228 : vector<1x128xf32> to vector<16x128xf32>
    %230 = arith.addf %227, %229 : vector<16x128xf32>
    %231 = vector.extract_strided_slice %1 {offsets = [2, 0], sizes = [16, 128], strides = [1, 1]} : vector<20x128xf32> to vector<16x128xf32>
    %232 = arith.addf %230, %231 : vector<16x128xf32>
    %c0_86 = arith.constant 0 : index
    %c0_87 = arith.constant 0 : index
    %c0_88 = arith.constant 0 : index
    %233 = vector.load %arg9[%c0_86, %c0_87, %c0_88] : memref<1x16x128xf32, #tpu.memory_space<vmem>>, vector<1x16x128xf32>
    %234 = vector.shape_cast %233 : vector<1x16x128xf32> to vector<16x128xf32>
    %235 = vector.shape_cast %232 : vector<16x128xf32> to vector<1x16x128xf32>
    tpu.vector_store %arg9[%c0_86, %c0_87, %c0_88], %235 {strides = array<i32>} : memref<1x16x128xf32, #tpu.memory_space<vmem>>, vector<1x16x128xf32>,
    return
  }
  func.func @transform_0(%arg0: i32) -> (i32, i32, i32) {
    %c0_i32 = arith.constant 0 : i32
    %c0_i32_0 = arith.constant 0 : i32
    %c0_i32_1 = arith.constant 0 : i32
    return %arg0, %c0_i32, %c0_i32_0 : i32, i32, i32
  }
  func.func @transform_1(%arg0: i32) -> (i32, i32) {
    %c0_i32 = arith.constant 0 : i32
    %c0_i32_0 = arith.constant 0 : i32
    %c0_i32_1 = arith.constant 0 : i32
    return %c0_i32, %c0_i32_0 : i32, i32
  }
  func.func @transform_2(%arg0: i32) -> (i32, i32) {
    %c0_i32 = arith.constant 0 : i32
    %c0_i32_0 = arith.constant 0 : i32
    %c0_i32_1 = arith.constant 0 : i32
    return %c0_i32, %c0_i32_0 : i32, i32
  }
  func.func @transform_3(%arg0: i32) -> (i32, i32, i32) {
    %c0_i32 = arith.constant 0 : i32
    %c0_i32_0 = arith.constant 0 : i32
    %c0_i32_1 = arith.constant 0 : i32
    %c0_i32_2 = arith.constant 0 : i32
    return %c0_i32, %c0_i32_0, %c0_i32_1 : i32, i32, i32
  }
  func.func @transform_4(%arg0: i32) -> (i32, i32) {
    %c0_i32 = arith.constant 0 : i32
    %c0_i32_0 = arith.constant 0 : i32
    %c0_i32_1 = arith.constant 0 : i32
    return %c0_i32, %c0_i32_0 : i32, i32
  }
  func.func @transform_5(%arg0: i32) -> (i32, i32) {
    %c0_i32 = arith.constant 0 : i32
    %c0_i32_0 = arith.constant 0 : i32
    %c0_i32_1 = arith.constant 0 : i32
    return %c0_i32, %c0_i32_0 : i32, i32
  }
  func.func @transform_6(%arg0: i32) -> (i32, i32) {
    %c0_i32 = arith.constant 0 : i32
    %c0_i32_0 = arith.constant 0 : i32
    %c0_i32_1 = arith.constant 0 : i32
    return %c0_i32, %c0_i32_0 : i32, i32
  }
  func.func @transform_7(%arg0: i32) -> (i32, i32) {
    %c0_i32 = arith.constant 0 : i32
    %c0_i32_0 = arith.constant 0 : i32
    %c0_i32_1 = arith.constant 0 : i32
    return %c0_i32, %c0_i32_0 : i32, i32
  }
  func.func @transform_8(%arg0: i32) -> (i32, i32, i32) {
    %c0_i32 = arith.constant 0 : i32
    %c0_i32_0 = arith.constant 0 : i32
    %c0_i32_1 = arith.constant 0 : i32
    return %arg0, %c0_i32, %c0_i32_0 : i32, i32, i32
  }
}

</mosaic_0001>

<llo_original>
// kernel: forward.1
$region0: #{forward.1}
  #allocation0 [shape = 'u32[]', space=smem, size = 0x4, offset = 0x4, fixed_abs, tag = 'smem constant byte address 0x4 - core index']
  #allocation1 [shape = 'u32[72,128]{1,0:T(1,128)}', space=vmem, size = 0x9000, scoped, tag = 'internal scratch']
  %s0 = inlined_call_operand.vmem [shape: f32[2,20,128], index: 0, kind: input, shape index: {}]
  %s1 = inlined_call_operand.vmem [shape: bf16[128,480], index: 1, kind: input, shape index: {}]
  %s2 = inlined_call_operand.vmem [shape: f32[2,480], index: 2, kind: input, shape index: {}]
  %s3 = inlined_call_operand.vmem [shape: f32[25,1,384], index: 3, kind: input, shape index: {}]
  %s4 = inlined_call_operand.vmem [shape: f32[2,384], index: 4, kind: input, shape index: {}]
  %s5 = inlined_call_operand.vmem [shape: f32[13,384], index: 5, kind: input, shape index: {}]
  %s6 = inlined_call_operand.vmem [shape: bf16[384,128], index: 6, kind: input, shape index: {}]
  %s7 = inlined_call_operand.vmem [shape: f32[2,128], index: 7, kind: input, shape index: {}]
  %s8 = inlined_call_operand.vmem [shape: f32[2,16,128], index: 8, kind: output, shape index: {}]
  %s9 = sld [smem:[#allocation0]]
  $region65: #{forward.1} parent=0
    _
  %s11 = ssub.s32 1, %s9
  %s12 = scalar_select 0, %s11, %s9
  loop: start=0, step=1, limit=4
  $region2: #{forward.1} parent=0 // loop_pre_header
    _
  $region3: #{forward.1} parent=0 // loop_header
    %s14 = sphi 0, %s18
    %p15 = scmp.ge.s32.totalorder %s14, 4
    %s24 = sphi 0, %s26
    %s27 = sphi 0, %s24
    %s28 = sphi 0, %s27
    %s44 = sphi 0, %s28
    %s48 = sphi 0, %s48
    %s50 = sphi 0, %s48
    %s51 = sphi 0, %s50
    %s65 = sphi 0, %s51
    %s69 = sphi 0, %s69
    %s71 = sphi 0, %s69
    %s72 = sphi 0, %s71
    %s86 = sphi 0, %s72
    %s90 = sphi 0, %s90
    %s92 = sphi 0, %s90
    %s93 = sphi 0, %s92
    %s107 = sphi 0, %s93
    %s111 = sphi 0, %s111
    %s113 = sphi 0, %s111
    %s114 = sphi 0, %s113
    %s128 = sphi 0, %s114
    %s132 = sphi 0, %s132
    %s134 = sphi 0, %s132
    %s135 = sphi 0, %s134
    %s149 = sphi 0, %s135
    %s153 = sphi 0, %s153
    %s155 = sphi 0, %s153
    %s156 = sphi 0, %s155
    %s170 = sphi 0, %s156
    %s174 = sphi 0, %s174
    %s176 = sphi 0, %s174
    %s177 = sphi 0, %s176
    %s191 = sphi 0, %s177
    %s197 = sphi 0, %s199
    %s200 = sphi 0, %s197
    %s201 = sphi 0, %s200
    %s217 = sphi 0, %s201
  $region4: #{forward.1} parent=0 // loop_header_branch
    %17 = sbr.rel (%p15) target = $region8
  $region5: #{forward.1} parent=0 // loop_body
    %s19 = ssub.s32 %s14, 1
    %s20 = ssub.s32 %s14, 2
    %s21 = sadd.s32 %s14, 1
    %s22 = ssub.s32 %s14, %s21
    %p23 = scmp.eq.s32.totalorder %s22, 0
    %s25 = sadd.s32 %s24, 1
    %s26 = scalar_select %p23, %s24, %s25
    %p29 = pneg %p23
    %p30 = scmp.eq.s32.totalorder %s14, 1
    %p31 = por %p29, %p30
    %p32 = scmp.ne.s32.totalorder %s24, %s27
    %p33 = scmp.eq.s32.totalorder %s14, 0
    %p34 = por %p32, %p33
    %p35 = scmp.ne.s32.totalorder %s24, %s27
    %p36 = scmp.eq.s32.totalorder %s19, 1
    %p37 = por %p35, %p36
    %p38 = scmp.ne.s32.totalorder %s27, %s28
    %p39 = scmp.eq.s32.totalorder %s19, 0
    %p40 = por %p38, %p39
    %p41 = scmp.ne.s32.totalorder %s27, %s28
    %p42 = scmp.eq.s32.totalorder %s20, 1
    %p43 = por %p41, %p42
    %p45 = scmp.ne.s32.totalorder %s28, %s44
    %p46 = scmp.eq.s32.totalorder %s20, 0
    %p47 = por %p45, %p46
    %s49 = sadd.s32 %s48, 1
    %p52 = scmp.eq.s32.totalorder %s14, 1
    %p53 = scmp.ne.s32.totalorder %s48, %s50
    %p54 = scmp.eq.s32.totalorder %s14, 0
    %p55 = por %p53, %p54
    %p56 = scmp.ne.s32.totalorder %s48, %s50
    %p57 = scmp.eq.s32.totalorder %s19, 1
    %p58 = por %p56, %p57
    %p59 = scmp.ne.s32.totalorder %s50, %s51
    %p60 = scmp.eq.s32.totalorder %s19, 0
    %p61 = por %p59, %p60
    %p62 = scmp.ne.s32.totalorder %s50, %s51
    %p63 = scmp.eq.s32.totalorder %s20, 1
    %p64 = por %p62, %p63
    %p66 = scmp.ne.s32.totalorder %s51, %s65
    %p67 = scmp.eq.s32.totalorder %s20, 0
    %p68 = por %p66, %p67
    %s70 = sadd.s32 %s69, 1
    %p73 = scmp.eq.s32.totalorder %s14, 1
    %p74 = scmp.ne.s32.totalorder %s69, %s71
    %p75 = scmp.eq.s32.totalorder %s14, 0
    %p76 = por %p74, %p75
    %p77 = scmp.ne.s32.totalorder %s69, %s71
    %p78 = scmp.eq.s32.totalorder %s19, 1
    %p79 = por %p77, %p78
    %p80 = scmp.ne.s32.totalorder %s71, %s72
    %p81 = scmp.eq.s32.totalorder %s19, 0
    %p82 = por %p80, %p81
    %p83 = scmp.ne.s32.totalorder %s71, %s72
    %p84 = scmp.eq.s32.totalorder %s20, 1
    %p85 = por %p83, %p84
    %p87 = scmp.ne.s32.totalorder %s72, %s86
    %p88 = scmp.eq.s32.totalorder %s20, 0
    %p89 = por %p87, %p88
    %s91 = sadd.s32 %s90, 1
    %p94 = scmp.eq.s32.totalorder %s14, 1
    %p95 = scmp.ne.s32.totalorder %s90, %s92
    %p96 = scmp.eq.s32.totalorder %s14, 0
    %p97 = por %p95, %p96
    %p98 = scmp.ne.s32.totalorder %s90, %s92
    %p99 = scmp.eq.s32.totalorder %s19, 1
    %p100 = por %p98, %p99
    %p101 = scmp.ne.s32.totalorder %s92, %s93
    %p102 = scmp.eq.s32.totalorder %s19, 0
    %p103 = por %p101, %p102
    %p104 = scmp.ne.s32.totalorder %s92, %s93
    %p105 = scmp.eq.s32.totalorder %s20, 1
    %p106 = por %p104, %p105
    %p108 = scmp.ne.s32.totalorder %s93, %s107
    %p109 = scmp.eq.s32.totalorder %s20, 0
    %p110 = por %p108, %p109
    %s112 = sadd.s32 %s111, 1
    %p115 = scmp.eq.s32.totalorder %s14, 1
    %p116 = scmp.ne.s32.totalorder %s111, %s113
    %p117 = scmp.eq.s32.totalorder %s14, 0
    %p118 = por %p116, %p117
    %p119 = scmp.ne.s32.totalorder %s111, %s113
    %p120 = scmp.eq.s32.totalorder %s19, 1
    %p121 = por %p119, %p120
    %p122 = scmp.ne.s32.totalorder %s113, %s114
    %p123 = scmp.eq.s32.totalorder %s19, 0
    %p124 = por %p122, %p123
    %p125 = scmp.ne.s32.totalorder %s113, %s114
    %p126 = scmp.eq.s32.totalorder %s20, 1
    %p127 = por %p125, %p126
    %p129 = scmp.ne.s32.totalorder %s114, %s128
    %p130 = scmp.eq.s32.totalorder %s20, 0
    %p131 = por %p129, %p130
    %s133 = sadd.s32 %s132, 1
    %p136 = scmp.eq.s32.totalorder %s14, 1
    %p137 = scmp.ne.s32.totalorder %s132, %s134
    %p138 = scmp.eq.s32.totalorder %s14, 0
    %p139 = por %p137, %p138
    %p140 = scmp.ne.s32.totalorder %s132, %s134
    %p141 = scmp.eq.s32.totalorder %s19, 1
    %p142 = por %p140, %p141
    %p143 = scmp.ne.s32.totalorder %s134, %s135
    %p144 = scmp.eq.s32.totalorder %s19, 0
    %p145 = por %p143, %p144
    %p146 = scmp.ne.s32.totalorder %s134, %s135
    %p147 = scmp.eq.s32.totalorder %s20, 1
    %p148 = por %p146, %p147
    %p150 = scmp.ne.s32.totalorder %s135, %s149
    %p151 = scmp.eq.s32.totalorder %s20, 0
    %p152 = por %p150, %p151
    %s154 = sadd.s32 %s153, 1
    %p157 = scmp.eq.s32.totalorder %s14, 1
    %p158 = scmp.ne.s32.totalorder %s153, %s155
    %p159 = scmp.eq.s32.totalorder %s14, 0
    %p160 = por %p158, %p159
    %p161 = scmp.ne.s32.totalorder %s153, %s155
    %p162 = scmp.eq.s32.totalorder %s19, 1
    %p163 = por %p161, %p162
    %p164 = scmp.ne.s32.totalorder %s155, %s156
    %p165 = scmp.eq.s32.totalorder %s19, 0
    %p166 = por %p164, %p165
    %p167 = scmp.ne.s32.totalorder %s155, %s156
    %p168 = scmp.eq.s32.totalorder %s20, 1
    %p169 = por %p167, %p168
    %p171 = scmp.ne.s32.totalorder %s156, %s170
    %p172 = scmp.eq.s32.totalorder %s20, 0
    %p173 = por %p171, %p172
    %s175 = sadd.s32 %s174, 1
    %p178 = scmp.eq.s32.totalorder %s14, 1
    %p179 = scmp.ne.s32.totalorder %s174, %s176
    %p180 = scmp.eq.s32.totalorder %s14, 0
    %p181 = por %p179, %p180
    %p182 = scmp.ne.s32.totalorder %s174, %s176
    %p183 = scmp.eq.s32.totalorder %s19, 1
    %p184 = por %p182, %p183
    %p185 = scmp.ne.s32.totalorder %s176, %s177
    %p186 = scmp.eq.s32.totalorder %s19, 0
    %p187 = por %p185, %p186
    %p188 = scmp.ne.s32.totalorder %s176, %s177
    %p189 = scmp.eq.s32.totalorder %s20, 1
    %p190 = por %p188, %p189
    %p192 = scmp.ne.s32.totalorder %s177, %s191
    %p193 = scmp.eq.s32.totalorder %s20, 0
    %p194 = por %p192, %p193
    %s195 = ssub.s32 %s14, %s21
    %p196 = scmp.eq.s32.totalorder %s195, 0
    %s198 = sadd.s32 %s197, 1
    %s199 = scalar_select %p196, %s197, %s198
    %p202 = pneg %p196
    %p203 = scmp.eq.s32.totalorder %s14, 1
    %p204 = por %p202, %p203
    %p205 = scmp.ne.s32.totalorder %s197, %s200
    %p206 = scmp.eq.s32.totalorder %s14, 0
    %p207 = por %p205, %p206
    %p208 = scmp.ne.s32.totalorder %s197, %s200
    %p209 = scmp.eq.s32.totalorder %s19, 1
    %p210 = por %p208, %p209
    %p211 = scmp.ne.s32.totalorder %s200, %s201
    %p212 = scmp.eq.s32.totalorder %s19, 0
    %p213 = por %p211, %p212
    %p214 = scmp.ne.s32.totalorder %s200, %s201
    %p215 = scmp.eq.s32.totalorder %s20, 1
    %p216 = por %p214, %p215
    %p218 = scmp.ne.s32.totalorder %s201, %s217
    %p219 = scmp.eq.s32.totalorder %s20, 0
    %p220 = por %p218, %p219
    %p221 = scmp.le.s32.totalorder 1, %s14
    %p222 = scmp.lt.s32.totalorder %s14, 3
    %p223 = pnand %p221, %p222
    %p224 = pneg %p223
    // Predicated region
    $region9: #{forward.1} parent=5 // pred_check
      _
    $region10: #{forward.1} parent=5 // pred_check_branch
      %226 = sbr.rel (%p223) target = $region12
    $region11: #{forward.1} parent=5 // pred_region
      %s227 = ssub.s32 %s14, 1
      // Predicated region
      $region13: #{forward.1} parent=11 // pred_check
        %p228 = pneg %p61
      $region14: #{forward.1} parent=11 // pred_check_branch
        %230 = sbr.rel (%p228) target = $region16
      $region15: #{forward.1} parent=11 // pred_region
        _
      $region16: #{forward.1} parent=11 // pred_fallthru
        _
      // Predicated region
      $region17: #{forward.1} parent=11 // pred_check
        %p231 = pneg %p82
      $region18: #{forward.1} parent=11 // pred_check_branch
        %233 = sbr.rel (%p231) target = $region20
      $region19: #{forward.1} parent=11 // pred_region
        _
      $region20: #{forward.1} parent=11 // pred_fallthru
        _
      // Predicated region
      $region21: #{forward.1} parent=11 // pred_check
        %p234 = pneg %p103
      $region22: #{forward.1} parent=11 // pred_check_branch
        %236 = sbr.rel (%p234) target = $region24
      $region23: #{forward.1} parent=11 // pred_region
        _
      $region24: #{forward.1} parent=11 // pred_fallthru
        _
      // Predicated region
      $region25: #{forward.1} parent=11 // pred_check
        %p237 = pneg %p124
      $region26: #{forward.1} parent=11 // pred_check_branch
        %239 = sbr.rel (%p237) target = $region28
      $region27: #{forward.1} parent=11 // pred_region
        _
      $region28: #{forward.1} parent=11 // pred_fallthru
        _
      // Predicated region
      $region29: #{forward.1} parent=11 // pred_check
        %p240 = pneg %p145
      $region30: #{forward.1} parent=11 // pred_check_branch
        %242 = sbr.rel (%p240) target = $region32
      $region31: #{forward.1} parent=11 // pred_region
        _
      $region32: #{forward.1} parent=11 // pred_fallthru
        _
      // Predicated region
      $region33: #{forward.1} parent=11 // pred_check
        %p243 = pneg %p166
      $region34: #{forward.1} parent=11 // pred_check_branch
        %245 = sbr.rel (%p243) target = $region36
      $region35: #{forward.1} parent=11 // pred_region
        _
      $region36: #{forward.1} parent=11 // pred_fallthru
        _
      // Predicated region
      $region37: #{forward.1} parent=11 // pred_check
        %p246 = pneg %p187
      $region38: #{forward.1} parent=11 // pred_check_branch
        %248 = sbr.rel (%p246) target = $region40
      $region39: #{forward.1} parent=11 // pred_region
        _
      $region40: #{forward.1} parent=11 // pred_fallthru
        _
    $region12: #{forward.1} parent=5 // pred_fallthru
      _
    %p249 = scmp.lt.s32.totalorder %s14, 2
    // Predicated region
    $region41: #{forward.1} parent=5 // pred_check
      %p250 = pneg %p249
    $region42: #{forward.1} parent=5 // pred_check_branch
      %252 = sbr.rel (%p250) target = $region44
    $region43: #{forward.1} parent=5 // pred_region
      // Predicated region
      $region45: #{forward.1} parent=43 // pred_check
        %p253 = pneg %p34
      $region46: #{forward.1} parent=43 // pred_check_branch
        %255 = sbr.rel (%p253) target = $region48
      $region47: #{forward.1} parent=43 // pred_region
        %p256 = scmp.lt.s32.totalorder %s14, 1
        %s257 = scalar_select %p256, %s14, 1
        %s258 = smul.addr %s257, 3
        %s259 = smul.addr %s258, 8
        %s260 = scalar_lea.vmem %s0, %s259
      $region48: #{forward.1} parent=43 // pred_fallthru
        _
    $region44: #{forward.1} parent=5 // pred_fallthru
      _
    %p261 = scmp.le.s32.totalorder 1, %s14
    %p262 = scmp.lt.s32.totalorder %s14, 3
    %p263 = pnand %p261, %p262
    %p264 = pneg %p263
    // Predicated region
    $region49: #{forward.1} parent=5 // pred_check
      _
    $region50: #{forward.1} parent=5 // pred_check_branch
      %266 = sbr.rel (%p263) target = $region52
    $region51: #{forward.1} parent=5 // pred_region
      %s267 = ssub.s32 %s14, 1
      %p268 = scmp.lt.s32.totalorder %s19, 1
      %s269 = scalar_select %p268, %s19, 1
      %s270 = smul.addr %s269, 3
      %s271 = smul.addr %s270, 8
      %s272 = scalar_lea.vmem %s0, %s271
      %p273 = pneg %p40
      %p274 = pneg %p37
      %p275 = pneg %p61
      %p276 = pneg %p58
      %p277 = pneg %p82
      %p278 = pneg %p79
      %p279 = pneg %p103
      %p280 = pneg %p100
      %p281 = pneg %p124
      %p282 = pneg %p121
      %p283 = pneg %p145
      %p284 = pneg %p142
      %p285 = pneg %p166
      %p286 = pneg %p163
      %p287 = pneg %p187
      %p288 = pneg %p184
      %p289 = pneg %p213
      %p290 = pneg %p210
      %p291 = scmp.lt.s32.totalorder %s19, 1
      %s292 = scalar_select %p291, %s19, 1
      %s293 = smul.addr %s292, 2
      %s294 = smul.addr %s293, 8
      %s295 = scalar_lea.vmem %s8, %s294
      %p296 = scmp.lt.s32.totalorder %s19, 1
      %s297 = scalar_select %p296, %s19, 1
      %s298 = smul.addr %s297, 3
      %s299 = smul.addr %s298, 8
      %s300 = scalar_lea.vmem %s0, %s299
      %p301 = scmp.lt.s32.totalorder %s19, 1
      %s302 = scalar_select %p301, %s19, 1
      %s303 = smul.addr %s302, 2
      %s304 = smul.addr %s303, 8
      %s305 = scalar_lea.vmem %s8, %s304
      %v306 = vld [vmem:[%s300] sm:$0xff]
      %v307 = vld [vmem:[%s300 + $0x8] sm:$0xff]
      %v308 = vld [vmem:[%s300 + $0x10] sm:$0xf]
      %v309 = vpack.c.bf16 %v307, %v306
      %v310 = vpack.c.bf16 %v308, %v308
      %v311 = vld [vmem:[%s1] sm:$0xff]
      %v312 = vld [vmem:[%s1 + $0x8] sm:$0xff]
      %v313 = vld [vmem:[%s1 + $0x10] sm:$0xff]
      %v314 = vld [vmem:[%s1 + $0x18] sm:$0xff]
      %v315 = vld [vmem:[%s1 + $0x20] sm:$0xff]
      %v316 = vld [vmem:[%s1 + $0x28] sm:$0xff]
      %v317 = vld [vmem:[%s1 + $0x30] sm:$0xff]
      %v318 = vld [vmem:[%s1 + $0x38] sm:$0xff]
      %v319 = vld [vmem:[%s1 + $0x40] sm:$0xff]
      %v320 = vld [vmem:[%s1 + $0x48] sm:$0xff]
      %v321 = vld [vmem:[%s1 + $0x50] sm:$0xff]
      %v322 = vld [vmem:[%s1 + $0x58] sm:$0xff]
      %v323 = vld [vmem:[%s1 + $0x60] sm:$0xff]
      %v324 = vld [vmem:[%s1 + $0x68] sm:$0xff]
      %v325 = vld [vmem:[%s1 + $0x70] sm:$0xff]
      %v326 = vld [vmem:[%s1 + $0x78] sm:$0xff]
      %v327 = vld [vmem:[%s1 + $0x80] sm:$0xff]
      %v328 = vld [vmem:[%s1 + $0x88] sm:$0xff]
      %v329 = vld [vmem:[%s1 + $0x90] sm:$0xff]
      %v330 = vld [vmem:[%s1 + $0x98] sm:$0xff]
      %v331 = vld [vmem:[%s1 + $0xa0] sm:$0xff]
      %v332 = vld [vmem:[%s1 + $0xa8] sm:$0xff]
      %v333 = vld [vmem:[%s1 + $0xb0] sm:$0xff]
      %v334 = vld [vmem:[%s1 + $0xb8] sm:$0xff]
      %v335 = vld [vmem:[%s1 + $0xc0] sm:$0xff]
      %v336 = vld [vmem:[%s1 + $0xc8] sm:$0xff]
      %v337 = vld [vmem:[%s1 + $0xd0] sm:$0xff]
      %v338 = vld [vmem:[%s1 + $0xd8] sm:$0xff]
      %v339 = vld [vmem:[%s1 + $0xe0] sm:$0xff]
      %v340 = vld [vmem:[%s1 + $0xe8] sm:$0xff]
      %v341 = vld [vmem:[%s1 + $0xf0] sm:$0xff]
      %v342 = vld [vmem:[%s1 + $0xf8] sm:$0xff]
      %v375 = vunpack.c.l.b16 %v311
      %v376 = vunpack.c.h.b16 %v311
      %v377 = vunpack.c.l.b16 %v312
      %v378 = vunpack.c.h.b16 %v312
      %v379 = vunpack.c.l.b16 %v313
      %v380 = vunpack.c.h.b16 %v313
      %v381 = vunpack.c.l.b16 %v314
      %v382 = vunpack.c.h.b16 %v314
      %v383 = vunpack.c.l.b16 %v315
      %v384 = vunpack.c.h.b16 %v315
      %v385 = vunpack.c.l.b16 %v316
      %v386 = vunpack.c.h.b16 %v316
      %v387 = vunpack.c.l.b16 %v317
      %v388 = vunpack.c.h.b16 %v317
      %v389 = vunpack.c.l.b16 %v318
      %v390 = vunpack.c.h.b16 %v318
      %v391 = vunpack.c.l.b16 %v319
      %v392 = vunpack.c.h.b16 %v319
      %v393 = vunpack.c.l.b16 %v320
      %v394 = vunpack.c.h.b16 %v320
      %v395 = vunpack.c.l.b16 %v321
      %v396 = vunpack.c.h.b16 %v321
      %v397 = vunpack.c.l.b16 %v322
      %v398 = vunpack.c.h.b16 %v322
      %v399 = vunpack.c.l.b16 %v323
      %v400 = vunpack.c.h.b16 %v323
      %v401 = vunpack.c.l.b16 %v324
      %v402 = vunpack.c.h.b16 %v324
      %v403 = vunpack.c.l.b16 %v325
      %v404 = vunpack.c.h.b16 %v325
      %v405 = vunpack.c.l.b16 %v326
      %v406 = vunpack.c.h.b16 %v326
      %v407 = vunpack.c.l.b16 %v327
      %v408 = vunpack.c.h.b16 %v327
      %v409 = vunpack.c.l.b16 %v328
      %v410 = vunpack.c.h.b16 %v328
      %v411 = vunpack.c.l.b16 %v329
      %v412 = vunpack.c.h.b16 %v329
      %v413 = vunpack.c.l.b16 %v330
      %v414 = vunpack.c.h.b16 %v330
      %v415 = vunpack.c.l.b16 %v331
      %v416 = vunpack.c.h.b16 %v331
      %v417 = vunpack.c.l.b16 %v332
      %v418 = vunpack.c.h.b16 %v332
      %v419 = vunpack.c.l.b16 %v333
      %v420 = vunpack.c.h.b16 %v333
      %v421 = vunpack.c.l.b16 %v334
      %v422 = vunpack.c.h.b16 %v334
      %v423 = vunpack.c.l.b16 %v335
      %v424 = vunpack.c.h.b16 %v335
      %v425 = vunpack.c.l.b16 %v336
      %v426 = vunpack.c.h.b16 %v336
      %v427 = vunpack.c.l.b16 %v337
      %v428 = vunpack.c.h.b16 %v337
      %v429 = vunpack.c.l.b16 %v338
      %v430 = vunpack.c.h.b16 %v338
      %v431 = vunpack.c.l.b16 %v339
      %v432 = vunpack.c.h.b16 %v339
      %v433 = vunpack.c.l.b16 %v340
      %v434 = vunpack.c.h.b16 %v340
      %v435 = vunpack.c.l.b16 %v341
      %v436 = vunpack.c.h.b16 %v341
      %v437 = vunpack.c.l.b16 %v342
      %v438 = vunpack.c.h.b16 %v342
      %v439 = vpack.c.b16 %v379, %v375
      %v440 = vpack.c.b16 %v380, %v376
      %v441 = vpack.c.b16 %v381, %v377
      %v442 = vpack.c.b16 %v382, %v378
      %v443 = vpack.c.b16 %v387, %v383
      %v444 = vpack.c.b16 %v388, %v384
      %v445 = vpack.c.b16 %v389, %v385
      %v446 = vpack.c.b16 %v390, %v386
      %v447 = vpack.c.b16 %v395, %v391
      %v448 = vpack.c.b16 %v396, %v392
      %v449 = vpack.c.b16 %v397, %v393
      %v450 = vpack.c.b16 %v398, %v394
      %v451 = vpack.c.b16 %v403, %v399
      %v452 = vpack.c.b16 %v404, %v400
      %v453 = vpack.c.b16 %v405, %v401
      %v454 = vpack.c.b16 %v406, %v402
      %v455 = vpack.c.b16 %v411, %v407
      %v456 = vpack.c.b16 %v412, %v408
      %v457 = vpack.c.b16 %v413, %v409
      %v458 = vpack.c.b16 %v414, %v410
      %v459 = vpack.c.b16 %v419, %v415
      %v460 = vpack.c.b16 %v420, %v416
      %v461 = vpack.c.b16 %v421, %v417
      %v462 = vpack.c.b16 %v422, %v418
      %v463 = vpack.c.b16 %v427, %v423
      %v464 = vpack.c.b16 %v428, %v424
      %v465 = vpack.c.b16 %v429, %v425
      %v466 = vpack.c.b16 %v430, %v426
      %v467 = vpack.c.b16 %v435, %v431
      %v468 = vpack.c.b16 %v436, %v432
      %v469 = vpack.c.b16 %v437, %v433
      %v470 = vpack.c.b16 %v438, %v434
      %503 = vmatpush.bf16.msra.mxu0 %v467
      %504 = vmatpush.bf16.msra.mxu0 %v463
      %505 = vmatpush.bf16.msra.mxu0 %v459
      %506 = vmatpush.bf16.msra.mxu0 %v455
      %507 = vmatpush.bf16.msra.mxu0 %v451
      %508 = vmatpush.bf16.msra.mxu0 %v447
      %509 = vmatpush.bf16.msra.mxu0 %v443
      %510 = vmatpush.bf16.msra.mxu0 %v439
      %511 = vmatmul.bf16.gmra.mxu0 %v309
      %v512 = vpop.f32.mrf.mxu0
      %v513 = vadd.f32 0.0, %v512
      %v514 = vpop.f32.mrf.mxu0
      %v515 = vadd.f32 0.0, %v514
      %516 = vmatmul.bf16.gmra.mxu0 %v310
      %v517 = vpop.f32.mrf.mxu0
      %v518 = vadd.f32 0.0, %v517
      %v519 = vpop.f32.mrf.mxu0
      %520 = vdwg.mxu0
      %521 = vmatpush.bf16.msra.mxu0 %v468
      %522 = vmatpush.bf16.msra.mxu0 %v464
      %523 = vmatpush.bf16.msra.mxu0 %v460
      %524 = vmatpush.bf16.msra.mxu0 %v456
      %525 = vmatpush.bf16.msra.mxu0 %v452
      %526 = vmatpush.bf16.msra.mxu0 %v448
      %527 = vmatpush.bf16.msra.mxu0 %v444
      %528 = vmatpush.bf16.msra.mxu0 %v440
      %529 = vmatmul.bf16.gmra.mxu0 %v309
      %v530 = vpop.f32.mrf.mxu0
      %v531 = vadd.f32 0.0, %v530
      %v532 = vpop.f32.mrf.mxu0
      %v533 = vadd.f32 0.0, %v532
      %534 = vmatmul.bf16.gmra.mxu0 %v310
      %v535 = vpop.f32.mrf.mxu0
      %v536 = vadd.f32 0.0, %v535
      %v537 = vpop.f32.mrf.mxu0
      %538 = vdwg.mxu0
      %539 = vmatpush.bf16.msra.mxu0 %v469
      %540 = vmatpush.bf16.msra.mxu0 %v465
      %541 = vmatpush.bf16.msra.mxu0 %v461
      %542 = vmatpush.bf16.msra.mxu0 %v457
      %543 = vmatpush.bf16.msra.mxu0 %v453
      %544 = vmatpush.bf16.msra.mxu0 %v449
      %545 = vmatpush.bf16.msra.mxu0 %v445
      %546 = vmatpush.bf16.msra.mxu0 %v441
      %547 = vmatmul.bf16.gmra.mxu0 %v309
      %v548 = vpop.f32.mrf.mxu0
      %v549 = vadd.f32 0.0, %v548
      %v550 = vpop.f32.mrf.mxu0
      %v551 = vadd.f32 0.0, %v550
      %552 = vmatmul.bf16.gmra.mxu0 %v310
      %v553 = vpop.f32.mrf.mxu0
      %v554 = vadd.f32 0.0, %v553
      %v555 = vpop.f32.mrf.mxu0
      %556 = vdwg.mxu0
      %557 = vmatpush.bf16.msra.mxu0 %v470
      %558 = vmatpush.bf16.msra.mxu0 %v466
      %559 = vmatpush.bf16.msra.mxu0 %v462
      %560 = vmatpush.bf16.msra.mxu0 %v458
      %561 = vmatpush.bf16.msra.mxu0 %v454
      %562 = vmatpush.bf16.msra.mxu0 %v450
      %563 = vmatpush.bf16.msra.mxu0 %v446
      %564 = vmatpush.bf16.msra.mxu0 %v442
      %565 = vmatmul.bf16.gmra.mxu0 %v309
      %v566 = vpop.f32.mrf.mxu0
      %v567 = vadd.f32 0.0, %v566
      %v568 = vpop.f32.mrf.mxu0
      %v569 = vadd.f32 0.0, %v568
      %570 = vmatmul.bf16.gmra.mxu0 %v310
      %v571 = vpop.f32.mrf.mxu0
      %v572 = vadd.f32 0.0, %v571
      %v573 = vpop.f32.mrf.mxu0
      %574 = vdwg.mxu0
      %v575 = vld [vmem:[%s2] ss:$2 sm:$0xf]
      %v577 = vperm.slane %v575, 0
      %v578 = vperm.slane %v575, 1
      %v579 = vperm.slane %v575, 2
      %v580 = vperm.slane %v575, 3
      %v585 = vmul.f32 %v513, %v577
      %v586 = vmul.f32 %v531, %v578
      %v587 = vmul.f32 %v549, %v579
      %v588 = vmul.f32 %v567, %v580
      %v589 = vmul.f32 %v515, %v577
      %v590 = vmul.f32 %v533, %v578
      %v591 = vmul.f32 %v551, %v579
      %v592 = vmul.f32 %v569, %v580
      %v593 = vmul.f32 %v518, %v577
      %v594 = vmul.f32 %v536, %v578
      %v595 = vmul.f32 %v554, %v579
      %v596 = vmul.f32 %v572, %v580
      %s597 = scalar_lea.vmem %s2, 1
      %v598 = vld [vmem:[%s597] ss:$2 sm:$0xf]
      %v600 = vperm.slane %v598, 0
      %v601 = vperm.slane %v598, 1
      %v602 = vperm.slane %v598, 2
      %v603 = vperm.slane %v598, 3
      %v608 = vadd.f32 %v585, %v600
      %v609 = vadd.f32 %v586, %v601
      %v610 = vadd.f32 %v587, %v602
      %v611 = vadd.f32 %v588, %v603
      %v612 = vadd.f32 %v589, %v600
      %v613 = vadd.f32 %v590, %v601
      %v614 = vadd.f32 %v591, %v602
      %v615 = vadd.f32 %v592, %v603
      %v616 = vadd.f32 %v593, %v600
      %v617 = vadd.f32 %v594, %v601
      %v618 = vadd.f32 %v595, %v602
      %v619 = vadd.f32 %v596, %v603
      %v620 = vxor.u32 %v608, 2147483648
      %v621 = vxor.u32 %v609, 2147483648
      %v622 = vxor.u32 %v610, 2147483648
      %v623 = vxor.u32 %v611, 2147483648
      %v624 = vxor.u32 %v612, 2147483648
      %v625 = vxor.u32 %v613, 2147483648
      %v626 = vxor.u32 %v614, 2147483648
      %v627 = vxor.u32 %v615, 2147483648
      %v628 = vxor.u32 %v616, 2147483648
      %v629 = vxor.u32 %v617, 2147483648
      %v630 = vxor.u32 %v618, 2147483648
      %v631 = vxor.u32 %v619, 2147483648
      %v632 = vmul.f32 %v620, 1.442695
      %v633 = vpow.pop %v632
      %v634 = vmul.f32 %v621, 1.442695
      %v635 = vpow.pop %v634
      %v636 = vmul.f32 %v622, 1.442695
      %v637 = vpow.pop %v636
      %v638 = vmul.f32 %v623, 1.442695
      %v639 = vpow.pop %v638
      %v640 = vmul.f32 %v624, 1.442695
      %v641 = vpow.pop %v640
      %v642 = vmul.f32 %v625, 1.442695
      %v643 = vpow.pop %v642
      %v644 = vmul.f32 %v626, 1.442695
      %v645 = vpow.pop %v644
      %v646 = vmul.f32 %v627, 1.442695
      %v647 = vpow.pop %v646
      %v648 = vmul.f32 %v628, 1.442695
      %v649 = vpow.pop %v648
      %v650 = vmul.f32 %v629, 1.442695
      %v651 = vpow.pop %v650
      %v652 = vmul.f32 %v630, 1.442695
      %v653 = vpow.pop %v652
      %v654 = vmul.f32 %v631, 1.442695
      %v655 = vpow.pop %v654
      %v656 = vadd.f32 %v633, 1.0
      %v657 = vadd.f32 %v635, 1.0
      %v658 = vadd.f32 %v637, 1.0
      %v659 = vadd.f32 %v639, 1.0
      %v660 = vadd.f32 %v641, 1.0
      %v661 = vadd.f32 %v643, 1.0
      %v662 = vadd.f32 %v645, 1.0
      %v663 = vadd.f32 %v647, 1.0
      %v664 = vadd.f32 %v649, 1.0
      %v665 = vadd.f32 %v651, 1.0
      %v666 = vadd.f32 %v653, 1.0
      %v667 = vadd.f32 %v655, 1.0
      %v668 = vrcp.pop %v656
      %v669 = vmul.f32 %v656, %v668
      %v670 = vsub.f32 1.0, %v669
      %v671 = vmul.f32 %v668, %v670
      %v672 = vadd.f32 %v668, %v671
      %vm673 = vweird.f32 %v656
      %vm674 = vweird.f32 %v668
      %vm675 = vmor %vm673, %vm674
      %v676 = vsel %vm675, %v668, %v672
      %v677 = vand.u32 2147483647, %v656
      %vm678 = vcmp.eq.f32.partialorder %v677, 8.507059e+37
      %v679 = vand.u32 %v656, 2147483648
      %v680 = vor.u32 1.1754944e-38, %v679
      %v681 = vsel %vm678, %v680, %v676
      %v682 = vmul.f32 1.0, %v681
      %v683 = vrcp.pop %v657
      %v684 = vmul.f32 %v657, %v683
      %v685 = vsub.f32 1.0, %v684
      %v686 = vmul.f32 %v683, %v685
      %v687 = vadd.f32 %v683, %v686
      %vm688 = vweird.f32 %v657
      %vm689 = vweird.f32 %v683
      %vm690 = vmor %vm688, %vm689
      %v691 = vsel %vm690, %v683, %v687
      %v692 = vand.u32 2147483647, %v657
      %vm693 = vcmp.eq.f32.partialorder %v692, 8.507059e+37
      %v694 = vand.u32 %v657, 2147483648
      %v695 = vor.u32 1.1754944e-38, %v694
      %v696 = vsel %vm693, %v695, %v691
      %v697 = vmul.f32 1.0, %v696
      %v698 = vrcp.pop %v658
      %v699 = vmul.f32 %v658, %v698
      %v700 = vsub.f32 1.0, %v699
      %v701 = vmul.f32 %v698, %v700
      %v702 = vadd.f32 %v698, %v701
      %vm703 = vweird.f32 %v658
      %vm704 = vweird.f32 %v698
      %vm705 = vmor %vm703, %vm704
      %v706 = vsel %vm705, %v698, %v702
      %v707 = vand.u32 2147483647, %v658
      %vm708 = vcmp.eq.f32.partialorder %v707, 8.507059e+37
      %v709 = vand.u32 %v658, 2147483648
      %v710 = vor.u32 1.1754944e-38, %v709
      %v711 = vsel %vm708, %v710, %v706
      %v712 = vmul.f32 1.0, %v711
      %v713 = vrcp.pop %v659
      %v714 = vmul.f32 %v659, %v713
      %v715 = vsub.f32 1.0, %v714
      %v716 = vmul.f32 %v713, %v715
      %v717 = vadd.f32 %v713, %v716
      %vm718 = vweird.f32 %v659
      %vm719 = vweird.f32 %v713
      %vm720 = vmor %vm718, %vm719
      %v721 = vsel %vm720, %v713, %v717
      %v722 = vand.u32 2147483647, %v659
      %vm723 = vcmp.eq.f32.partialorder %v722, 8.507059e+37
      %v724 = vand.u32 %v659, 2147483648
      %v725 = vor.u32 1.1754944e-38, %v724
      %v726 = vsel %vm723, %v725, %v721
      %v727 = vmul.f32 1.0, %v726
      %v728 = vrcp.pop %v660
      %v729 = vmul.f32 %v660, %v728
      %v730 = vsub.f32 1.0, %v729
      %v731 = vmul.f32 %v728, %v730
      %v732 = vadd.f32 %v728, %v731
      %vm733 = vweird.f32 %v660
      %vm734 = vweird.f32 %v728
      %vm735 = vmor %vm733, %vm734
      %v736 = vsel %vm735, %v728, %v732
      %v737 = vand.u32 2147483647, %v660
      %vm738 = vcmp.eq.f32.partialorder %v737, 8.507059e+37
      %v739 = vand.u32 %v660, 2147483648
      %v740 = vor.u32 1.1754944e-38, %v739
      %v741 = vsel %vm738, %v740, %v736
      %v742 = vmul.f32 1.0, %v741
      %v743 = vrcp.pop %v661
      %v744 = vmul.f32 %v661, %v743
      %v745 = vsub.f32 1.0, %v744
      %v746 = vmul.f32 %v743, %v745
      %v747 = vadd.f32 %v743, %v746
      %vm748 = vweird.f32 %v661
      %vm749 = vweird.f32 %v743
      %vm750 = vmor %vm748, %vm749
      %v751 = vsel %vm750, %v743, %v747
      %v752 = vand.u32 2147483647, %v661
      %vm753 = vcmp.eq.f32.partialorder %v752, 8.507059e+37
      %v754 = vand.u32 %v661, 2147483648
      %v755 = vor.u32 1.1754944e-38, %v754
      %v756 = vsel %vm753, %v755, %v751
      %v757 = vmul.f32 1.0, %v756
      %v758 = vrcp.pop %v662
      %v759 = vmul.f32 %v662, %v758
      %v760 = vsub.f32 1.0, %v759
      %v761 = vmul.f32 %v758, %v760
      %v762 = vadd.f32 %v758, %v761
      %vm763 = vweird.f32 %v662
      %vm764 = vweird.f32 %v758
      %vm765 = vmor %vm763, %vm764
      %v766 = vsel %vm765, %v758, %v762
      %v767 = vand.u32 2147483647, %v662
      %vm768 = vcmp.eq.f32.partialorder %v767, 8.507059e+37
      %v769 = vand.u32 %v662, 2147483648
      %v770 = vor.u32 1.1754944e-38, %v769
      %v771 = vsel %vm768, %v770, %v766
      %v772 = vmul.f32 1.0, %v771
      %v773 = vrcp.pop %v663
      %v774 = vmul.f32 %v663, %v773
      %v775 = vsub.f32 1.0, %v774
      %v776 = vmul.f32 %v773, %v775
      %v777 = vadd.f32 %v773, %v776
      %vm778 = vweird.f32 %v663
      %vm779 = vweird.f32 %v773
      %vm780 = vmor %vm778, %vm779
      %v781 = vsel %vm780, %v773, %v777
      %v782 = vand.u32 2147483647, %v663
      %vm783 = vcmp.eq.f32.partialorder %v782, 8.507059e+37
      %v784 = vand.u32 %v663, 2147483648
      %v785 = vor.u32 1.1754944e-38, %v784
      %v786 = vsel %vm783, %v785, %v781
      %v787 = vmul.f32 1.0, %v786
      %v788 = vrcp.pop %v664
      %v789 = vmul.f32 %v664, %v788
      %v790 = vsub.f32 1.0, %v789
      %v791 = vmul.f32 %v788, %v790
      %v792 = vadd.f32 %v788, %v791
      %vm793 = vweird.f32 %v664
      %vm794 = vweird.f32 %v788
      %vm795 = vmor %vm793, %vm794
      %v796 = vsel %vm795, %v788, %v792
      %v797 = vand.u32 2147483647, %v664
      %vm798 = vcmp.eq.f32.partialorder %v797, 8.507059e+37
      %v799 = vand.u32 %v664, 2147483648
      %v800 = vor.u32 1.1754944e-38, %v799
      %v801 = vsel %vm798, %v800, %v796
      %v802 = vmul.f32 1.0, %v801
      %v803 = vrcp.pop %v665
      %v804 = vmul.f32 %v665, %v803
      %v805 = vsub.f32 1.0, %v804
      %v806 = vmul.f32 %v803, %v805
      %v807 = vadd.f32 %v803, %v806
      %vm808 = vweird.f32 %v665
      %vm809 = vweird.f32 %v803
      %vm810 = vmor %vm808, %vm809
      %v811 = vsel %vm810, %v803, %v807
      %v812 = vand.u32 2147483647, %v665
      %vm813 = vcmp.eq.f32.partialorder %v812, 8.507059e+37
      %v814 = vand.u32 %v665, 2147483648
      %v815 = vor.u32 1.1754944e-38, %v814
      %v816 = vsel %vm813, %v815, %v811
      %v817 = vmul.f32 1.0, %v816
      %v818 = vrcp.pop %v666
      %v819 = vmul.f32 %v666, %v818
      %v820 = vsub.f32 1.0, %v819
      %v821 = vmul.f32 %v818, %v820
      %v822 = vadd.f32 %v818, %v821
      %vm823 = vweird.f32 %v666
      %vm824 = vweird.f32 %v818
      %vm825 = vmor %vm823, %vm824
      %v826 = vsel %vm825, %v818, %v822
      %v827 = vand.u32 2147483647, %v666
      %vm828 = vcmp.eq.f32.partialorder %v827, 8.507059e+37
      %v829 = vand.u32 %v666, 2147483648
      %v830 = vor.u32 1.1754944e-38, %v829
      %v831 = vsel %vm828, %v830, %v826
      %v832 = vmul.f32 1.0, %v831
      %v833 = vrcp.pop %v667
      %v834 = vmul.f32 %v667, %v833
      %v835 = vsub.f32 1.0, %v834
      %v836 = vmul.f32 %v833, %v835
      %v837 = vadd.f32 %v833, %v836
      %vm838 = vweird.f32 %v667
      %vm839 = vweird.f32 %v833
      %vm840 = vmor %vm838, %vm839
      %v841 = vsel %vm840, %v833, %v837
      %v842 = vand.u32 2147483647, %v667
      %vm843 = vcmp.eq.f32.partialorder %v842, 8.507059e+37
      %v844 = vand.u32 %v667, 2147483648
      %v845 = vor.u32 1.1754944e-38, %v844
      %v846 = vsel %vm843, %v845, %v841
      %v847 = vmul.f32 1.0, %v846
      %v848 = vmul.f32 %v608, %v682
      %v849 = vmul.f32 %v609, %v697
      %v850 = vmul.f32 %v610, %v712
      %v851 = vmul.f32 %v611, %v727
      %v852 = vmul.f32 %v612, %v742
      %v853 = vmul.f32 %v613, %v757
      %v854 = vmul.f32 %v614, %v772
      %v855 = vmul.f32 %v615, %v787
      %v856 = vmul.f32 %v616, %v802
      %v857 = vmul.f32 %v617, %v817
      %v858 = vmul.f32 %v618, %v832
      %v859 = vmul.f32 %v619, %v847
      %v860 = vlaneseq
      %v861 = vshrl.u32 %v860, 7
      %v862 = vadd.s32 %v861, 8
      %v863 = vadd.s32 %v861, 16
      %vm864 = vcmp.ge.s32.totalorder %v861, 2
      %vm865 = vcmp.ge.s32.totalorder %v862, 2
      %vm866 = vcmp.ge.s32.totalorder %v863, 2
      %vm867 = vcmp.lt.s32.totalorder %v861, 18
      %vm868 = vcmp.lt.s32.totalorder %v862, 18
      %vm869 = vcmp.lt.s32.totalorder %v863, 18
      %vm870 = vmand %vm864, %vm867
      %vm871 = vmand %vm865, %vm868
      %vm872 = vmand %vm866, %vm869
      %v873 = vsel %vm870, 1, 0
      %v874 = vsel %vm871, 1, 0
      %v875 = vsel %vm872, 1, 0
      %vm876 = vcmp.eq.s32.totalorder %v873, 1
      %vm877 = vcmp.eq.s32.totalorder %v874, 1
      %vm878 = vcmp.eq.s32.totalorder %v875, 1
      %v879 = vsel %vm876, %v848, 0.0
      %v880 = vsel %vm876, %v849, 0.0
      %v881 = vsel %vm876, %v850, 0.0
      %v882 = vsel %vm876, %v851, 0.0
      %v883 = vsel %vm877, %v852, 0.0
      %v884 = vsel %vm877, %v853, 0.0
      %v885 = vsel %vm877, %v854, 0.0
      %v886 = vsel %vm877, %v855, 0.0
      %v887 = vsel %vm878, %v856, 0.0
      %v888 = vsel %vm878, %v857, 0.0
      %v889 = vsel %vm878, %v858, 0.0
      %v890 = vsel %vm878, %v859, 0.0
      %v891 = vld [vmem:[%s3] sm:$0x7]
      %v893 = vperm.slane %v891, 0
      %v894 = vperm.slane %v891, 1
      %v895 = vperm.slane %v891, 2
      %v899 = vmul.f32 %v879, %v893
      %v900 = vmul.f32 %v880, %v894
      %v901 = vmul.f32 %v881, %v895
      %v902 = vmul.f32 %v883, %v893
      %v903 = vmul.f32 %v884, %v894
      %v904 = vmul.f32 %v885, %v895
      %s905 = scalar_lea.vmem %s3, 3
      %v906 = vld [vmem:[%s905] sm:$0x7]
      %v908 = vperm.slane %v906, 0
      %v909 = vperm.slane %v906, 1
      %v910 = vperm.slane %v906, 2
      %911 = vrot.lane.b32.xlu0 %v908, 24
      %v912 = vpop.permute.xlu0 %911
      %913 = vrot.lane.b32.xlu0 %v909, 24
      %v914 = vpop.permute.xlu0 %913
      %915 = vrot.lane.b32.xlu0 %v910, 24
      %v916 = vpop.permute.xlu0 %915
      %vm917 = vcmask 195584
      %v918 = vsel %vm917, %v912, %v914
      %v919 = vsel %vm917, %v914, %v916
      %v924 = vmul.f32 %v879, %v912
      %v925 = vmul.f32 %v880, %v918
      %v926 = vmul.f32 %v881, %v919
      %v927 = vmul.f32 %v882, %v916
      %v928 = vmul.f32 %v883, %v912
      %v929 = vmul.f32 %v884, %v918
      %v930 = vmul.f32 %v885, %v919
      %v931 = vmul.f32 %v886, %v916
      %940 = vrot.lane.b32.xlu0 %v924, 104
      %v941 = vpop.permute.xlu0 %940
      %942 = vrot.lane.b32.xlu0 %v925, 104
      %v943 = vpop.permute.xlu0 %942
      %944 = vrot.lane.b32.xlu0 %v926, 104
      %v945 = vpop.permute.xlu0 %944
      %946 = vrot.lane.b32.xlu0 %v927, 104
      %v947 = vpop.permute.xlu0 %946
      %948 = vrot.lane.b32.xlu0 %v928, 104
      %v949 = vpop.permute.xlu0 %948
      %950 = vrot.lane.b32.xlu0 %v929, 104
      %v951 = vpop.permute.xlu0 %950
      %952 = vrot.lane.b32.xlu0 %v930, 104
      %v953 = vpop.permute.xlu0 %952
      %954 = vrot.lane.b32.xlu0 %v931, 104
      %v955 = vpop.permute.xlu0 %954
      %vm956 = vcmask 850944
      %v957 = vsel %vm956, %v941, %v943
      %v958 = vsel %vm956, %v943, %v945
      %v959 = vsel %vm956, %v945, %v947
      %v960 = vsel %vm956, %v949, %v951
      %v961 = vsel %vm956, %v951, %v953
      %v962 = vsel %vm956, %v953, %v955
      %v969 = vadd.f32 %v899, %v957
      %v970 = vadd.f32 %v900, %v958
      %v971 = vadd.f32 %v901, %v959
      %v972 = vadd.f32 %v902, %v960
      %v973 = vadd.f32 %v903, %v961
      %v974 = vadd.f32 %v904, %v962
      %s975 = scalar_lea.vmem %s3, 6
      %v976 = vld [vmem:[%s975] sm:$0x7]
      %v978 = vperm.slane %v976, 0
      %v979 = vperm.slane %v976, 1
      %v980 = vperm.slane %v976, 2
      %981 = vrot.lane.b32.xlu0 %v978, 48
      %v982 = vpop.permute.xlu0 %981
      %983 = vrot.lane.b32.xlu0 %v979, 48
      %v984 = vpop.permute.xlu0 %983
      %985 = vrot.lane.b32.xlu0 %v980, 48
      %v986 = vpop.permute.xlu0 %985
      %vm987 = vcmask 392192
      %v988 = vsel %vm987, %v982, %v984
      %v989 = vsel %vm987, %v984, %v986
      %v994 = vmul.f32 %v879, %v982
      %v995 = vmul.f32 %v880, %v988
      %v996 = vmul.f32 %v881, %v989
      %v997 = vmul.f32 %v882, %v986
      %v998 = vmul.f32 %v883, %v982
      %v999 = vmul.f32 %v884, %v988
      %v1000 = vmul.f32 %v885, %v989
      %v1001 = vmul.f32 %v886, %v986
      %1010 = vrot.lane.b32.xlu0 %v994, 80
      %v1011 = vpop.permute.xlu0 %1010
      %1012 = vrot.lane.b32.xlu0 %v995, 80
      %v1013 = vpop.permute.xlu0 %1012
      %1014 = vrot.lane.b32.xlu0 %v996, 80
      %v1015 = vpop.permute.xlu0 %1014
      %1016 = vrot.lane.b32.xlu0 %v997, 80
      %v1017 = vpop.permute.xlu0 %1016
      %1018 = vrot.lane.b32.xlu0 %v998, 80
      %v1019 = vpop.permute.xlu0 %1018
      %1020 = vrot.lane.b32.xlu0 %v999, 80
      %v1021 = vpop.permute.xlu0 %1020
      %1022 = vrot.lane.b32.xlu0 %v1000, 80
      %v1023 = vpop.permute.xlu0 %1022
      %1024 = vrot.lane.b32.xlu0 %v1001, 80
      %v1025 = vpop.permute.xlu0 %1024
      %vm1026 = vcmask 654336
      %v1027 = vsel %vm1026, %v1011, %v1013
      %v1028 = vsel %vm1026, %v1013, %v1015
      %v1029 = vsel %vm1026, %v1015, %v1017
      %v1030 = vsel %vm1026, %v1019, %v1021
      %v1031 = vsel %vm1026, %v1021, %v1023
      %v1032 = vsel %vm1026, %v1023, %v1025
      %v1039 = vadd.f32 %v969, %v1027
      %v1040 = vadd.f32 %v970, %v1028
      %v1041 = vadd.f32 %v971, %v1029
      %v1042 = vadd.f32 %v972, %v1030
      %v1043 = vadd.f32 %v973, %v1031
      %v1044 = vadd.f32 %v974, %v1032
      %s1045 = scalar_lea.vmem %s3, 9
      %v1046 = vld [vmem:[%s1045] sm:$0x7]
      %v1048 = vperm.slane %v1046, 0
      %v1049 = vperm.slane %v1046, 1
      %v1050 = vperm.slane %v1046, 2
      %1051 = vrot.lane.b32.xlu0 %v1048, 72
      %v1052 = vpop.permute.xlu0 %1051
      %1053 = vrot.lane.b32.xlu0 %v1049, 72
      %v1054 = vpop.permute.xlu0 %1053
      %1055 = vrot.lane.b32.xlu0 %v1050, 72
      %v1056 = vpop.permute.xlu0 %1055
      %vm1057 = vcmask 588800
      %v1058 = vsel %vm1057, %v1052, %v1054
      %v1059 = vsel %vm1057, %v1054, %v1056
      %v1064 = vmul.f32 %v879, %v1052
      %v1065 = vmul.f32 %v880, %v1058
      %v1066 = vmul.f32 %v881, %v1059
      %v1067 = vmul.f32 %v882, %v1056
      %v1068 = vmul.f32 %v883, %v1052
      %v1069 = vmul.f32 %v884, %v1058
      %v1070 = vmul.f32 %v885, %v1059
      %v1071 = vmul.f32 %v886, %v1056
      %1080 = vrot.lane.b32.xlu0 %v1064, 56
      %v1081 = vpop.permute.xlu0 %1080
      %1082 = vrot.lane.b32.xlu0 %v1065, 56
      %v1083 = vpop.permute.xlu0 %1082
      %1084 = vrot.lane.b32.xlu0 %v1066, 56
      %v1085 = vpop.permute.xlu0 %1084
      %1086 = vrot.lane.b32.xlu0 %v1067, 56
      %v1087 = vpop.permute.xlu0 %1086
      %1088 = vrot.lane.b32.xlu0 %v1068, 56
      %v1089 = vpop.permute.xlu0 %1088
      %1090 = vrot.lane.b32.xlu0 %v1069, 56
      %v1091 = vpop.permute.xlu0 %1090
      %1092 = vrot.lane.b32.xlu0 %v1070, 56
      %v1093 = vpop.permute.xlu0 %1092
      %1094 = vrot.lane.b32.xlu0 %v1071, 56
      %v1095 = vpop.permute.xlu0 %1094
      %vm1096 = vcmask 457728
      %v1097 = vsel %vm1096, %v1081, %v1083
      %v1098 = vsel %vm1096, %v1083, %v1085
      %v1099 = vsel %vm1096, %v1085, %v1087
      %v1100 = vsel %vm1096, %v1089, %v1091
      %v1101 = vsel %vm1096, %v1091, %v1093
      %v1102 = vsel %vm1096, %v1093, %v1095
      %v1109 = vadd.f32 %v1039, %v1097
      %v1110 = vadd.f32 %v1040, %v1098
      %v1111 = vadd.f32 %v1041, %v1099
      %v1112 = vadd.f32 %v1042, %v1100
      %v1113 = vadd.f32 %v1043, %v1101
      %v1114 = vadd.f32 %v1044, %v1102
      %s1115 = scalar_lea.vmem %s3, 12
      %v1116 = vld [vmem:[%s1115] sm:$0x7]
      %v1118 = vperm.slane %v1116, 0
      %v1119 = vperm.slane %v1116, 1
      %v1120 = vperm.slane %v1116, 2
      %1121 = vrot.lane.b32.xlu0 %v1118, 96
      %v1122 = vpop.permute.xlu0 %1121
      %1123 = vrot.lane.b32.xlu0 %v1119, 96
      %v1124 = vpop.permute.xlu0 %1123
      %1125 = vrot.lane.b32.xlu0 %v1120, 96
      %v1126 = vpop.permute.xlu0 %1125
      %vm1127 = vcmask 785408
      %v1128 = vsel %vm1127, %v1122, %v1124
      %v1129 = vsel %vm1127, %v1124, %v1126
      %v1134 = vmul.f32 %v879, %v1122
      %v1135 = vmul.f32 %v880, %v1128
      %v1136 = vmul.f32 %v881, %v1129
      %v1137 = vmul.f32 %v882, %v1126
      %v1138 = vmul.f32 %v883, %v1122
      %v1139 = vmul.f32 %v884, %v1128
      %v1140 = vmul.f32 %v885, %v1129
      %v1141 = vmul.f32 %v886, %v1126
      %1150 = vrot.lane.b32.xlu0 %v1134, 32
      %v1151 = vpop.permute.xlu0 %1150
      %1152 = vrot.lane.b32.xlu0 %v1135, 32
      %v1153 = vpop.permute.xlu0 %1152
      %1154 = vrot.lane.b32.xlu0 %v1136, 32
      %v1155 = vpop.permute.xlu0 %1154
      %1156 = vrot.lane.b32.xlu0 %v1137, 32
      %v1157 = vpop.permute.xlu0 %1156
      %1158 = vrot.lane.b32.xlu0 %v1138, 32
      %v1159 = vpop.permute.xlu0 %1158
      %1160 = vrot.lane.b32.xlu0 %v1139, 32
      %v1161 = vpop.permute.xlu0 %1160
      %1162 = vrot.lane.b32.xlu0 %v1140, 32
      %v1163 = vpop.permute.xlu0 %1162
      %1164 = vrot.lane.b32.xlu0 %v1141, 32
      %v1165 = vpop.permute.xlu0 %1164
      %vm1166 = vcmask 261120
      %v1167 = vsel %vm1166, %v1151, %v1153
      %v1168 = vsel %vm1166, %v1153, %v1155
      %v1169 = vsel %vm1166, %v1155, %v1157
      %v1170 = vsel %vm1166, %v1159, %v1161
      %v1171 = vsel %vm1166, %v1161, %v1163
      %v1172 = vsel %vm1166, %v1163, %v1165
      %v1179 = vadd.f32 %v1109, %v1167
      %v1180 = vadd.f32 %v1110, %v1168
      %v1181 = vadd.f32 %v1111, %v1169
      %v1182 = vadd.f32 %v1112, %v1170
      %v1183 = vadd.f32 %v1113, %v1171
      %v1184 = vadd.f32 %v1114, %v1172
      %s1185 = scalar_lea.vmem %s3, 15
      %v1186 = vld [vmem:[%s1185] sm:$0x7]
      %v1188 = vperm.slane %v1186, 0
      %v1189 = vperm.slane %v1186, 1
      %v1190 = vperm.slane %v1186, 2
      %v1194 = vmul.f32 %v879, %v1188
      %v1195 = vmul.f32 %v880, %v1189
      %v1196 = vmul.f32 %v881, %v1190
      %v1197 = vmul.f32 %v883, %v1188
      %v1198 = vmul.f32 %v884, %v1189
      %v1199 = vmul.f32 %v885, %v1190
      %v1200 = vmul.f32 %v887, %v1188
      %v1201 = vmul.f32 %v888, %v1189
      %v1202 = vmul.f32 %v889, %v1190
      %s1203 = scalar_lea.vmem %s3, 18
      %v1204 = vld [vmem:[%s1203] sm:$0x7]
      %v1206 = vperm.slane %v1204, 0
      %v1207 = vperm.slane %v1204, 1
      %v1208 = vperm.slane %v1204, 2
      %1209 = vrot.lane.b32.xlu0 %v1206, 24
      %v1210 = vpop.permute.xlu0 %1209
      %1211 = vrot.lane.b32.xlu0 %v1207, 24
      %v1212 = vpop.permute.xlu0 %1211
      %1213 = vrot.lane.b32.xlu0 %v1208, 24
      %v1214 = vpop.permute.xlu0 %1213
      %v1215 = vsel %vm917, %v1210, %v1212
      %v1216 = vsel %vm917, %v1212, %v1214
      %v1221 = vmul.f32 %v879, %v1210
      %v1222 = vmul.f32 %v880, %v1215
      %v1223 = vmul.f32 %v881, %v1216
      %v1224 = vmul.f32 %v882, %v1214
      %v1225 = vmul.f32 %v883, %v1210
      %v1226 = vmul.f32 %v884, %v1215
      %v1227 = vmul.f32 %v885, %v1216
      %v1228 = vmul.f32 %v886, %v1214
      %v1229 = vmul.f32 %v887, %v1210
      %v1230 = vmul.f32 %v888, %v1215
      %v1231 = vmul.f32 %v889, %v1216
      %v1232 = vmul.f32 %v890, %v1214
      %1245 = vrot.lane.b32.xlu0 %v1221, 104
      %v1246 = vpop.permute.xlu0 %1245
      %1247 = vrot.lane.b32.xlu0 %v1222, 104
      %v1248 = vpop.permute.xlu0 %1247
      %1249 = vrot.lane.b32.xlu0 %v1223, 104
      %v1250 = vpop.permute.xlu0 %1249
      %1251 = vrot.lane.b32.xlu0 %v1224, 104
      %v1252 = vpop.permute.xlu0 %1251
      %1253 = vrot.lane.b32.xlu0 %v1225, 104
      %v1254 = vpop.permute.xlu0 %1253
      %1255 = vrot.lane.b32.xlu0 %v1226, 104
      %v1256 = vpop.permute.xlu0 %1255
      %1257 = vrot.lane.b32.xlu0 %v1227, 104
      %v1258 = vpop.permute.xlu0 %1257
      %1259 = vrot.lane.b32.xlu0 %v1228, 104
      %v1260 = vpop.permute.xlu0 %1259
      %1261 = vrot.lane.b32.xlu0 %v1229, 104
      %v1262 = vpop.permute.xlu0 %1261
      %1263 = vrot.lane.b32.xlu0 %v1230, 104
      %v1264 = vpop.permute.xlu0 %1263
      %1265 = vrot.lane.b32.xlu0 %v1231, 104
      %v1266 = vpop.permute.xlu0 %1265
      %1267 = vrot.lane.b32.xlu0 %v1232, 104
      %v1268 = vpop.permute.xlu0 %1267
      %v1269 = vsel %vm956, %v1246, %v1248
      %v1270 = vsel %vm956, %v1248, %v1250
      %v1271 = vsel %vm956, %v1250, %v1252
      %v1272 = vsel %vm956, %v1254, %v1256
      %v1273 = vsel %vm956, %v1256, %v1258
      %v1274 = vsel %vm956, %v1258, %v1260
      %v1275 = vsel %vm956, %v1262, %v1264
      %v1276 = vsel %vm956, %v1264, %v1266
      %v1277 = vsel %vm956, %v1266, %v1268
      %v1287 = vadd.f32 %v1194, %v1269
      %v1288 = vadd.f32 %v1195, %v1270
      %v1289 = vadd.f32 %v1196, %v1271
      %v1290 = vadd.f32 %v1197, %v1272
      %v1291 = vadd.f32 %v1198, %v1273
      %v1292 = vadd.f32 %v1199, %v1274
      %v1293 = vadd.f32 %v1200, %v1275
      %v1294 = vadd.f32 %v1201, %v1276
      %v1295 = vadd.f32 %v1202, %v1277
      %s1296 = scalar_lea.vmem %s3, 21
      %v1297 = vld [vmem:[%s1296] sm:$0x7]
      %v1299 = vperm.slane %v1297, 0
      %v1300 = vperm.slane %v1297, 1
      %v1301 = vperm.slane %v1297, 2
      %1302 = vrot.lane.b32.xlu0 %v1299, 48
      %v1303 = vpop.permute.xlu0 %1302
      %1304 = vrot.lane.b32.xlu0 %v1300, 48
      %v1305 = vpop.permute.xlu0 %1304
      %1306 = vrot.lane.b32.xlu0 %v1301, 48
      %v1307 = vpop.permute.xlu0 %1306
      %v1308 = vsel %vm987, %v1303, %v1305
      %v1309 = vsel %vm987, %v1305, %v1307
      %v1314 = vmul.f32 %v879, %v1303
      %v1315 = vmul.f32 %v880, %v1308
      %v1316 = vmul.f32 %v881, %v1309
      %v1317 = vmul.f32 %v882, %v1307
      %v1318 = vmul.f32 %v883, %v1303
      %v1319 = vmul.f32 %v884, %v1308
      %v1320 = vmul.f32 %v885, %v1309
      %v1321 = vmul.f32 %v886, %v1307
      %v1322 = vmul.f32 %v887, %v1303
      %v1323 = vmul.f32 %v888, %v1308
      %v1324 = vmul.f32 %v889, %v1309
      %v1325 = vmul.f32 %v890, %v1307
      %1338 = vrot.lane.b32.xlu0 %v1314, 80
      %v1339 = vpop.permute.xlu0 %1338
      %1340 = vrot.lane.b32.xlu0 %v1315, 80
      %v1341 = vpop.permute.xlu0 %1340
      %1342 = vrot.lane.b32.xlu0 %v1316, 80
      %v1343 = vpop.permute.xlu0 %1342
      %1344 = vrot.lane.b32.xlu0 %v1317, 80
      %v1345 = vpop.permute.xlu0 %1344
      %1346 = vrot.lane.b32.xlu0 %v1318, 80
      %v1347 = vpop.permute.xlu0 %1346
      %1348 = vrot.lane.b32.xlu0 %v1319, 80
      %v1349 = vpop.permute.xlu0 %1348
      %1350 = vrot.lane.b32.xlu0 %v1320, 80
      %v1351 = vpop.permute.xlu0 %1350
      %1352 = vrot.lane.b32.xlu0 %v1321, 80
      %v1353 = vpop.permute.xlu0 %1352
      %1354 = vrot.lane.b32.xlu0 %v1322, 80
      %v1355 = vpop.permute.xlu0 %1354
      %1356 = vrot.lane.b32.xlu0 %v1323, 80
      %v1357 = vpop.permute.xlu0 %1356
      %1358 = vrot.lane.b32.xlu0 %v1324, 80
      %v1359 = vpop.permute.xlu0 %1358
      %1360 = vrot.lane.b32.xlu0 %v1325, 80
      %v1361 = vpop.permute.xlu0 %1360
      %v1362 = vsel %vm1026, %v1339, %v1341
      %v1363 = vsel %vm1026, %v1341, %v1343
      %v1364 = vsel %vm1026, %v1343, %v1345
      %v1365 = vsel %vm1026, %v1347, %v1349
      %v1366 = vsel %vm1026, %v1349, %v1351
      %v1367 = vsel %vm1026, %v1351, %v1353
      %v1368 = vsel %vm1026, %v1355, %v1357
      %v1369 = vsel %vm1026, %v1357, %v1359
      %v1370 = vsel %vm1026, %v1359, %v1361
      %v1380 = vadd.f32 %v1287, %v1362
      %v1381 = vadd.f32 %v1288, %v1363
      %v1382 = vadd.f32 %v1289, %v1364
      %v1383 = vadd.f32 %v1290, %v1365
      %v1384 = vadd.f32 %v1291, %v1366
      %v1385 = vadd.f32 %v1292, %v1367
      %v1386 = vadd.f32 %v1293, %v1368
      %v1387 = vadd.f32 %v1294, %v1369
      %v1388 = vadd.f32 %v1295, %v1370
      %s1389 = scalar_lea.vmem %s3, 24
      %v1390 = vld [vmem:[%s1389] sm:$0x7]
      %v1392 = vperm.slane %v1390, 0
      %v1393 = vperm.slane %v1390, 1
      %v1394 = vperm.slane %v1390, 2
      %1395 = vrot.lane.b32.xlu0 %v1392, 72
      %v1396 = vpop.permute.xlu0 %1395
      %1397 = vrot.lane.b32.xlu0 %v1393, 72
      %v1398 = vpop.permute.xlu0 %1397
      %1399 = vrot.lane.b32.xlu0 %v1394, 72
      %v1400 = vpop.permute.xlu0 %1399
      %v1401 = vsel %vm1057, %v1396, %v1398
      %v1402 = vsel %vm1057, %v1398, %v1400
      %v1407 = vmul.f32 %v879, %v1396
      %v1408 = vmul.f32 %v880, %v1401
      %v1409 = vmul.f32 %v881, %v1402
      %v1410 = vmul.f32 %v882, %v1400
      %v1411 = vmul.f32 %v883, %v1396
      %v1412 = vmul.f32 %v884, %v1401
      %v1413 = vmul.f32 %v885, %v1402
      %v1414 = vmul.f32 %v886, %v1400
      %v1415 = vmul.f32 %v887, %v1396
      %v1416 = vmul.f32 %v888, %v1401
      %v1417 = vmul.f32 %v889, %v1402
      %v1418 = vmul.f32 %v890, %v1400
      %1431 = vrot.lane.b32.xlu0 %v1407, 56
      %v1432 = vpop.permute.xlu0 %1431
      %1433 = vrot.lane.b32.xlu0 %v1408, 56
      %v1434 = vpop.permute.xlu0 %1433
      %1435 = vrot.lane.b32.xlu0 %v1409, 56
      %v1436 = vpop.permute.xlu0 %1435
      %1437 = vrot.lane.b32.xlu0 %v1410, 56
      %v1438 = vpop.permute.xlu0 %1437
      %1439 = vrot.lane.b32.xlu0 %v1411, 56
      %v1440 = vpop.permute.xlu0 %1439
      %1441 = vrot.lane.b32.xlu0 %v1412, 56
      %v1442 = vpop.permute.xlu0 %1441
      %1443 = vrot.lane.b32.xlu0 %v1413, 56
      %v1444 = vpop.permute.xlu0 %1443
      %1445 = vrot.lane.b32.xlu0 %v1414, 56
      %v1446 = vpop.permute.xlu0 %1445
      %1447 = vrot.lane.b32.xlu0 %v1415, 56
      %v1448 = vpop.permute.xlu0 %1447
      %1449 = vrot.lane.b32.xlu0 %v1416, 56
      %v1450 = vpop.permute.xlu0 %1449
      %1451 = vrot.lane.b32.xlu0 %v1417, 56
      %v1452 = vpop.permute.xlu0 %1451
      %1453 = vrot.lane.b32.xlu0 %v1418, 56
      %v1454 = vpop.permute.xlu0 %1453
      %v1455 = vsel %vm1096, %v1432, %v1434
      %v1456 = vsel %vm1096, %v1434, %v1436
      %v1457 = vsel %vm1096, %v1436, %v1438
      %v1458 = vsel %vm1096, %v1440, %v1442
      %v1459 = vsel %vm1096, %v1442, %v1444
      %v1460 = vsel %vm1096, %v1444, %v1446
      %v1461 = vsel %vm1096, %v1448, %v1450
      %v1462 = vsel %vm1096, %v1450, %v1452
      %v1463 = vsel %vm1096, %v1452, %v1454
      %v1473 = vadd.f32 %v1380, %v1455
      %v1474 = vadd.f32 %v1381, %v1456
      %v1475 = vadd.f32 %v1382, %v1457
      %v1476 = vadd.f32 %v1383, %v1458
      %v1477 = vadd.f32 %v1384, %v1459
      %v1478 = vadd.f32 %v1385, %v1460
      %v1479 = vadd.f32 %v1386, %v1461
      %v1480 = vadd.f32 %v1387, %v1462
      %v1481 = vadd.f32 %v1388, %v1463
      %s1482 = scalar_lea.vmem %s3, 27
      %v1483 = vld [vmem:[%s1482] sm:$0x7]
      %v1485 = vperm.slane %v1483, 0
      %v1486 = vperm.slane %v1483, 1
      %v1487 = vperm.slane %v1483, 2
      %1488 = vrot.lane.b32.xlu0 %v1485, 96
      %v1489 = vpop.permute.xlu0 %1488
      %1490 = vrot.lane.b32.xlu0 %v1486, 96
      %v1491 = vpop.permute.xlu0 %1490
      %1492 = vrot.lane.b32.xlu0 %v1487, 96
      %v1493 = vpop.permute.xlu0 %1492
      %v1494 = vsel %vm1127, %v1489, %v1491
      %v1495 = vsel %vm1127, %v1491, %v1493
      %v1500 = vmul.f32 %v879, %v1489
      %v1501 = vmul.f32 %v880, %v1494
      %v1502 = vmul.f32 %v881, %v1495
      %v1503 = vmul.f32 %v882, %v1493
      %v1504 = vmul.f32 %v883, %v1489
      %v1505 = vmul.f32 %v884, %v1494
      %v1506 = vmul.f32 %v885, %v1495
      %v1507 = vmul.f32 %v886, %v1493
      %v1508 = vmul.f32 %v887, %v1489
      %v1509 = vmul.f32 %v888, %v1494
      %v1510 = vmul.f32 %v889, %v1495
      %v1511 = vmul.f32 %v890, %v1493
      %1524 = vrot.lane.b32.xlu0 %v1500, 32
      %v1525 = vpop.permute.xlu0 %1524
      %1526 = vrot.lane.b32.xlu0 %v1501, 32
      %v1527 = vpop.permute.xlu0 %1526
      %1528 = vrot.lane.b32.xlu0 %v1502, 32
      %v1529 = vpop.permute.xlu0 %1528
      %1530 = vrot.lane.b32.xlu0 %v1503, 32
      %v1531 = vpop.permute.xlu0 %1530
      %1532 = vrot.lane.b32.xlu0 %v1504, 32
      %v1533 = vpop.permute.xlu0 %1532
      %1534 = vrot.lane.b32.xlu0 %v1505, 32
      %v1535 = vpop.permute.xlu0 %1534
      %1536 = vrot.lane.b32.xlu0 %v1506, 32
      %v1537 = vpop.permute.xlu0 %1536
      %1538 = vrot.lane.b32.xlu0 %v1507, 32
      %v1539 = vpop.permute.xlu0 %1538
      %1540 = vrot.lane.b32.xlu0 %v1508, 32
      %v1541 = vpop.permute.xlu0 %1540
      %1542 = vrot.lane.b32.xlu0 %v1509, 32
      %v1543 = vpop.permute.xlu0 %1542
      %1544 = vrot.lane.b32.xlu0 %v1510, 32
      %v1545 = vpop.permute.xlu0 %1544
      %1546 = vrot.lane.b32.xlu0 %v1511, 32
      %v1547 = vpop.permute.xlu0 %1546
      %v1548 = vsel %vm1166, %v1525, %v1527
      %v1549 = vsel %vm1166, %v1527, %v1529
      %v1550 = vsel %vm1166, %v1529, %v1531
      %v1551 = vsel %vm1166, %v1533, %v1535
      %v1552 = vsel %vm1166, %v1535, %v1537
      %v1553 = vsel %vm1166, %v1537, %v1539
      %v1554 = vsel %vm1166, %v1541, %v1543
      %v1555 = vsel %vm1166, %v1543, %v1545
      %v1556 = vsel %vm1166, %v1545, %v1547
      %v1566 = vadd.f32 %v1473, %v1548
      %v1567 = vadd.f32 %v1474, %v1549
      %v1568 = vadd.f32 %v1475, %v1550
      %v1569 = vadd.f32 %v1476, %v1551
      %v1570 = vadd.f32 %v1477, %v1552
      %v1571 = vadd.f32 %v1478, %v1553
      %v1572 = vadd.f32 %v1479, %v1554
      %v1573 = vadd.f32 %v1480, %v1555
      %v1574 = vadd.f32 %v1481, %v1556
      %vm1584 = vcmask 1046528
      %v1585 = vrot.slane %v1566, 1
      %v1586 = vrot.slane %v1569, 1
      %v1587 = vsel %vm1584, %v1585, %v1586
      %v1588 = vrot.slane %v1567, 1
      %v1589 = vrot.slane %v1570, 1
      %v1590 = vsel %vm1584, %v1588, %v1589
      %v1591 = vrot.slane %v1568, 1
      %v1592 = vrot.slane %v1571, 1
      %v1593 = vsel %vm1584, %v1591, %v1592
      %v1594 = vrot.slane %v1572, 1
      %v1595 = vsel %vm1584, %v1586, %v1594
      %v1596 = vrot.slane %v1573, 1
      %v1597 = vsel %vm1584, %v1589, %v1596
      %v1598 = vrot.slane %v1574, 1
      %v1599 = vsel %vm1584, %v1592, %v1598
      %v1606 = vadd.f32 %v1179, %v1587
      %v1607 = vadd.f32 %v1180, %v1590
      %v1608 = vadd.f32 %v1181, %v1593
      %v1609 = vadd.f32 %v1182, %v1595
      %v1610 = vadd.f32 %v1183, %v1597
      %v1611 = vadd.f32 %v1184, %v1599
      %s1612 = scalar_lea.vmem %s3, 30
      %v1613 = vld [vmem:[%s1612] sm:$0x7]
      %v1615 = vperm.slane %v1613, 0
      %v1616 = vperm.slane %v1613, 1
      %v1617 = vperm.slane %v1613, 2
      %v1621 = vmul.f32 %v879, %v1615
      %v1622 = vmul.f32 %v880, %v1616
      %v1623 = vmul.f32 %v881, %v1617
      %v1624 = vmul.f32 %v883, %v1615
      %v1625 = vmul.f32 %v884, %v1616
      %v1626 = vmul.f32 %v885, %v1617
      %v1627 = vmul.f32 %v887, %v1615
      %v1628 = vmul.f32 %v888, %v1616
      %v1629 = vmul.f32 %v889, %v1617
      %s1630 = scalar_lea.vmem %s3, 33
      %v1631 = vld [vmem:[%s1630] sm:$0x7]
      %v1633 = vperm.slane %v1631, 0
      %v1634 = vperm.slane %v1631, 1
      %v1635 = vperm.slane %v1631, 2
      %1636 = vrot.lane.b32.xlu0 %v1633, 24
      %v1637 = vpop.permute.xlu0 %1636
      %1638 = vrot.lane.b32.xlu0 %v1634, 24
      %v1639 = vpop.permute.xlu0 %1638
      %1640 = vrot.lane.b32.xlu0 %v1635, 24
      %v1641 = vpop.permute.xlu0 %1640
      %v1642 = vsel %vm917, %v1637, %v1639
      %v1643 = vsel %vm917, %v1639, %v1641
      %v1648 = vmul.f32 %v879, %v1637
      %v1649 = vmul.f32 %v880, %v1642
      %v1650 = vmul.f32 %v881, %v1643
      %v1651 = vmul.f32 %v882, %v1641
      %v1652 = vmul.f32 %v883, %v1637
      %v1653 = vmul.f32 %v884, %v1642
      %v1654 = vmul.f32 %v885, %v1643
      %v1655 = vmul.f32 %v886, %v1641
      %v1656 = vmul.f32 %v887, %v1637
      %v1657 = vmul.f32 %v888, %v1642
      %v1658 = vmul.f32 %v889, %v1643
      %v1659 = vmul.f32 %v890, %v1641
      %1672 = vrot.lane.b32.xlu0 %v1648, 104
      %v1673 = vpop.permute.xlu0 %1672
      %1674 = vrot.lane.b32.xlu0 %v1649, 104
      %v1675 = vpop.permute.xlu0 %1674
      %1676 = vrot.lane.b32.xlu0 %v1650, 104
      %v1677 = vpop.permute.xlu0 %1676
      %1678 = vrot.lane.b32.xlu0 %v1651, 104
      %v1679 = vpop.permute.xlu0 %1678
      %1680 = vrot.lane.b32.xlu0 %v1652, 104
      %v1681 = vpop.permute.xlu0 %1680
      %1682 = vrot.lane.b32.xlu0 %v1653, 104
      %v1683 = vpop.permute.xlu0 %1682
      %1684 = vrot.lane.b32.xlu0 %v1654, 104
      %v1685 = vpop.permute.xlu0 %1684
      %1686 = vrot.lane.b32.xlu0 %v1655, 104
      %v1687 = vpop.permute.xlu0 %1686
      %1688 = vrot.lane.b32.xlu0 %v1656, 104
      %v1689 = vpop.permute.xlu0 %1688
      %1690 = vrot.lane.b32.xlu0 %v1657, 104
      %v1691 = vpop.permute.xlu0 %1690
      %1692 = vrot.lane.b32.xlu0 %v1658, 104
      %v1693 = vpop.permute.xlu0 %1692
      %1694 = vrot.lane.b32.xlu0 %v1659, 104
      %v1695 = vpop.permute.xlu0 %1694
      %v1696 = vsel %vm956, %v1673, %v1675
      %v1697 = vsel %vm956, %v1675, %v1677
      %v1698 = vsel %vm956, %v1677, %v1679
      %v1699 = vsel %vm956, %v1681, %v1683
      %v1700 = vsel %vm956, %v1683, %v1685
      %v1701 = vsel %vm956, %v1685, %v1687
      %v1702 = vsel %vm956, %v1689, %v1691
      %v1703 = vsel %vm956, %v1691, %v1693
      %v1704 = vsel %vm956, %v1693, %v1695
      %v1714 = vadd.f32 %v1621, %v1696
      %v1715 = vadd.f32 %v1622, %v1697
      %v1716 = vadd.f32 %v1623, %v1698
      %v1717 = vadd.f32 %v1624, %v1699
      %v1718 = vadd.f32 %v1625, %v1700
      %v1719 = vadd.f32 %v1626, %v1701
      %v1720 = vadd.f32 %v1627, %v1702
      %v1721 = vadd.f32 %v1628, %v1703
      %v1722 = vadd.f32 %v1629, %v1704
      %s1723 = scalar_lea.vmem %s3, 36
      %v1724 = vld [vmem:[%s1723] sm:$0x7]
      %v1726 = vperm.slane %v1724, 0
      %v1727 = vperm.slane %v1724, 1
      %v1728 = vperm.slane %v1724, 2
      %1729 = vrot.lane.b32.xlu0 %v1726, 48
      %v1730 = vpop.permute.xlu0 %1729
      %1731 = vrot.lane.b32.xlu0 %v1727, 48
      %v1732 = vpop.permute.xlu0 %1731
      %1733 = vrot.lane.b32.xlu0 %v1728, 48
      %v1734 = vpop.permute.xlu0 %1733
      %v1735 = vsel %vm987, %v1730, %v1732
      %v1736 = vsel %vm987, %v1732, %v1734
      %v1741 = vmul.f32 %v879, %v1730
      %v1742 = vmul.f32 %v880, %v1735
      %v1743 = vmul.f32 %v881, %v1736
      %v1744 = vmul.f32 %v882, %v1734
      %v1745 = vmul.f32 %v883, %v1730
      %v1746 = vmul.f32 %v884, %v1735
      %v1747 = vmul.f32 %v885, %v1736
      %v1748 = vmul.f32 %v886, %v1734
      %v1749 = vmul.f32 %v887, %v1730
      %v1750 = vmul.f32 %v888, %v1735
      %v1751 = vmul.f32 %v889, %v1736
      %v1752 = vmul.f32 %v890, %v1734
      %1765 = vrot.lane.b32.xlu0 %v1741, 80
      %v1766 = vpop.permute.xlu0 %1765
      %1767 = vrot.lane.b32.xlu0 %v1742, 80
      %v1768 = vpop.permute.xlu0 %1767
      %1769 = vrot.lane.b32.xlu0 %v1743, 80
      %v1770 = vpop.permute.xlu0 %1769
      %1771 = vrot.lane.b32.xlu0 %v1744, 80
      %v1772 = vpop.permute.xlu0 %1771
      %1773 = vrot.lane.b32.xlu0 %v1745, 80
      %v1774 = vpop.permute.xlu0 %1773
      %1775 = vrot.lane.b32.xlu0 %v1746, 80
      %v1776 = vpop.permute.xlu0 %1775
      %1777 = vrot.lane.b32.xlu0 %v1747, 80
      %v1778 = vpop.permute.xlu0 %1777
      %1779 = vrot.lane.b32.xlu0 %v1748, 80
      %v1780 = vpop.permute.xlu0 %1779
      %1781 = vrot.lane.b32.xlu0 %v1749, 80
      %v1782 = vpop.permute.xlu0 %1781
      %1783 = vrot.lane.b32.xlu0 %v1750, 80
      %v1784 = vpop.permute.xlu0 %1783
      %1785 = vrot.lane.b32.xlu0 %v1751, 80
      %v1786 = vpop.permute.xlu0 %1785
      %1787 = vrot.lane.b32.xlu0 %v1752, 80
      %v1788 = vpop.permute.xlu0 %1787
      %v1789 = vsel %vm1026, %v1766, %v1768
      %v1790 = vsel %vm1026, %v1768, %v1770
      %v1791 = vsel %vm1026, %v1770, %v1772
      %v1792 = vsel %vm1026, %v1774, %v1776
      %v1793 = vsel %vm1026, %v1776, %v1778
      %v1794 = vsel %vm1026, %v1778, %v1780
      %v1795 = vsel %vm1026, %v1782, %v1784
      %v1796 = vsel %vm1026, %v1784, %v1786
      %v1797 = vsel %vm1026, %v1786, %v1788
      %v1807 = vadd.f32 %v1714, %v1789
      %v1808 = vadd.f32 %v1715, %v1790
      %v1809 = vadd.f32 %v1716, %v1791
      %v1810 = vadd.f32 %v1717, %v1792
      %v1811 = vadd.f32 %v1718, %v1793
      %v1812 = vadd.f32 %v1719, %v1794
      %v1813 = vadd.f32 %v1720, %v1795
      %v1814 = vadd.f32 %v1721, %v1796
      %v1815 = vadd.f32 %v1722, %v1797
      %s1816 = scalar_lea.vmem %s3, 39
      %v1817 = vld [vmem:[%s1816] sm:$0x7]
      %v1819 = vperm.slane %v1817, 0
      %v1820 = vperm.slane %v1817, 1
      %v1821 = vperm.slane %v1817, 2
      %1822 = vrot.lane.b32.xlu0 %v1819, 72
      %v1823 = vpop.permute.xlu0 %1822
      %1824 = vrot.lane.b32.xlu0 %v1820, 72
      %v1825 = vpop.permute.xlu0 %1824
      %1826 = vrot.lane.b32.xlu0 %v1821, 72
      %v1827 = vpop.permute.xlu0 %1826
      %v1828 = vsel %vm1057, %v1823, %v1825
      %v1829 = vsel %vm1057, %v1825, %v1827
      %v1834 = vmul.f32 %v879, %v1823
      %v1835 = vmul.f32 %v880, %v1828
      %v1836 = vmul.f32 %v881, %v1829
      %v1837 = vmul.f32 %v882, %v1827
      %v1838 = vmul.f32 %v883, %v1823
      %v1839 = vmul.f32 %v884, %v1828
      %v1840 = vmul.f32 %v885, %v1829
      %v1841 = vmul.f32 %v886, %v1827
      %v1842 = vmul.f32 %v887, %v1823
      %v1843 = vmul.f32 %v888, %v1828
      %v1844 = vmul.f32 %v889, %v1829
      %v1845 = vmul.f32 %v890, %v1827
      %1858 = vrot.lane.b32.xlu0 %v1834, 56
      %v1859 = vpop.permute.xlu0 %1858
      %1860 = vrot.lane.b32.xlu0 %v1835, 56
      %v1861 = vpop.permute.xlu0 %1860
      %1862 = vrot.lane.b32.xlu0 %v1836, 56
      %v1863 = vpop.permute.xlu0 %1862
      %1864 = vrot.lane.b32.xlu0 %v1837, 56
      %v1865 = vpop.permute.xlu0 %1864
      %1866 = vrot.lane.b32.xlu0 %v1838, 56
      %v1867 = vpop.permute.xlu0 %1866
      %1868 = vrot.lane.b32.xlu0 %v1839, 56
      %v1869 = vpop.permute.xlu0 %1868
      %1870 = vrot.lane.b32.xlu0 %v1840, 56
      %v1871 = vpop.permute.xlu0 %1870
      %1872 = vrot.lane.b32.xlu0 %v1841, 56
      %v1873 = vpop.permute.xlu0 %1872
      %1874 = vrot.lane.b32.xlu0 %v1842, 56
      %v1875 = vpop.permute.xlu0 %1874
      %1876 = vrot.lane.b32.xlu0 %v1843, 56
      %v1877 = vpop.permute.xlu0 %1876
      %1878 = vrot.lane.b32.xlu0 %v1844, 56
      %v1879 = vpop.permute.xlu0 %1878
      %1880 = vrot.lane.b32.xlu0 %v1845, 56
      %v1881 = vpop.permute.xlu0 %1880
      %v1882 = vsel %vm1096, %v1859, %v1861
      %v1883 = vsel %vm1096, %v1861, %v1863
      %v1884 = vsel %vm1096, %v1863, %v1865
      %v1885 = vsel %vm1096, %v1867, %v1869
      %v1886 = vsel %vm1096, %v1869, %v1871
      %v1887 = vsel %vm1096, %v1871, %v1873
      %v1888 = vsel %vm1096, %v1875, %v1877
      %v1889 = vsel %vm1096, %v1877, %v1879
      %v1890 = vsel %vm1096, %v1879, %v1881
      %v1900 = vadd.f32 %v1807, %v1882
      %v1901 = vadd.f32 %v1808, %v1883
      %v1902 = vadd.f32 %v1809, %v1884
      %v1903 = vadd.f32 %v1810, %v1885
      %v1904 = vadd.f32 %v1811, %v1886
      %v1905 = vadd.f32 %v1812, %v1887
      %v1906 = vadd.f32 %v1813, %v1888
      %v1907 = vadd.f32 %v1814, %v1889
      %v1908 = vadd.f32 %v1815, %v1890
      %s1909 = scalar_lea.vmem %s3, 42
      %v1910 = vld [vmem:[%s1909] sm:$0x7]
      %v1912 = vperm.slane %v1910, 0
      %v1913 = vperm.slane %v1910, 1
      %v1914 = vperm.slane %v1910, 2
      %1915 = vrot.lane.b32.xlu0 %v1912, 96
      %v1916 = vpop.permute.xlu0 %1915
      %1917 = vrot.lane.b32.xlu0 %v1913, 96
      %v1918 = vpop.permute.xlu0 %1917
      %1919 = vrot.lane.b32.xlu0 %v1914, 96
      %v1920 = vpop.permute.xlu0 %1919
      %v1921 = vsel %vm1127, %v1916, %v1918
      %v1922 = vsel %vm1127, %v1918, %v1920
      %v1927 = vmul.f32 %v879, %v1916
      %v1928 = vmul.f32 %v880, %v1921
      %v1929 = vmul.f32 %v881, %v1922
      %v1930 = vmul.f32 %v882, %v1920
      %v1931 = vmul.f32 %v883, %v1916
      %v1932 = vmul.f32 %v884, %v1921
      %v1933 = vmul.f32 %v885, %v1922
      %v1934 = vmul.f32 %v886, %v1920
      %v1935 = vmul.f32 %v887, %v1916
      %v1936 = vmul.f32 %v888, %v1921
      %v1937 = vmul.f32 %v889, %v1922
      %v1938 = vmul.f32 %v890, %v1920
      %1951 = vrot.lane.b32.xlu0 %v1927, 32
      %v1952 = vpop.permute.xlu0 %1951
      %1953 = vrot.lane.b32.xlu0 %v1928, 32
      %v1954 = vpop.permute.xlu0 %1953
      %1955 = vrot.lane.b32.xlu0 %v1929, 32
      %v1956 = vpop.permute.xlu0 %1955
      %1957 = vrot.lane.b32.xlu0 %v1930, 32
      %v1958 = vpop.permute.xlu0 %1957
      %1959 = vrot.lane.b32.xlu0 %v1931, 32
      %v1960 = vpop.permute.xlu0 %1959
      %1961 = vrot.lane.b32.xlu0 %v1932, 32
      %v1962 = vpop.permute.xlu0 %1961
      %1963 = vrot.lane.b32.xlu0 %v1933, 32
      %v1964 = vpop.permute.xlu0 %1963
      %1965 = vrot.lane.b32.xlu0 %v1934, 32
      %v1966 = vpop.permute.xlu0 %1965
      %1967 = vrot.lane.b32.xlu0 %v1935, 32
      %v1968 = vpop.permute.xlu0 %1967
      %1969 = vrot.lane.b32.xlu0 %v1936, 32
      %v1970 = vpop.permute.xlu0 %1969
      %1971 = vrot.lane.b32.xlu0 %v1937, 32
      %v1972 = vpop.permute.xlu0 %1971
      %1973 = vrot.lane.b32.xlu0 %v1938, 32
      %v1974 = vpop.permute.xlu0 %1973
      %v1975 = vsel %vm1166, %v1952, %v1954
      %v1976 = vsel %vm1166, %v1954, %v1956
      %v1977 = vsel %vm1166, %v1956, %v1958
      %v1978 = vsel %vm1166, %v1960, %v1962
      %v1979 = vsel %vm1166, %v1962, %v1964
      %v1980 = vsel %vm1166, %v1964, %v1966
      %v1981 = vsel %vm1166, %v1968, %v1970
      %v1982 = vsel %vm1166, %v1970, %v1972
      %v1983 = vsel %vm1166, %v1972, %v1974
      %v1993 = vadd.f32 %v1900, %v1975
      %v1994 = vadd.f32 %v1901, %v1976
      %v1995 = vadd.f32 %v1902, %v1977
      %v1996 = vadd.f32 %v1903, %v1978
      %v1997 = vadd.f32 %v1904, %v1979
      %v1998 = vadd.f32 %v1905, %v1980
      %v1999 = vadd.f32 %v1906, %v1981
      %v2000 = vadd.f32 %v1907, %v1982
      %v2001 = vadd.f32 %v1908, %v1983
      %vm2011 = vcmask 1045504
      %v2012 = vrot.slane %v1993, 2
      %v2013 = vrot.slane %v1996, 2
      %v2014 = vsel %vm2011, %v2012, %v2013
      %v2015 = vrot.slane %v1994, 2
      %v2016 = vrot.slane %v1997, 2
      %v2017 = vsel %vm2011, %v2015, %v2016
      %v2018 = vrot.slane %v1995, 2
      %v2019 = vrot.slane %v1998, 2
      %v2020 = vsel %vm2011, %v2018, %v2019
      %v2021 = vrot.slane %v1999, 2
      %v2022 = vsel %vm2011, %v2013, %v2021
      %v2023 = vrot.slane %v2000, 2
      %v2024 = vsel %vm2011, %v2016, %v2023
      %v2025 = vrot.slane %v2001, 2
      %v2026 = vsel %vm2011, %v2019, %v2025
      %v2033 = vadd.f32 %v1606, %v2014
      %v2034 = vadd.f32 %v1607, %v2017
      %v2035 = vadd.f32 %v1608, %v2020
      %v2036 = vadd.f32 %v1609, %v2022
      %v2037 = vadd.f32 %v1610, %v2024
      %v2038 = vadd.f32 %v1611, %v2026
      %s2039 = scalar_lea.vmem %s3, 45
      %v2040 = vld [vmem:[%s2039] sm:$0x7]
      %v2042 = vperm.slane %v2040, 0
      %v2043 = vperm.slane %v2040, 1
      %v2044 = vperm.slane %v2040, 2
      %v2048 = vmul.f32 %v879, %v2042
      %v2049 = vmul.f32 %v880, %v2043
      %v2050 = vmul.f32 %v881, %v2044
      %v2051 = vmul.f32 %v883, %v2042
      %v2052 = vmul.f32 %v884, %v2043
      %v2053 = vmul.f32 %v885, %v2044
      %v2054 = vmul.f32 %v887, %v2042
      %v2055 = vmul.f32 %v888, %v2043
      %v2056 = vmul.f32 %v889, %v2044
      %s2057 = scalar_lea.vmem %s3, 48
      %v2058 = vld [vmem:[%s2057] sm:$0x7]
      %v2060 = vperm.slane %v2058, 0
      %v2061 = vperm.slane %v2058, 1
      %v2062 = vperm.slane %v2058, 2
      %2063 = vrot.lane.b32.xlu0 %v2060, 24
      %v2064 = vpop.permute.xlu0 %2063
      %2065 = vrot.lane.b32.xlu0 %v2061, 24
      %v2066 = vpop.permute.xlu0 %2065
      %2067 = vrot.lane.b32.xlu0 %v2062, 24
      %v2068 = vpop.permute.xlu0 %2067
      %v2069 = vsel %vm917, %v2064, %v2066
      %v2070 = vsel %vm917, %v2066, %v2068
      %v2075 = vmul.f32 %v879, %v2064
      %v2076 = vmul.f32 %v880, %v2069
      %v2077 = vmul.f32 %v881, %v2070
      %v2078 = vmul.f32 %v882, %v2068
      %v2079 = vmul.f32 %v883, %v2064
      %v2080 = vmul.f32 %v884, %v2069
      %v2081 = vmul.f32 %v885, %v2070
      %v2082 = vmul.f32 %v886, %v2068
      %v2083 = vmul.f32 %v887, %v2064
      %v2084 = vmul.f32 %v888, %v2069
      %v2085 = vmul.f32 %v889, %v2070
      %v2086 = vmul.f32 %v890, %v2068
      %2099 = vrot.lane.b32.xlu0 %v2075, 104
      %v2100 = vpop.permute.xlu0 %2099
      %2101 = vrot.lane.b32.xlu0 %v2076, 104
      %v2102 = vpop.permute.xlu0 %2101
      %2103 = vrot.lane.b32.xlu0 %v2077, 104
      %v2104 = vpop.permute.xlu0 %2103
      %2105 = vrot.lane.b32.xlu0 %v2078, 104
      %v2106 = vpop.permute.xlu0 %2105
      %2107 = vrot.lane.b32.xlu0 %v2079, 104
      %v2108 = vpop.permute.xlu0 %2107
      %2109 = vrot.lane.b32.xlu0 %v2080, 104
      %v2110 = vpop.permute.xlu0 %2109
      %2111 = vrot.lane.b32.xlu0 %v2081, 104
      %v2112 = vpop.permute.xlu0 %2111
      %2113 = vrot.lane.b32.xlu0 %v2082, 104
      %v2114 = vpop.permute.xlu0 %2113
      %2115 = vrot.lane.b32.xlu0 %v2083, 104
      %v2116 = vpop.permute.xlu0 %2115
      %2117 = vrot.lane.b32.xlu0 %v2084, 104
      %v2118 = vpop.permute.xlu0 %2117
      %2119 = vrot.lane.b32.xlu0 %v2085, 104
      %v2120 = vpop.permute.xlu0 %2119
      %2121 = vrot.lane.b32.xlu0 %v2086, 104
      %v2122 = vpop.permute.xlu0 %2121
      %v2123 = vsel %vm956, %v2100, %v2102
      %v2124 = vsel %vm956, %v2102, %v2104
      %v2125 = vsel %vm956, %v2104, %v2106
      %v2126 = vsel %vm956, %v2108, %v2110
      %v2127 = vsel %vm956, %v2110, %v2112
      %v2128 = vsel %vm956, %v2112, %v2114
      %v2129 = vsel %vm956, %v2116, %v2118
      %v2130 = vsel %vm956, %v2118, %v2120
      %v2131 = vsel %vm956, %v2120, %v2122
      %v2141 = vadd.f32 %v2048, %v2123
      %v2142 = vadd.f32 %v2049, %v2124
      %v2143 = vadd.f32 %v2050, %v2125
      %v2144 = vadd.f32 %v2051, %v2126
      %v2145 = vadd.f32 %v2052, %v2127
      %v2146 = vadd.f32 %v2053, %v2128
      %v2147 = vadd.f32 %v2054, %v2129
      %v2148 = vadd.f32 %v2055, %v2130
      %v2149 = vadd.f32 %v2056, %v2131
      %s2150 = scalar_lea.vmem %s3, 51
      %v2151 = vld [vmem:[%s2150] sm:$0x7]
      %v2153 = vperm.slane %v2151, 0
      %v2154 = vperm.slane %v2151, 1
      %v2155 = vperm.slane %v2151, 2
      %2156 = vrot.lane.b32.xlu0 %v2153, 48
      %v2157 = vpop.permute.xlu0 %2156
      %2158 = vrot.lane.b32.xlu0 %v2154, 48
      %v2159 = vpop.permute.xlu0 %2158
      %2160 = vrot.lane.b32.xlu0 %v2155, 48
      %v2161 = vpop.permute.xlu0 %2160
      %v2162 = vsel %vm987, %v2157, %v2159
      %v2163 = vsel %vm987, %v2159, %v2161
      %v2168 = vmul.f32 %v879, %v2157
      %v2169 = vmul.f32 %v880, %v2162
      %v2170 = vmul.f32 %v881, %v2163
      %v2171 = vmul.f32 %v882, %v2161
      %v2172 = vmul.f32 %v883, %v2157
      %v2173 = vmul.f32 %v884, %v2162
      %v2174 = vmul.f32 %v885, %v2163
      %v2175 = vmul.f32 %v886, %v2161
      %v2176 = vmul.f32 %v887, %v2157
      %v2177 = vmul.f32 %v888, %v2162
      %v2178 = vmul.f32 %v889, %v2163
      %v2179 = vmul.f32 %v890, %v2161
      %2192 = vrot.lane.b32.xlu0 %v2168, 80
      %v2193 = vpop.permute.xlu0 %2192
      %2194 = vrot.lane.b32.xlu0 %v2169, 80
      %v2195 = vpop.permute.xlu0 %2194
      %2196 = vrot.lane.b32.xlu0 %v2170, 80
      %v2197 = vpop.permute.xlu0 %2196
      %2198 = vrot.lane.b32.xlu0 %v2171, 80
      %v2199 = vpop.permute.xlu0 %2198
      %2200 = vrot.lane.b32.xlu0 %v2172, 80
      %v2201 = vpop.permute.xlu0 %2200
      %2202 = vrot.lane.b32.xlu0 %v2173, 80
      %v2203 = vpop.permute.xlu0 %2202
      %2204 = vrot.lane.b32.xlu0 %v2174, 80
      %v2205 = vpop.permute.xlu0 %2204
      %2206 = vrot.lane.b32.xlu0 %v2175, 80
      %v2207 = vpop.permute.xlu0 %2206
      %2208 = vrot.lane.b32.xlu0 %v2176, 80
      %v2209 = vpop.permute.xlu0 %2208
      %2210 = vrot.lane.b32.xlu0 %v2177, 80
      %v2211 = vpop.permute.xlu0 %2210
      %2212 = vrot.lane.b32.xlu0 %v2178, 80
      %v2213 = vpop.permute.xlu0 %2212
      %2214 = vrot.lane.b32.xlu0 %v2179, 80
      %v2215 = vpop.permute.xlu0 %2214
      %v2216 = vsel %vm1026, %v2193, %v2195
      %v2217 = vsel %vm1026, %v2195, %v2197
      %v2218 = vsel %vm1026, %v2197, %v2199
      %v2219 = vsel %vm1026, %v2201, %v2203
      %v2220 = vsel %vm1026, %v2203, %v2205
      %v2221 = vsel %vm1026, %v2205, %v2207
      %v2222 = vsel %vm1026, %v2209, %v2211
      %v2223 = vsel %vm1026, %v2211, %v2213
      %v2224 = vsel %vm1026, %v2213, %v2215
      %v2234 = vadd.f32 %v2141, %v2216
      %v2235 = vadd.f32 %v2142, %v2217
      %v2236 = vadd.f32 %v2143, %v2218
      %v2237 = vadd.f32 %v2144, %v2219
      %v2238 = vadd.f32 %v2145, %v2220
      %v2239 = vadd.f32 %v2146, %v2221
      %v2240 = vadd.f32 %v2147, %v2222
      %v2241 = vadd.f32 %v2148, %v2223
      %v2242 = vadd.f32 %v2149, %v2224
      %s2243 = scalar_lea.vmem %s3, 54
      %v2244 = vld [vmem:[%s2243] sm:$0x7]
      %v2246 = vperm.slane %v2244, 0
      %v2247 = vperm.slane %v2244, 1
      %v2248 = vperm.slane %v2244, 2
      %2249 = vrot.lane.b32.xlu0 %v2246, 72
      %v2250 = vpop.permute.xlu0 %2249
      %2251 = vrot.lane.b32.xlu0 %v2247, 72
      %v2252 = vpop.permute.xlu0 %2251
      %2253 = vrot.lane.b32.xlu0 %v2248, 72
      %v2254 = vpop.permute.xlu0 %2253
      %v2255 = vsel %vm1057, %v2250, %v2252
      %v2256 = vsel %vm1057, %v2252, %v2254
      %v2261 = vmul.f32 %v879, %v2250
      %v2262 = vmul.f32 %v880, %v2255
      %v2263 = vmul.f32 %v881, %v2256
      %v2264 = vmul.f32 %v882, %v2254
      %v2265 = vmul.f32 %v883, %v2250
      %v2266 = vmul.f32 %v884, %v2255
      %v2267 = vmul.f32 %v885, %v2256
      %v2268 = vmul.f32 %v886, %v2254
      %v2269 = vmul.f32 %v887, %v2250
      %v2270 = vmul.f32 %v888, %v2255
      %v2271 = vmul.f32 %v889, %v2256
      %v2272 = vmul.f32 %v890, %v2254
      %2285 = vrot.lane.b32.xlu0 %v2261, 56
      %v2286 = vpop.permute.xlu0 %2285
      %2287 = vrot.lane.b32.xlu0 %v2262, 56
      %v2288 = vpop.permute.xlu0 %2287
      %2289 = vrot.lane.b32.xlu0 %v2263, 56
      %v2290 = vpop.permute.xlu0 %2289
      %2291 = vrot.lane.b32.xlu0 %v2264, 56
      %v2292 = vpop.permute.xlu0 %2291
      %2293 = vrot.lane.b32.xlu0 %v2265, 56
      %v2294 = vpop.permute.xlu0 %2293
      %2295 = vrot.lane.b32.xlu0 %v2266, 56
      %v2296 = vpop.permute.xlu0 %2295
      %2297 = vrot.lane.b32.xlu0 %v2267, 56
      %v2298 = vpop.permute.xlu0 %2297
      %2299 = vrot.lane.b32.xlu0 %v2268, 56
      %v2300 = vpop.permute.xlu0 %2299
      %2301 = vrot.lane.b32.xlu0 %v2269, 56
      %v2302 = vpop.permute.xlu0 %2301
      %2303 = vrot.lane.b32.xlu0 %v2270, 56
      %v2304 = vpop.permute.xlu0 %2303
      %2305 = vrot.lane.b32.xlu0 %v2271, 56
      %v2306 = vpop.permute.xlu0 %2305
      %2307 = vrot.lane.b32.xlu0 %v2272, 56
      %v2308 = vpop.permute.xlu0 %2307
      %v2309 = vsel %vm1096, %v2286, %v2288
      %v2310 = vsel %vm1096, %v2288, %v2290
      %v2311 = vsel %vm1096, %v2290, %v2292
      %v2312 = vsel %vm1096, %v2294, %v2296
      %v2313 = vsel %vm1096, %v2296, %v2298
      %v2314 = vsel %vm1096, %v2298, %v2300
      %v2315 = vsel %vm1096, %v2302, %v2304
      %v2316 = vsel %vm1096, %v2304, %v2306
      %v2317 = vsel %vm1096, %v2306, %v2308
      %v2327 = vadd.f32 %v2234, %v2309
      %v2328 = vadd.f32 %v2235, %v2310
      %v2329 = vadd.f32 %v2236, %v2311
      %v2330 = vadd.f32 %v2237, %v2312
      %v2331 = vadd.f32 %v2238, %v2313
      %v2332 = vadd.f32 %v2239, %v2314
      %v2333 = vadd.f32 %v2240, %v2315
      %v2334 = vadd.f32 %v2241, %v2316
      %v2335 = vadd.f32 %v2242, %v2317
      %s2336 = scalar_lea.vmem %s3, 57
      %v2337 = vld [vmem:[%s2336] sm:$0x7]
      %v2339 = vperm.slane %v2337, 0
      %v2340 = vperm.slane %v2337, 1
      %v2341 = vperm.slane %v2337, 2
      %2342 = vrot.lane.b32.xlu0 %v2339, 96
      %v2343 = vpop.permute.xlu0 %2342
      %2344 = vrot.lane.b32.xlu0 %v2340, 96
      %v2345 = vpop.permute.xlu0 %2344
      %2346 = vrot.lane.b32.xlu0 %v2341, 96
      %v2347 = vpop.permute.xlu0 %2346
      %v2348 = vsel %vm1127, %v2343, %v2345
      %v2349 = vsel %vm1127, %v2345, %v2347
      %v2354 = vmul.f32 %v879, %v2343
      %v2355 = vmul.f32 %v880, %v2348
      %v2356 = vmul.f32 %v881, %v2349
      %v2357 = vmul.f32 %v882, %v2347
      %v2358 = vmul.f32 %v883, %v2343
      %v2359 = vmul.f32 %v884, %v2348
      %v2360 = vmul.f32 %v885, %v2349
      %v2361 = vmul.f32 %v886, %v2347
      %v2362 = vmul.f32 %v887, %v2343
      %v2363 = vmul.f32 %v888, %v2348
      %v2364 = vmul.f32 %v889, %v2349
      %v2365 = vmul.f32 %v890, %v2347
      %2378 = vrot.lane.b32.xlu0 %v2354, 32
      %v2379 = vpop.permute.xlu0 %2378
      %2380 = vrot.lane.b32.xlu0 %v2355, 32
      %v2381 = vpop.permute.xlu0 %2380
      %2382 = vrot.lane.b32.xlu0 %v2356, 32
      %v2383 = vpop.permute.xlu0 %2382
      %2384 = vrot.lane.b32.xlu0 %v2357, 32
      %v2385 = vpop.permute.xlu0 %2384
      %2386 = vrot.lane.b32.xlu0 %v2358, 32
      %v2387 = vpop.permute.xlu0 %2386
      %2388 = vrot.lane.b32.xlu0 %v2359, 32
      %v2389 = vpop.permute.xlu0 %2388
      %2390 = vrot.lane.b32.xlu0 %v2360, 32
      %v2391 = vpop.permute.xlu0 %2390
      %2392 = vrot.lane.b32.xlu0 %v2361, 32
      %v2393 = vpop.permute.xlu0 %2392
      %2394 = vrot.lane.b32.xlu0 %v2362, 32
      %v2395 = vpop.permute.xlu0 %2394
      %2396 = vrot.lane.b32.xlu0 %v2363, 32
      %v2397 = vpop.permute.xlu0 %2396
      %2398 = vrot.lane.b32.xlu0 %v2364, 32
      %v2399 = vpop.permute.xlu0 %2398
      %2400 = vrot.lane.b32.xlu0 %v2365, 32
      %v2401 = vpop.permute.xlu0 %2400
      %v2402 = vsel %vm1166, %v2379, %v2381
      %v2403 = vsel %vm1166, %v2381, %v2383
      %v2404 = vsel %vm1166, %v2383, %v2385
      %v2405 = vsel %vm1166, %v2387, %v2389
      %v2406 = vsel %vm1166, %v2389, %v2391
      %v2407 = vsel %vm1166, %v2391, %v2393
      %v2408 = vsel %vm1166, %v2395, %v2397
      %v2409 = vsel %vm1166, %v2397, %v2399
      %v2410 = vsel %vm1166, %v2399, %v2401
      %v2420 = vadd.f32 %v2327, %v2402
      %v2421 = vadd.f32 %v2328, %v2403
      %v2422 = vadd.f32 %v2329, %v2404
      %v2423 = vadd.f32 %v2330, %v2405
      %v2424 = vadd.f32 %v2331, %v2406
      %v2425 = vadd.f32 %v2332, %v2407
      %v2426 = vadd.f32 %v2333, %v2408
      %v2427 = vadd.f32 %v2334, %v2409
      %v2428 = vadd.f32 %v2335, %v2410
      %vm2438 = vcmask 1044480
      %v2439 = vrot.slane %v2420, 3
      %v2440 = vrot.slane %v2423, 3
      %v2441 = vsel %vm2438, %v2439, %v2440
      %v2442 = vrot.slane %v2421, 3
      %v2443 = vrot.slane %v2424, 3
      %v2444 = vsel %vm2438, %v2442, %v2443
      %v2445 = vrot.slane %v2422, 3
      %v2446 = vrot.slane %v2425, 3
      %v2447 = vsel %vm2438, %v2445, %v2446
      %v2448 = vrot.slane %v2426, 3
      %v2449 = vsel %vm2438, %v2440, %v2448
      %v2450 = vrot.slane %v2427, 3
      %v2451 = vsel %vm2438, %v2443, %v2450
      %v2452 = vrot.slane %v2428, 3
      %v2453 = vsel %vm2438, %v2446, %v2452
      %v2460 = vadd.f32 %v2033, %v2441
      %v2461 = vadd.f32 %v2034, %v2444
      %v2462 = vadd.f32 %v2035, %v2447
      %v2463 = vadd.f32 %v2036, %v2449
      %v2464 = vadd.f32 %v2037, %v2451
      %v2465 = vadd.f32 %v2038, %v2453
      %s2466 = scalar_lea.vmem %s3, 60
      %v2467 = vld [vmem:[%s2466] sm:$0x7]
      %v2469 = vperm.slane %v2467, 0
      %v2470 = vperm.slane %v2467, 1
      %v2471 = vperm.slane %v2467, 2
      %v2475 = vmul.f32 %v879, %v2469
      %v2476 = vmul.f32 %v880, %v2470
      %v2477 = vmul.f32 %v881, %v2471
      %v2478 = vmul.f32 %v883, %v2469
      %v2479 = vmul.f32 %v884, %v2470
      %v2480 = vmul.f32 %v885, %v2471
      %v2481 = vmul.f32 %v887, %v2469
      %v2482 = vmul.f32 %v888, %v2470
      %v2483 = vmul.f32 %v889, %v2471
      %s2484 = scalar_lea.vmem %s3, 63
      %v2485 = vld [vmem:[%s2484] sm:$0x7]
      %v2487 = vperm.slane %v2485, 0
      %v2488 = vperm.slane %v2485, 1
      %v2489 = vperm.slane %v2485, 2
      %2490 = vrot.lane.b32.xlu0 %v2487, 24
      %v2491 = vpop.permute.xlu0 %2490
      %2492 = vrot.lane.b32.xlu0 %v2488, 24
      %v2493 = vpop.permute.xlu0 %2492
      %2494 = vrot.lane.b32.xlu0 %v2489, 24
      %v2495 = vpop.permute.xlu0 %2494
      %v2496 = vsel %vm917, %v2491, %v2493
      %v2497 = vsel %vm917, %v2493, %v2495
      %v2502 = vmul.f32 %v879, %v2491
      %v2503 = vmul.f32 %v880, %v2496
      %v2504 = vmul.f32 %v881, %v2497
      %v2505 = vmul.f32 %v882, %v2495
      %v2506 = vmul.f32 %v883, %v2491
      %v2507 = vmul.f32 %v884, %v2496
      %v2508 = vmul.f32 %v885, %v2497
      %v2509 = vmul.f32 %v886, %v2495
      %v2510 = vmul.f32 %v887, %v2491
      %v2511 = vmul.f32 %v888, %v2496
      %v2512 = vmul.f32 %v889, %v2497
      %v2513 = vmul.f32 %v890, %v2495
      %2526 = vrot.lane.b32.xlu0 %v2502, 104
      %v2527 = vpop.permute.xlu0 %2526
      %2528 = vrot.lane.b32.xlu0 %v2503, 104
      %v2529 = vpop.permute.xlu0 %2528
      %2530 = vrot.lane.b32.xlu0 %v2504, 104
      %v2531 = vpop.permute.xlu0 %2530
      %2532 = vrot.lane.b32.xlu0 %v2505, 104
      %v2533 = vpop.permute.xlu0 %2532
      %2534 = vrot.lane.b32.xlu0 %v2506, 104
      %v2535 = vpop.permute.xlu0 %2534
      %2536 = vrot.lane.b32.xlu0 %v2507, 104
      %v2537 = vpop.permute.xlu0 %2536
      %2538 = vrot.lane.b32.xlu0 %v2508, 104
      %v2539 = vpop.permute.xlu0 %2538
      %2540 = vrot.lane.b32.xlu0 %v2509, 104
      %v2541 = vpop.permute.xlu0 %2540
      %2542 = vrot.lane.b32.xlu0 %v2510, 104
      %v2543 = vpop.permute.xlu0 %2542
      %2544 = vrot.lane.b32.xlu0 %v2511, 104
      %v2545 = vpop.permute.xlu0 %2544
      %2546 = vrot.lane.b32.xlu0 %v2512, 104
      %v2547 = vpop.permute.xlu0 %2546
      %2548 = vrot.lane.b32.xlu0 %v2513, 104
      %v2549 = vpop.permute.xlu0 %2548
      %v2550 = vsel %vm956, %v2527, %v2529
      %v2551 = vsel %vm956, %v2529, %v2531
      %v2552 = vsel %vm956, %v2531, %v2533
      %v2553 = vsel %vm956, %v2535, %v2537
      %v2554 = vsel %vm956, %v2537, %v2539
      %v2555 = vsel %vm956, %v2539, %v2541
      %v2556 = vsel %vm956, %v2543, %v2545
      %v2557 = vsel %vm956, %v2545, %v2547
      %v2558 = vsel %vm956, %v2547, %v2549
      %v2568 = vadd.f32 %v2475, %v2550
      %v2569 = vadd.f32 %v2476, %v2551
      %v2570 = vadd.f32 %v2477, %v2552
      %v2571 = vadd.f32 %v2478, %v2553
      %v2572 = vadd.f32 %v2479, %v2554
      %v2573 = vadd.f32 %v2480, %v2555
      %v2574 = vadd.f32 %v2481, %v2556
      %v2575 = vadd.f32 %v2482, %v2557
      %v2576 = vadd.f32 %v2483, %v2558
      %s2577 = scalar_lea.vmem %s3, 66
      %v2578 = vld [vmem:[%s2577] sm:$0x7]
      %v2580 = vperm.slane %v2578, 0
      %v2581 = vperm.slane %v2578, 1
      %v2582 = vperm.slane %v2578, 2
      %2583 = vrot.lane.b32.xlu0 %v2580, 48
      %v2584 = vpop.permute.xlu0 %2583
      %2585 = vrot.lane.b32.xlu0 %v2581, 48
      %v2586 = vpop.permute.xlu0 %2585
      %2587 = vrot.lane.b32.xlu0 %v2582, 48
      %v2588 = vpop.permute.xlu0 %2587
      %v2589 = vsel %vm987, %v2584, %v2586
      %v2590 = vsel %vm987, %v2586, %v2588
      %v2595 = vmul.f32 %v879, %v2584
      %v2596 = vmul.f32 %v880, %v2589
      %v2597 = vmul.f32 %v881, %v2590
      %v2598 = vmul.f32 %v882, %v2588
      %v2599 = vmul.f32 %v883, %v2584
      %v2600 = vmul.f32 %v884, %v2589
      %v2601 = vmul.f32 %v885, %v2590
      %v2602 = vmul.f32 %v886, %v2588
      %v2603 = vmul.f32 %v887, %v2584
      %v2604 = vmul.f32 %v888, %v2589
      %v2605 = vmul.f32 %v889, %v2590
      %v2606 = vmul.f32 %v890, %v2588
      %2619 = vrot.lane.b32.xlu0 %v2595, 80
      %v2620 = vpop.permute.xlu0 %2619
      %2621 = vrot.lane.b32.xlu0 %v2596, 80
      %v2622 = vpop.permute.xlu0 %2621
      %2623 = vrot.lane.b32.xlu0 %v2597, 80
      %v2624 = vpop.permute.xlu0 %2623
      %2625 = vrot.lane.b32.xlu0 %v2598, 80
      %v2626 = vpop.permute.xlu0 %2625
      %2627 = vrot.lane.b32.xlu0 %v2599, 80
      %v2628 = vpop.permute.xlu0 %2627
      %2629 = vrot.lane.b32.xlu0 %v2600, 80
      %v2630 = vpop.permute.xlu0 %2629
      %2631 = vrot.lane.b32.xlu0 %v2601, 80
      %v2632 = vpop.permute.xlu0 %2631
      %2633 = vrot.lane.b32.xlu0 %v2602, 80
      %v2634 = vpop.permute.xlu0 %2633
      %2635 = vrot.lane.b32.xlu0 %v2603, 80
      %v2636 = vpop.permute.xlu0 %2635
      %2637 = vrot.lane.b32.xlu0 %v2604, 80
      %v2638 = vpop.permute.xlu0 %2637
      %2639 = vrot.lane.b32.xlu0 %v2605, 80
      %v2640 = vpop.permute.xlu0 %2639
      %2641 = vrot.lane.b32.xlu0 %v2606, 80
      %v2642 = vpop.permute.xlu0 %2641
      %v2643 = vsel %vm1026, %v2620, %v2622
      %v2644 = vsel %vm1026, %v2622, %v2624
      %v2645 = vsel %vm1026, %v2624, %v2626
      %v2646 = vsel %vm1026, %v2628, %v2630
      %v2647 = vsel %vm1026, %v2630, %v2632
      %v2648 = vsel %vm1026, %v2632, %v2634
      %v2649 = vsel %vm1026, %v2636, %v2638
      %v2650 = vsel %vm1026, %v2638, %v2640
      %v2651 = vsel %vm1026, %v2640, %v2642
      %v2661 = vadd.f32 %v2568, %v2643
      %v2662 = vadd.f32 %v2569, %v2644
      %v2663 = vadd.f32 %v2570, %v2645
      %v2664 = vadd.f32 %v2571, %v2646
      %v2665 = vadd.f32 %v2572, %v2647
      %v2666 = vadd.f32 %v2573, %v2648
      %v2667 = vadd.f32 %v2574, %v2649
      %v2668 = vadd.f32 %v2575, %v2650
      %v2669 = vadd.f32 %v2576, %v2651
      %s2670 = scalar_lea.vmem %s3, 69
      %v2671 = vld [vmem:[%s2670] sm:$0x7]
      %v2673 = vperm.slane %v2671, 0
      %v2674 = vperm.slane %v2671, 1
      %v2675 = vperm.slane %v2671, 2
      %2676 = vrot.lane.b32.xlu0 %v2673, 72
      %v2677 = vpop.permute.xlu0 %2676
      %2678 = vrot.lane.b32.xlu0 %v2674, 72
      %v2679 = vpop.permute.xlu0 %2678
      %2680 = vrot.lane.b32.xlu0 %v2675, 72
      %v2681 = vpop.permute.xlu0 %2680
      %v2682 = vsel %vm1057, %v2677, %v2679
      %v2683 = vsel %vm1057, %v2679, %v2681
      %v2688 = vmul.f32 %v879, %v2677
      %v2689 = vmul.f32 %v880, %v2682
      %v2690 = vmul.f32 %v881, %v2683
      %v2691 = vmul.f32 %v882, %v2681
      %v2692 = vmul.f32 %v883, %v2677
      %v2693 = vmul.f32 %v884, %v2682
      %v2694 = vmul.f32 %v885, %v2683
      %v2695 = vmul.f32 %v886, %v2681
      %v2696 = vmul.f32 %v887, %v2677
      %v2697 = vmul.f32 %v888, %v2682
      %v2698 = vmul.f32 %v889, %v2683
      %v2699 = vmul.f32 %v890, %v2681
      %2712 = vrot.lane.b32.xlu0 %v2688, 56
      %v2713 = vpop.permute.xlu0 %2712
      %2714 = vrot.lane.b32.xlu0 %v2689, 56
      %v2715 = vpop.permute.xlu0 %2714
      %2716 = vrot.lane.b32.xlu0 %v2690, 56
      %v2717 = vpop.permute.xlu0 %2716
      %2718 = vrot.lane.b32.xlu0 %v2691, 56
      %v2719 = vpop.permute.xlu0 %2718
      %2720 = vrot.lane.b32.xlu0 %v2692, 56
      %v2721 = vpop.permute.xlu0 %2720
      %2722 = vrot.lane.b32.xlu0 %v2693, 56
      %v2723 = vpop.permute.xlu0 %2722
      %2724 = vrot.lane.b32.xlu0 %v2694, 56
      %v2725 = vpop.permute.xlu0 %2724
      %2726 = vrot.lane.b32.xlu0 %v2695, 56
      %v2727 = vpop.permute.xlu0 %2726
      %2728 = vrot.lane.b32.xlu0 %v2696, 56
      %v2729 = vpop.permute.xlu0 %2728
      %2730 = vrot.lane.b32.xlu0 %v2697, 56
      %v2731 = vpop.permute.xlu0 %2730
      %2732 = vrot.lane.b32.xlu0 %v2698, 56
      %v2733 = vpop.permute.xlu0 %2732
      %2734 = vrot.lane.b32.xlu0 %v2699, 56
      %v2735 = vpop.permute.xlu0 %2734
      %v2736 = vsel %vm1096, %v2713, %v2715
      %v2737 = vsel %vm1096, %v2715, %v2717
      %v2738 = vsel %vm1096, %v2717, %v2719
      %v2739 = vsel %vm1096, %v2721, %v2723
      %v2740 = vsel %vm1096, %v2723, %v2725
      %v2741 = vsel %vm1096, %v2725, %v2727
      %v2742 = vsel %vm1096, %v2729, %v2731
      %v2743 = vsel %vm1096, %v2731, %v2733
      %v2744 = vsel %vm1096, %v2733, %v2735
      %v2754 = vadd.f32 %v2661, %v2736
      %v2755 = vadd.f32 %v2662, %v2737
      %v2756 = vadd.f32 %v2663, %v2738
      %v2757 = vadd.f32 %v2664, %v2739
      %v2758 = vadd.f32 %v2665, %v2740
      %v2759 = vadd.f32 %v2666, %v2741
      %v2760 = vadd.f32 %v2667, %v2742
      %v2761 = vadd.f32 %v2668, %v2743
      %v2762 = vadd.f32 %v2669, %v2744
      %s2763 = scalar_lea.vmem %s3, 72
      %v2764 = vld [vmem:[%s2763] sm:$0x7]
      %v2766 = vperm.slane %v2764, 0
      %v2767 = vperm.slane %v2764, 1
      %v2768 = vperm.slane %v2764, 2
      %2769 = vrot.lane.b32.xlu0 %v2766, 96
      %v2770 = vpop.permute.xlu0 %2769
      %2771 = vrot.lane.b32.xlu0 %v2767, 96
      %v2772 = vpop.permute.xlu0 %2771
      %2773 = vrot.lane.b32.xlu0 %v2768, 96
      %v2774 = vpop.permute.xlu0 %2773
      %v2775 = vsel %vm1127, %v2770, %v2772
      %v2776 = vsel %vm1127, %v2772, %v2774
      %v2781 = vmul.f32 %v879, %v2770
      %v2782 = vmul.f32 %v880, %v2775
      %v2783 = vmul.f32 %v881, %v2776
      %v2784 = vmul.f32 %v882, %v2774
      %v2785 = vmul.f32 %v883, %v2770
      %v2786 = vmul.f32 %v884, %v2775
      %v2787 = vmul.f32 %v885, %v2776
      %v2788 = vmul.f32 %v886, %v2774
      %v2789 = vmul.f32 %v887, %v2770
      %v2790 = vmul.f32 %v888, %v2775
      %v2791 = vmul.f32 %v889, %v2776
      %v2792 = vmul.f32 %v890, %v2774
      %2805 = vrot.lane.b32.xlu0 %v2781, 32
      %v2806 = vpop.permute.xlu0 %2805
      %2807 = vrot.lane.b32.xlu0 %v2782, 32
      %v2808 = vpop.permute.xlu0 %2807
      %2809 = vrot.lane.b32.xlu0 %v2783, 32
      %v2810 = vpop.permute.xlu0 %2809
      %2811 = vrot.lane.b32.xlu0 %v2784, 32
      %v2812 = vpop.permute.xlu0 %2811
      %2813 = vrot.lane.b32.xlu0 %v2785, 32
      %v2814 = vpop.permute.xlu0 %2813
      %2815 = vrot.lane.b32.xlu0 %v2786, 32
      %v2816 = vpop.permute.xlu0 %2815
      %2817 = vrot.lane.b32.xlu0 %v2787, 32
      %v2818 = vpop.permute.xlu0 %2817
      %2819 = vrot.lane.b32.xlu0 %v2788, 32
      %v2820 = vpop.permute.xlu0 %2819
      %2821 = vrot.lane.b32.xlu0 %v2789, 32
      %v2822 = vpop.permute.xlu0 %2821
      %2823 = vrot.lane.b32.xlu0 %v2790, 32
      %v2824 = vpop.permute.xlu0 %2823
      %2825 = vrot.lane.b32.xlu0 %v2791, 32
      %v2826 = vpop.permute.xlu0 %2825
      %2827 = vrot.lane.b32.xlu0 %v2792, 32
      %v2828 = vpop.permute.xlu0 %2827
      %v2829 = vsel %vm1166, %v2806, %v2808
      %v2830 = vsel %vm1166, %v2808, %v2810
      %v2831 = vsel %vm1166, %v2810, %v2812
      %v2832 = vsel %vm1166, %v2814, %v2816
      %v2833 = vsel %vm1166, %v2816, %v2818
      %v2834 = vsel %vm1166, %v2818, %v2820
      %v2835 = vsel %vm1166, %v2822, %v2824
      %v2836 = vsel %vm1166, %v2824, %v2826
      %v2837 = vsel %vm1166, %v2826, %v2828
      %v2847 = vadd.f32 %v2754, %v2829
      %v2848 = vadd.f32 %v2755, %v2830
      %v2849 = vadd.f32 %v2756, %v2831
      %v2850 = vadd.f32 %v2757, %v2832
      %v2851 = vadd.f32 %v2758, %v2833
      %v2852 = vadd.f32 %v2759, %v2834
      %v2853 = vadd.f32 %v2760, %v2835
      %v2854 = vadd.f32 %v2761, %v2836
      %v2855 = vadd.f32 %v2762, %v2837
      %vm2865 = vcmask 1043456
      %v2866 = vrot.slane %v2847, 4
      %v2867 = vrot.slane %v2850, 4
      %v2868 = vsel %vm2865, %v2866, %v2867
      %v2869 = vrot.slane %v2848, 4
      %v2870 = vrot.slane %v2851, 4
      %v2871 = vsel %vm2865, %v2869, %v2870
      %v2872 = vrot.slane %v2849, 4
      %v2873 = vrot.slane %v2852, 4
      %v2874 = vsel %vm2865, %v2872, %v2873
      %v2875 = vrot.slane %v2853, 4
      %v2876 = vsel %vm2865, %v2867, %v2875
      %v2877 = vrot.slane %v2854, 4
      %v2878 = vsel %vm2865, %v2870, %v2877
      %v2879 = vrot.slane %v2855, 4
      %v2880 = vsel %vm2865, %v2873, %v2879
      %v2887 = vadd.f32 %v2460, %v2868
      %v2888 = vadd.f32 %v2461, %v2871
      %v2889 = vadd.f32 %v2462, %v2874
      %v2890 = vadd.f32 %v2463, %v2876
      %v2891 = vadd.f32 %v2464, %v2878
      %v2892 = vadd.f32 %v2465, %v2880
      %v2893 = vld [vmem:[%s4] ss:$2 sm:$0x7]
      %v2895 = vperm.slane %v2893, 0
      %v2896 = vperm.slane %v2893, 1
      %v2897 = vperm.slane %v2893, 2
      %v2901 = vmul.f32 %v2887, %v2895
      %v2902 = vmul.f32 %v2888, %v2896
      %v2903 = vmul.f32 %v2889, %v2897
      %v2904 = vmul.f32 %v2890, %v2895
      %v2905 = vmul.f32 %v2891, %v2896
      %v2906 = vmul.f32 %v2892, %v2897
      %s2907 = scalar_lea.vmem %s4, 1
      %v2908 = vld [vmem:[%s2907] ss:$2 sm:$0x7]
      %v2910 = vperm.slane %v2908, 0
      %v2911 = vperm.slane %v2908, 1
      %v2912 = vperm.slane %v2908, 2
      %v2916 = vadd.f32 %v2901, %v2910
      %v2917 = vadd.f32 %v2902, %v2911
      %v2918 = vadd.f32 %v2903, %v2912
      %v2919 = vadd.f32 %v2904, %v2910
      %v2920 = vadd.f32 %v2905, %v2911
      %v2921 = vadd.f32 %v2906, %v2912
      %v2922 = vxor.u32 %v2916, 2147483648
      %v2923 = vxor.u32 %v2917, 2147483648
      %v2924 = vxor.u32 %v2918, 2147483648
      %v2925 = vxor.u32 %v2919, 2147483648
      %v2926 = vxor.u32 %v2920, 2147483648
      %v2927 = vxor.u32 %v2921, 2147483648
      %v2928 = vmul.f32 %v2922, 1.442695
      %v2929 = vpow.pop %v2928
      %v2930 = vmul.f32 %v2923, 1.442695
      %v2931 = vpow.pop %v2930
      %v2932 = vmul.f32 %v2924, 1.442695
      %v2933 = vpow.pop %v2932
      %v2934 = vmul.f32 %v2925, 1.442695
      %v2935 = vpow.pop %v2934
      %v2936 = vmul.f32 %v2926, 1.442695
      %v2937 = vpow.pop %v2936
      %v2938 = vmul.f32 %v2927, 1.442695
      %v2939 = vpow.pop %v2938
      %v2940 = vadd.f32 %v2929, 1.0
      %v2941 = vadd.f32 %v2931, 1.0
      %v2942 = vadd.f32 %v2933, 1.0
      %v2943 = vadd.f32 %v2935, 1.0
      %v2944 = vadd.f32 %v2937, 1.0
      %v2945 = vadd.f32 %v2939, 1.0
      %v2946 = vrcp.pop %v2940
      %v2947 = vmul.f32 %v2940, %v2946
      %v2948 = vsub.f32 1.0, %v2947
      %v2949 = vmul.f32 %v2946, %v2948
      %v2950 = vadd.f32 %v2946, %v2949
      %vm2951 = vweird.f32 %v2940
      %vm2952 = vweird.f32 %v2946
      %vm2953 = vmor %vm2951, %vm2952
      %v2954 = vsel %vm2953, %v2946, %v2950
      %v2955 = vand.u32 2147483647, %v2940
      %vm2956 = vcmp.eq.f32.partialorder %v2955, 8.507059e+37
      %v2957 = vand.u32 %v2940, 2147483648
      %v2958 = vor.u32 1.1754944e-38, %v2957
      %v2959 = vsel %vm2956, %v2958, %v2954
      %v2960 = vmul.f32 1.0, %v2959
      %v2961 = vrcp.pop %v2941
      %v2962 = vmul.f32 %v2941, %v2961
      %v2963 = vsub.f32 1.0, %v2962
      %v2964 = vmul.f32 %v2961, %v2963
      %v2965 = vadd.f32 %v2961, %v2964
      %vm2966 = vweird.f32 %v2941
      %vm2967 = vweird.f32 %v2961
      %vm2968 = vmor %vm2966, %vm2967
      %v2969 = vsel %vm2968, %v2961, %v2965
      %v2970 = vand.u32 2147483647, %v2941
      %vm2971 = vcmp.eq.f32.partialorder %v2970, 8.507059e+37
      %v2972 = vand.u32 %v2941, 2147483648
      %v2973 = vor.u32 1.1754944e-38, %v2972
      %v2974 = vsel %vm2971, %v2973, %v2969
      %v2975 = vmul.f32 1.0, %v2974
      %v2976 = vrcp.pop %v2942
      %v2977 = vmul.f32 %v2942, %v2976
      %v2978 = vsub.f32 1.0, %v2977
      %v2979 = vmul.f32 %v2976, %v2978
      %v2980 = vadd.f32 %v2976, %v2979
      %vm2981 = vweird.f32 %v2942
      %vm2982 = vweird.f32 %v2976
      %vm2983 = vmor %vm2981, %vm2982
      %v2984 = vsel %vm2983, %v2976, %v2980
      %v2985 = vand.u32 2147483647, %v2942
      %vm2986 = vcmp.eq.f32.partialorder %v2985, 8.507059e+37
      %v2987 = vand.u32 %v2942, 2147483648
      %v2988 = vor.u32 1.1754944e-38, %v2987
      %v2989 = vsel %vm2986, %v2988, %v2984
      %v2990 = vmul.f32 1.0, %v2989
      %v2991 = vrcp.pop %v2943
      %v2992 = vmul.f32 %v2943, %v2991
      %v2993 = vsub.f32 1.0, %v2992
      %v2994 = vmul.f32 %v2991, %v2993
      %v2995 = vadd.f32 %v2991, %v2994
      %vm2996 = vweird.f32 %v2943
      %vm2997 = vweird.f32 %v2991
      %vm2998 = vmor %vm2996, %vm2997
      %v2999 = vsel %vm2998, %v2991, %v2995
      %v3000 = vand.u32 2147483647, %v2943
      %vm3001 = vcmp.eq.f32.partialorder %v3000, 8.507059e+37
      %v3002 = vand.u32 %v2943, 2147483648
      %v3003 = vor.u32 1.1754944e-38, %v3002
      %v3004 = vsel %vm3001, %v3003, %v2999
      %v3005 = vmul.f32 1.0, %v3004
      %v3006 = vrcp.pop %v2944
      %v3007 = vmul.f32 %v2944, %v3006
      %v3008 = vsub.f32 1.0, %v3007
      %v3009 = vmul.f32 %v3006, %v3008
      %v3010 = vadd.f32 %v3006, %v3009
      %vm3011 = vweird.f32 %v2944
      %vm3012 = vweird.f32 %v3006
      %vm3013 = vmor %vm3011, %vm3012
      %v3014 = vsel %vm3013, %v3006, %v3010
      %v3015 = vand.u32 2147483647, %v2944
      %vm3016 = vcmp.eq.f32.partialorder %v3015, 8.507059e+37
      %v3017 = vand.u32 %v2944, 2147483648
      %v3018 = vor.u32 1.1754944e-38, %v3017
      %v3019 = vsel %vm3016, %v3018, %v3014
      %v3020 = vmul.f32 1.0, %v3019
      %v3021 = vrcp.pop %v2945
      %v3022 = vmul.f32 %v2945, %v3021
      %v3023 = vsub.f32 1.0, %v3022
      %v3024 = vmul.f32 %v3021, %v3023
      %v3025 = vadd.f32 %v3021, %v3024
      %vm3026 = vweird.f32 %v2945
      %vm3027 = vweird.f32 %v3021
      %vm3028 = vmor %vm3026, %vm3027
      %v3029 = vsel %vm3028, %v3021, %v3025
      %v3030 = vand.u32 2147483647, %v2945
      %vm3031 = vcmp.eq.f32.partialorder %v3030, 8.507059e+37
      %v3032 = vand.u32 %v2945, 2147483648
      %v3033 = vor.u32 1.1754944e-38, %v3032
      %v3034 = vsel %vm3031, %v3033, %v3029
      %v3035 = vmul.f32 1.0, %v3034
      %v3036 = vmul.f32 %v2916, %v2960
      %v3037 = vmul.f32 %v2917, %v2975
      %v3038 = vmul.f32 %v2918, %v2990
      %v3039 = vmul.f32 %v2919, %v3005
      %v3040 = vmul.f32 %v2920, %v3020
      %v3041 = vmul.f32 %v2921, %v3035
      %v3042 = vadd.f32 %v3036, %v3039
      %v3043 = vrot.slane %v3042, 4
      %v3044 = vadd.f32 %v3042, %v3043
      %v3045 = vrot.slane %v3044, 2
      %v3046 = vadd.f32 %v3044, %v3045
      %v3047 = vrot.slane %v3046, 1
      %v3048 = vadd.f32 %v3046, %v3047
      %v3049 = vadd.f32 %v3037, %v3040
      %v3050 = vrot.slane %v3049, 4
      %v3051 = vadd.f32 %v3049, %v3050
      %v3052 = vrot.slane %v3051, 2
      %v3053 = vadd.f32 %v3051, %v3052
      %v3054 = vrot.slane %v3053, 1
      %v3055 = vadd.f32 %v3053, %v3054
      %v3056 = vadd.f32 %v3038, %v3041
      %v3057 = vrot.slane %v3056, 4
      %v3058 = vadd.f32 %v3056, %v3057
      %v3059 = vrot.slane %v3058, 2
      %v3060 = vadd.f32 %v3058, %v3059
      %v3061 = vrot.slane %v3060, 1
      %v3062 = vadd.f32 %v3060, %v3061
      %v3063 = vld [vmem:[%s5] sm:$0xf]
      %v3064 = vld [vmem:[%s5 + $0x8] sm:$0xf]
      %v3065 = vld [vmem:[%s5 + $0x10] sm:$0xf]
      %v3066 = vld [vmem:[%s5] sm:$0xf0]
      %v3067 = vld [vmem:[%s5 + $0x8] sm:$0xf0]
      %v3068 = vld [vmem:[%s5 + $0x10] sm:$0xf0]
      %v3069 = vld [vmem:[%s5 + $0x18] sm:$0xf]
      %v3070 = vld [vmem:[%s5 + $0x20] sm:$0xf]
      %v3071 = vld [vmem:[%s5 + $0x28] sm:$0xf]
      %s3072 = scalar_lea.vmem %s5, 28
      %v3073 = vld [vmem:[%s3072] ss:$8 sm:$0x7]
      %v3074 = vmul.f32 %v3063, %v3048
      %v3075 = vmul.f32 %v3064, %v3055
      %v3076 = vmul.f32 %v3065, %v3062
      %v3080 = vrot.slane %v3066, 4
      %v3081 = vrot.slane %v3067, 4
      %v3082 = vrot.slane %v3068, 4
      %v3086 = vadd.f32 %v3074, %v3080
      %v3087 = vadd.f32 %v3075, %v3081
      %v3088 = vadd.f32 %v3076, %v3082
      %v3089 = vsel %vm2865, %v3086, 0.0
      %v3090 = vsel %vm2865, %v3087, 0.0
      %v3091 = vadd.f32 %v3089, %v3090
      %v3092 = vsel %vm2865, %v3088, 0.0
      %v3093 = vadd.f32 %v3091, %v3092
      %3094 = vadd.xlane.f32.xlu0 %v3093
      %v3095 = vpop.xlane.xlu0 %3094
      %v3096 = vxor.u32 %v3095, 2147483648
      %v3097 = vmul.f32 %v3096, 1.442695
      %v3098 = vpow.pop %v3097
      %v3099 = vadd.f32 %v3098, 1.0
      %v3100 = vrcp.pop %v3099
      %v3101 = vmul.f32 %v3099, %v3100
      %v3102 = vsub.f32 1.0, %v3101
      %v3103 = vmul.f32 %v3100, %v3102
      %v3104 = vadd.f32 %v3100, %v3103
      %vm3105 = vweird.f32 %v3099
      %vm3106 = vweird.f32 %v3100
      %vm3107 = vmor %vm3105, %vm3106
      %v3108 = vsel %vm3107, %v3100, %v3104
      %v3109 = vand.u32 2147483647, %v3099
      %vm3110 = vcmp.eq.f32.partialorder %v3109, 8.507059e+37
      %v3111 = vand.u32 %v3099, 2147483648
      %v3112 = vor.u32 1.1754944e-38, %v3111
      %v3113 = vsel %vm3110, %v3112, %v3108
      %v3114 = vmul.f32 1.0, %v3113
      %v3115 = vmul.f32 %v3095, %v3114
      %v3116 = vmul.f32 %v3115, %v3069
      %v3117 = vmul.f32 %v3115, %v3070
      %v3118 = vmul.f32 %v3115, %v3071
      %v3119 = vsel %vm2865, %v3116, 0.0
      %v3120 = vrot.slane %v3119, 4
      %v3121 = vadd.f32 %v3119, %v3120
      %v3122 = vrot.slane %v3121, 2
      %v3123 = vadd.f32 %v3121, %v3122
      %v3124 = vrot.slane %v3123, 1
      %v3125 = vadd.f32 %v3123, %v3124
      %v3126 = vsel %vm2865, %v3117, 0.0
      %v3127 = vrot.slane %v3126, 4
      %v3128 = vadd.f32 %v3126, %v3127
      %v3129 = vrot.slane %v3128, 2
      %v3130 = vadd.f32 %v3128, %v3129
      %v3131 = vrot.slane %v3130, 1
      %v3132 = vadd.f32 %v3130, %v3131
      %v3133 = vsel %vm2865, %v3118, 0.0
      %v3134 = vrot.slane %v3133, 4
      %v3135 = vadd.f32 %v3133, %v3134
      %v3136 = vrot.slane %v3135, 2
      %v3137 = vadd.f32 %v3135, %v3136
      %v3138 = vrot.slane %v3137, 1
      %v3139 = vadd.f32 %v3137, %v3138
      %v3141 = vperm.slane %v3073, 0
      %v3142 = vperm.slane %v3073, 1
      %v3143 = vperm.slane %v3073, 2
      %v3147 = vadd.f32 %v3125, %v3141
      %v3148 = vadd.f32 %v3132, %v3142
      %v3149 = vadd.f32 %v3139, %v3143
      %v3150 = vxor.u32 %v3147, 2147483648
      %v3151 = vxor.u32 %v3148, 2147483648
      %v3152 = vxor.u32 %v3149, 2147483648
      %v3153 = vmul.f32 %v3150, 1.442695
      %v3154 = vpow.pop %v3153
      %v3155 = vmul.f32 %v3151, 1.442695
      %v3156 = vpow.pop %v3155
      %v3157 = vmul.f32 %v3152, 1.442695
      %v3158 = vpow.pop %v3157
      %v3159 = vadd.f32 %v3154, 1.0
      %v3160 = vadd.f32 %v3156, 1.0
      %v3161 = vadd.f32 %v3158, 1.0
      %v3162 = vrcp.pop %v3159
      %v3163 = vmul.f32 %v3159, %v3162
      %v3164 = vsub.f32 1.0, %v3163
      %v3165 = vmul.f32 %v3162, %v3164
      %v3166 = vadd.f32 %v3162, %v3165
      %vm3167 = vweird.f32 %v3159
      %vm3168 = vweird.f32 %v3162
      %vm3169 = vmor %vm3167, %vm3168
      %v3170 = vsel %vm3169, %v3162, %v3166
      %v3171 = vand.u32 2147483647, %v3159
      %vm3172 = vcmp.eq.f32.partialorder %v3171, 8.507059e+37
      %v3173 = vand.u32 %v3159, 2147483648
      %v3174 = vor.u32 1.1754944e-38, %v3173
      %v3175 = vsel %vm3172, %v3174, %v3170
      %v3176 = vmul.f32 1.0, %v3175
      %v3177 = vrcp.pop %v3160
      %v3178 = vmul.f32 %v3160, %v3177
      %v3179 = vsub.f32 1.0, %v3178
      %v3180 = vmul.f32 %v3177, %v3179
      %v3181 = vadd.f32 %v3177, %v3180
      %vm3182 = vweird.f32 %v3160
      %vm3183 = vweird.f32 %v3177
      %vm3184 = vmor %vm3182, %vm3183
      %v3185 = vsel %vm3184, %v3177, %v3181
      %v3186 = vand.u32 2147483647, %v3160
      %vm3187 = vcmp.eq.f32.partialorder %v3186, 8.507059e+37
      %v3188 = vand.u32 %v3160, 2147483648
      %v3189 = vor.u32 1.1754944e-38, %v3188
      %v3190 = vsel %vm3187, %v3189, %v3185
      %v3191 = vmul.f32 1.0, %v3190
      %v3192 = vrcp.pop %v3161
      %v3193 = vmul.f32 %v3161, %v3192
      %v3194 = vsub.f32 1.0, %v3193
      %v3195 = vmul.f32 %v3192, %v3194
      %v3196 = vadd.f32 %v3192, %v3195
      %vm3197 = vweird.f32 %v3161
      %vm3198 = vweird.f32 %v3192
      %vm3199 = vmor %vm3197, %vm3198
      %v3200 = vsel %vm3199, %v3192, %v3196
      %v3201 = vand.u32 2147483647, %v3161
      %vm3202 = vcmp.eq.f32.partialorder %v3201, 8.507059e+37
      %v3203 = vand.u32 %v3161, 2147483648
      %v3204 = vor.u32 1.1754944e-38, %v3203
      %v3205 = vsel %vm3202, %v3204, %v3200
      %v3206 = vmul.f32 1.0, %v3205
      %v3207 = vperm.slane %v3176, 0
      %v3208 = vperm.slane %v3191, 0
      %v3209 = vperm.slane %v3206, 0
      %v3210 = vmul.f32 %v3036, %v3207
      %v3211 = vmul.f32 %v3037, %v3208
      %v3212 = vmul.f32 %v3038, %v3209
      %v3213 = vmul.f32 %v3039, %v3207
      %v3214 = vmul.f32 %v3040, %v3208
      %v3215 = vmul.f32 %v3041, %v3209
      %v3216 = vpack.c.bf16 %v3213, %v3210
      %v3217 = vpack.c.bf16 %v3214, %v3211
      %v3218 = vpack.c.bf16 %v3215, %v3212
      %v3219 = vld [vmem:[%s6] sm:$0xf]
      %v3220 = vld [vmem:[%s6 + $0x4] sm:$0xf]
      %v3221 = vld [vmem:[%s6 + $0x8] sm:$0xf]
      %v3222 = vld [vmem:[%s6 + $0xc] sm:$0xf]
      %v3223 = vld [vmem:[%s6 + $0x10] sm:$0xf]
      %v3224 = vld [vmem:[%s6 + $0x14] sm:$0xf]
      %v3225 = vld [vmem:[%s6 + $0x18] sm:$0xf]
      %v3226 = vld [vmem:[%s6 + $0x1c] sm:$0xf]
      %v3227 = vld [vmem:[%s6 + $0x20] sm:$0xf]
      %v3228 = vld [vmem:[%s6 + $0x24] sm:$0xf]
      %v3229 = vld [vmem:[%s6 + $0x28] sm:$0xf]
      %v3230 = vld [vmem:[%s6 + $0x2c] sm:$0xf]
      %v3231 = vld [vmem:[%s6 + $0x30] sm:$0xf]
      %v3232 = vld [vmem:[%s6 + $0x34] sm:$0xf]
      %v3233 = vld [vmem:[%s6 + $0x38] sm:$0xf]
      %v3234 = vld [vmem:[%s6 + $0x3c] sm:$0xf]
      %v3235 = vld [vmem:[%s6 + $0x40] sm:$0xf]
      %v3236 = vld [vmem:[%s6 + $0x44] sm:$0xf]
      %v3237 = vld [vmem:[%s6 + $0x48] sm:$0xf]
      %v3238 = vld [vmem:[%s6 + $0x4c] sm:$0xf]
      %v3239 = vld [vmem:[%s6 + $0x50] sm:$0xf]
      %v3240 = vld [vmem:[%s6 + $0x54] sm:$0xf]
      %v3241 = vld [vmem:[%s6 + $0x58] sm:$0xf]
      %v3242 = vld [vmem:[%s6 + $0x5c] sm:$0xf]
      %v3243 = vld [vmem:[%s6 + $0x60] sm:$0xf]
      %v3244 = vld [vmem:[%s6 + $0x64] sm:$0xf]
      %v3245 = vld [vmem:[%s6 + $0x68] sm:$0xf]
      %v3246 = vld [vmem:[%s6 + $0x6c] sm:$0xf]
      %v3247 = vld [vmem:[%s6 + $0x70] sm:$0xf]
      %v3248 = vld [vmem:[%s6 + $0x74] sm:$0xf]
      %v3249 = vld [vmem:[%s6 + $0x78] sm:$0xf]
      %v3250 = vld [vmem:[%s6 + $0x7c] sm:$0xf]
      %v3251 = vld [vmem:[%s6 + $0x80] sm:$0xf]
      %v3252 = vld [vmem:[%s6 + $0x84] sm:$0xf]
      %v3253 = vld [vmem:[%s6 + $0x88] sm:$0xf]
      %v3254 = vld [vmem:[%s6 + $0x8c] sm:$0xf]
      %v3255 = vld [vmem:[%s6 + $0x90] sm:$0xf]
      %v3256 = vld [vmem:[%s6 + $0x94] sm:$0xf]
      %v3257 = vld [vmem:[%s6 + $0x98] sm:$0xf]
      %v3258 = vld [vmem:[%s6 + $0x9c] sm:$0xf]
      %v3259 = vld [vmem:[%s6 + $0xa0] sm:$0xf]
      %v3260 = vld [vmem:[%s6 + $0xa4] sm:$0xf]
      %v3261 = vld [vmem:[%s6 + $0xa8] sm:$0xf]
      %v3262 = vld [vmem:[%s6 + $0xac] sm:$0xf]
      %v3263 = vld [vmem:[%s6 + $0xb0] sm:$0xf]
      %v3264 = vld [vmem:[%s6 + $0xb4] sm:$0xf]
      %v3265 = vld [vmem:[%s6 + $0xb8] sm:$0xf]
      %v3266 = vld [vmem:[%s6 + $0xbc] sm:$0xf]
      %v3315 = vunpack.c.l.b16 %v3219
      %v3316 = vunpack.c.l.b16 %v3220
      %v3317 = vunpack.c.l.b16 %v3221
      %v3318 = vunpack.c.l.b16 %v3222
      %v3319 = vunpack.c.l.b16 %v3223
      %v3320 = vunpack.c.l.b16 %v3224
      %v3321 = vunpack.c.l.b16 %v3225
      %v3322 = vunpack.c.l.b16 %v3226
      %v3323 = vunpack.c.l.b16 %v3227
      %v3324 = vunpack.c.l.b16 %v3228
      %v3325 = vunpack.c.l.b16 %v3229
      %v3326 = vunpack.c.l.b16 %v3230
      %v3327 = vunpack.c.l.b16 %v3231
      %v3328 = vunpack.c.l.b16 %v3232
      %v3329 = vunpack.c.l.b16 %v3233
      %v3330 = vunpack.c.l.b16 %v3234
      %v3331 = vunpack.c.l.b16 %v3235
      %v3332 = vunpack.c.l.b16 %v3236
      %v3333 = vunpack.c.l.b16 %v3237
      %v3334 = vunpack.c.l.b16 %v3238
      %v3335 = vunpack.c.l.b16 %v3239
      %v3336 = vunpack.c.l.b16 %v3240
      %v3337 = vunpack.c.l.b16 %v3241
      %v3338 = vunpack.c.l.b16 %v3242
      %v3339 = vunpack.c.l.b16 %v3243
      %v3340 = vunpack.c.l.b16 %v3244
      %v3341 = vunpack.c.l.b16 %v3245
      %v3342 = vunpack.c.l.b16 %v3246
      %v3343 = vunpack.c.l.b16 %v3247
      %v3344 = vunpack.c.l.b16 %v3248
      %v3345 = vunpack.c.l.b16 %v3249
      %v3346 = vunpack.c.l.b16 %v3250
      %v3347 = vunpack.c.l.b16 %v3251
      %v3348 = vunpack.c.l.b16 %v3252
      %v3349 = vunpack.c.l.b16 %v3253
      %v3350 = vunpack.c.l.b16 %v3254
      %v3351 = vunpack.c.l.b16 %v3255
      %v3352 = vunpack.c.l.b16 %v3256
      %v3353 = vunpack.c.l.b16 %v3257
      %v3354 = vunpack.c.l.b16 %v3258
      %v3355 = vunpack.c.l.b16 %v3259
      %v3356 = vunpack.c.l.b16 %v3260
      %v3357 = vunpack.c.l.b16 %v3261
      %v3358 = vunpack.c.l.b16 %v3262
      %v3359 = vunpack.c.l.b16 %v3263
      %v3360 = vunpack.c.l.b16 %v3264
      %v3361 = vunpack.c.l.b16 %v3265
      %v3362 = vunpack.c.l.b16 %v3266
      %v3363 = vpack.c.b16 %v3316, %v3315
      %v3364 = vpack.c.b16 %v3318, %v3317
      %v3365 = vpack.c.b16 %v3320, %v3319
      %v3366 = vpack.c.b16 %v3322, %v3321
      %v3367 = vpack.c.b16 %v3324, %v3323
      %v3368 = vpack.c.b16 %v3326, %v3325
      %v3369 = vpack.c.b16 %v3328, %v3327
      %v3370 = vpack.c.b16 %v3330, %v3329
      %v3371 = vpack.c.b16 %v3332, %v3331
      %v3372 = vpack.c.b16 %v3334, %v3333
      %v3373 = vpack.c.b16 %v3336, %v3335
      %v3374 = vpack.c.b16 %v3338, %v3337
      %v3375 = vpack.c.b16 %v3340, %v3339
      %v3376 = vpack.c.b16 %v3342, %v3341
      %v3377 = vpack.c.b16 %v3344, %v3343
      %v3378 = vpack.c.b16 %v3346, %v3345
      %v3379 = vpack.c.b16 %v3348, %v3347
      %v3380 = vpack.c.b16 %v3350, %v3349
      %v3381 = vpack.c.b16 %v3352, %v3351
      %v3382 = vpack.c.b16 %v3354, %v3353
      %v3383 = vpack.c.b16 %v3356, %v3355
      %v3384 = vpack.c.b16 %v3358, %v3357
      %v3385 = vpack.c.b16 %v3360, %v3359
      %v3386 = vpack.c.b16 %v3362, %v3361
      %3411 = vmatpush.bf16.msra.mxu0 %v3370
      %3412 = vmatpush.bf16.msra.mxu0 %v3369
      %3413 = vmatpush.bf16.msra.mxu0 %v3368
      %3414 = vmatpush.bf16.msra.mxu0 %v3367
      %3415 = vmatpush.bf16.msra.mxu0 %v3366
      %3416 = vmatpush.bf16.msra.mxu0 %v3365
      %3417 = vmatpush.bf16.msra.mxu0 %v3364
      %3418 = vmatpush.bf16.msra.mxu0 %v3363
      %3419 = vmatmul.bf16.gmra.mxu0 %v3216
      %v3420 = vpop.f32.mrf.mxu0
      %v3421 = vadd.f32 0.0, %v3420
      %v3422 = vpop.f32.mrf.mxu0
      %v3423 = vadd.f32 0.0, %v3422
      %3424 = vdwg.mxu0
      %3425 = vmatpush.bf16.msra.mxu0 %v3378
      %3426 = vmatpush.bf16.msra.mxu0 %v3377
      %3427 = vmatpush.bf16.msra.mxu0 %v3376
      %3428 = vmatpush.bf16.msra.mxu0 %v3375
      %3429 = vmatpush.bf16.msra.mxu0 %v3374
      %3430 = vmatpush.bf16.msra.mxu0 %v3373
      %3431 = vmatpush.bf16.msra.mxu0 %v3372
      %3432 = vmatpush.bf16.msra.mxu0 %v3371
      %3433 = vmatmul.bf16.gmra.mxu0 %v3217
      %v3434 = vpop.f32.mrf.mxu0
      %v3435 = vadd.f32 %v3421, %v3434
      %v3436 = vpop.f32.mrf.mxu0
      %v3437 = vadd.f32 %v3423, %v3436
      %3438 = vdwg.mxu0
      %3439 = vmatpush.bf16.msra.mxu0 %v3386
      %3440 = vmatpush.bf16.msra.mxu0 %v3385
      %3441 = vmatpush.bf16.msra.mxu0 %v3384
      %3442 = vmatpush.bf16.msra.mxu0 %v3383
      %3443 = vmatpush.bf16.msra.mxu0 %v3382
      %3444 = vmatpush.bf16.msra.mxu0 %v3381
      %3445 = vmatpush.bf16.msra.mxu0 %v3380
      %3446 = vmatpush.bf16.msra.mxu0 %v3379
      %3447 = vmatmul.bf16.gmra.mxu0 %v3218
      %v3448 = vpop.f32.mrf.mxu0
      %v3449 = vadd.f32 %v3435, %v3448
      %v3450 = vpop.f32.mrf.mxu0
      %v3451 = vadd.f32 %v3437, %v3450
      %3452 = vdwg.mxu0
      %v3453 = vld [vmem:[%s7] sm:$0x1]
      %v3454 = vperm.slane %v3453, 0
      %v3455 = vmul.f32 %v3449, %v3454
      %v3456 = vmul.f32 %v3451, %v3454
      %v3457 = vld [vmem:[%s7 + $0x1] sm:$0x1]
      %v3458 = vperm.slane %v3457, 0
      %v3459 = vadd.f32 %v3455, %v3458
      %v3460 = vadd.f32 %v3456, %v3458
      %v3464 = vrot.slane %v306, 2
      %v3465 = vrot.slane %v307, 2
      %v3466 = vsel %vm2011, %v3464, %v3465
      %v3467 = vrot.slane %v308, 2
      %v3468 = vsel %vm2011, %v3465, %v3467
      %v3471 = vadd.f32 %v3459, %v3466
      %v3472 = vadd.f32 %v3460, %v3468
      %3473 = vst [vmem:[%s305] sm:$0xff] %v3471
      %3474 = vst [vmem:[%s305 + $0x8] sm:$0xff] %v3472
      %p3475 = scmp.lt.s32.totalorder %s19, 1
      %s3476 = scalar_select %p3475, %s19, 1
      %s3477 = smul.addr %s3476, 2
      %s3478 = smul.addr %s3477, 8
      %s3479 = scalar_lea.vmem %s8, %s3478
      // Predicated region
      $region53: #{forward.1} parent=51 // pred_check
        %p3480 = pneg %p210
      $region54: #{forward.1} parent=51 // pred_check_branch
        %3482 = sbr.rel (%p3480) target = $region56
      $region55: #{forward.1} parent=51 // pred_region
        _
      $region56: #{forward.1} parent=51 // pred_fallthru
        _
    $region52: #{forward.1} parent=5 // pred_fallthru
      _
    %p3483 = scmp.le.s32.totalorder 2, %s14
    // Predicated region
    $region57: #{forward.1} parent=5 // pred_check
      %p3484 = pneg %p3483
    $region58: #{forward.1} parent=5 // pred_check_branch
      %3486 = sbr.rel (%p3484) target = $region60
    $region59: #{forward.1} parent=5 // pred_region
      %s3487 = ssub.s32 %s14, 2
      // Predicated region
      $region61: #{forward.1} parent=59 // pred_check
        %p3488 = pneg %p216
      $region62: #{forward.1} parent=59 // pred_check_branch
        %3490 = sbr.rel (%p3488) target = $region64
      $region63: #{forward.1} parent=59 // pred_region
        %p3491 = scmp.lt.s32.totalorder %s20, 1
        %s3492 = scalar_select %p3491, %s20, 1
        %s3493 = smul.addr %s3492, 2
        %s3494 = smul.addr %s3493, 8
        %s3495 = scalar_lea.vmem %s8, %s3494
      $region64: #{forward.1} parent=59 // pred_fallthru
        _
    $region60: #{forward.1} parent=5 // pred_fallthru
      _
  $region6: #{forward.1} parent=0 // loop_footer
    %s18 = sadd.s32 1, %s14
  $region7: #{forward.1} parent=0 // loop_footer_branch
    %13 = sbr.rel target = $region3
  $region8: #{forward.1} parent=0 // loop_exit
    _

</llo_original>
